<compile_context>
chip_gen: v7x
topology: tpu7x:2x2x1
jax: 0.10.0
libtpu: 0.0.40
codegen_flags: <defaults>
</compile_context>

<pallas_src>
import functools
import numpy as np
import jax
import jax.numpy as jnp
from jax.experimental import pallas as pl
from jax.experimental.pallas import tpu as pltpu


def _cot_kernel(block_b, H, W, C, Cmid, ksize,
                xp_ref, wk_ref, wvx_ref, wa1k_ref, wa2_ref, bn_ref,
                out_ref):
    HW = H * W
    M = block_b * HW
    pad = ksize // 2
    bf = jnp.bfloat16

    # --- packed BN / bias constants (one small f32 block) -------------------
    bn = bn_ref[...]                                   # (8, Cpack) f32
    ks, kb = bn[0:1, :C], bn[1:2, :C]
    vs, vb = bn[2:3, :C], bn[3:4, :C]
    a1s, a1b = bn[4:5, :Cmid], bn[5:6, :Cmid]
    a2b = bn[6:7, :C]

    # --- key_embed: 3x3 grouped conv (dense block-diag per-tap weights) -----
    # Taps are built in-kernel from the padded block; 9 accumulating matmuls.
    xp = xp_ref[...]                                   # (block_b, Hp, Wp, C) bf16
    acc = None
    x_center = None
    t = 0
    for dy in range(ksize):
        for dx in range(ksize):
            xt = xp[:, dy:dy + H, dx:dx + W, :].reshape(M, C)      # bf16
            if dy == pad and dx == pad:
                x_center = xt                                      # unshifted x
            d = jnp.dot(xt, wk_ref[t], preferred_element_type=jnp.float32)
            acc = d if acc is None else acc + d
            t += 1
    k1 = jnp.maximum(acc * ks + kb, 0.0)               # (M, C) f32, BN + ReLU

    # --- value_embed (1x1 conv + BN) fused with the x-rows of attention conv1
    xv = jnp.dot(x_center, wvx_ref[...], preferred_element_type=jnp.float32)
    v = (xv[:, :C] * vs + vb).astype(bf)               # (M, C) bf16 (BN, then cast)
    a1x = xv[:, C:]                                    # (M, Cmid) f32

    # --- attention_embed conv1, concat-free: a1 = k1 @ W_k + x @ W_x ; BN ; ReLU
    a1 = jnp.dot(k1.astype(bf), wa1k_ref[...],
                 preferred_element_type=jnp.float32) + a1x
    a1 = jnp.maximum(a1 * a1s + a1b, 0.0)              # (M, Cmid) f32

    # --- attention conv2 with the tap-mean pre-folded into the weights ------
    att = jnp.dot(a1.astype(bf), wa2_ref[...],
                  preferred_element_type=jnp.float32) + a2b        # (M, C) f32

    # --- softmax over the spatial axis (per batch element), residual add ----
    am = att.reshape(block_b, HW, C)
    m = jnp.max(am, axis=1, keepdims=True)
    e = jnp.exp(am - m)
    r = pl.reciprocal(jnp.sum(e, axis=1, keepdims=True), approx=True)
    k2 = (e * r) * v.reshape(block_b, HW, C)
    out_ref[...] = (k1.reshape(block_b, HW, C) + k2).astype(out_ref.dtype)


def prepare_kernel_params(params, dim, kernel_size=3):
    """Fold tap-mean into the last conv, fuse wv with the x-half of wa1,
    zero-pad Cmid to a lane-dense width, pack BN/bias rows into one block,
    cast matmul weights to bf16 (scale/bias stay f32)."""
    (wk, ks, kb, wv, vs, vb, wa1, a1s, a1b, wa2, a2b, mavg) = params
    KK = kernel_size * kernel_size
    C = dim
    Cmid = wa1.shape[1]
    Cmid_pad = max(128, ((Cmid + 127) // 128) * 128)
    Cpack = max(C, Cmid_pad)
    bf = jnp.bfloat16

    wa1_k, wa1_x = wa1[:C], wa1[C:]                     # split the channel concat
    wa2_eff = (wa2 @ mavg) * (1.0 / KK)                 # (Cmid, C) mean folded in
    a2b_eff = (a2b @ mavg) * (1.0 / KK)                 # (1, C)

    # lane-dense padding of the Cmid axis (exact: padded wa2 rows are zero)
    wa1_k_p = jnp.pad(wa1_k, ((0, 0), (0, Cmid_pad - Cmid)))
    wa1_x_p = jnp.pad(wa1_x, ((0, 0), (0, Cmid_pad - Cmid)))
    wa2_eff_p = jnp.pad(wa2_eff, ((0, Cmid_pad - Cmid), (0, 0)))
    a1s_p = jnp.pad(a1s, ((0, 0), (0, Cmid_pad - Cmid)))
    a1b_p = jnp.pad(a1b, ((0, 0), (0, Cmid_pad - Cmid)))

    # fuse value conv and x-rows of attention conv1 (shared LHS = x)
    wvx = jnp.concatenate([wv, wa1_x_p], axis=1).astype(bf)   # (C, C+Cmid_pad)

    def row(vec, n):
        return jnp.pad(vec.reshape(1, -1), ((0, 0), (0, Cpack - n)))
    bn_pack = jnp.concatenate([
        row(ks, C), row(kb, C), row(vs, C), row(vb, C),
        row(a1s_p, Cmid_pad), row(a1b_p, Cmid_pad), row(a2b_eff, C),
        jnp.zeros((1, Cpack), jnp.float32)], axis=0).astype(jnp.float32)

    return (wk.astype(bf),                # (KK, C, C) dense block-diag taps
            wvx,                          # (C, C+Cmid_pad) bf16
            wa1_k_p.astype(bf),           # (C, Cmid_pad) bf16
            wa2_eff_p.astype(bf),         # (Cmid_pad, C) bf16
            bn_pack,                      # (8, Cpack) f32
            Cmid_pad, Cpack)


def cot_attention(x_nchw, params, kernel_size=3, block_b=1):
    B, C, H, W = x_nchw.shape
    HW = H * W
    KK = kernel_size * kernel_size
    pad = kernel_size // 2
    if B % block_b != 0:
        block_b = 1
    nb = B // block_b
    Hp, Wp = H + 2 * pad, W + 2 * pad

    (wk_bf, wvx, wa1k, wa2_eff, bn_pack, Cmid_pad, Cpack) = prepare_kernel_params(
        params, C, kernel_size)

    # Single padded channels-last bf16 image; the 9 im2col taps are built
    # in-kernel from this block (no 9x-expanded HBM slab).
    # Best layouts when W and H*W are multiples of 8 (true here).
    x_nhwc = jnp.transpose(x_nchw, (0, 2, 3, 1)).astype(jnp.bfloat16)
    xp = jnp.pad(x_nhwc, ((0, 0), (pad, pad), (pad, pad), (0, 0)))

    kernel = functools.partial(_cot_kernel, block_b, H, W, C, Cmid_pad,
                               kernel_size)

    # Explicit VMEM budget: double-buffered in/out blocks + weights + headroom,
    # capped so the same tiling still fits v7x's 64 MiB physical VMEM.
    blk_in = block_b * Hp * Wp * C * 2
    blk_out = block_b * HW * C * 4
    w_bytes = (KK * C * C + C * (C + Cmid_pad) + C * Cmid_pad
               + Cmid_pad * C) * 2 + 8 * Cpack * 4
    vmem_limit = int(min(max(2 * (blk_in + blk_out) + 2 * w_bytes + (8 << 20),
                             32 << 20),
                         48 << 20))

    out = pl.pallas_call(
        kernel,
        out_shape=jax.ShapeDtypeStruct((B, HW, C), jnp.float32),
        grid_spec=pltpu.PrefetchScalarGridSpec(
            num_scalar_prefetch=0,
            grid=(nb,),
            in_specs=[
                pl.BlockSpec((block_b, Hp, Wp, C), lambda b: (b, 0, 0, 0)),  # padded x
                pl.BlockSpec((KK, C, C), lambda b: (0, 0, 0)),               # key taps
                pl.BlockSpec((C, C + Cmid_pad), lambda b: (0, 0)),           # wv | wa1_x
                pl.BlockSpec((C, Cmid_pad), lambda b: (0, 0)),               # wa1_k
                pl.BlockSpec((Cmid_pad, C), lambda b: (0, 0)),               # wa2 (folded)
                pl.BlockSpec((8, Cpack), lambda b: (0, 0)),                  # packed BN/bias
            ],
            out_specs=pl.BlockSpec((block_b, HW, C), lambda b: (b, 0, 0)),
        ),
        compiler_params=pltpu.CompilerParams(
            dimension_semantics=("parallel",),
            vmem_limit_bytes=vmem_limit),
    )(xp, wk_bf, wvx, wa1k, wa2_eff, bn_pack)

    # back to NCHW (matches PyTorch's .view(bs, c, h, w) row-major flatten)
    return jnp.transpose(out, (0, 2, 1)).reshape(B, C, H, W)


def init_params(key, dim, kernel_size=3, groups=4, factor=4, eps=1e-5):
    """Deterministic synthetic parameters; BN folded to scale/bias (eval mode)."""
    KK = kernel_size * kernel_size
    Cg = dim // groups
    Cmid = 2 * dim // factor
    C9 = KK * dim
    keys = jax.random.split(key, 16)

    def bn_fold(kg, kb_, km, kv, n):
        gamma = 1.0 + 0.1 * jax.random.normal(kg, (n,), jnp.float32)
        beta = 0.1 * jax.random.normal(kb_, (n,), jnp.float32)
        mean = 0.1 * jax.random.normal(km, (n,), jnp.float32)
        var = jax.random.uniform(kv, (n,), jnp.float32, 0.5, 1.5)
        scale = gamma / jnp.sqrt(var + eps)
        bias = beta - mean * scale
        return scale.reshape(1, n), bias.reshape(1, n)

    # key_embed grouped conv weight, torch layout (dim, dim//groups, k, k),
    # converted to dense block-diagonal per-tap matrices (KK, Cin, Cout).
    w_key_t = np.asarray(
        0.1 * jax.random.normal(keys[0], (dim, Cg, kernel_size, kernel_size),
                                jnp.float32))
    wk = np.zeros((KK, dim, dim), np.float32)
    for g in range(groups):
        blk = w_key_t[g * Cg:(g + 1) * Cg]                   # (out=Cg, in=Cg, k, k)
        blk = blk.transpose(2, 3, 1, 0).reshape(KK, Cg, Cg)  # (tap, in, out)
        wk[:, g * Cg:(g + 1) * Cg, g * Cg:(g + 1) * Cg] = blk
    wk = jnp.asarray(wk)
    ks, kb = bn_fold(keys[1], keys[2], keys[3], keys[4], dim)

    # value_embed 1x1 conv (dim, dim, 1, 1) -> (Cin, Cout)
    wv = jnp.transpose(0.1 * jax.random.normal(keys[5], (dim, dim), jnp.float32))
    vs, vb = bn_fold(keys[6], keys[7], keys[8], keys[9], dim)

    # attention_embed conv1 (Cmid, 2*dim, 1, 1) -> (2*dim, Cmid)
    wa1 = jnp.transpose(0.1 * jax.random.normal(keys[10], (Cmid, 2 * dim),
                                                jnp.float32))
    a1s, a1b = bn_fold(keys[11], keys[12], keys[13], keys[14], Cmid)

    # attention_embed conv2 (KK*dim, Cmid, 1, 1) with bias -> (Cmid, KK*dim)
    wa2 = jnp.transpose(0.1 * jax.random.normal(keys[15], (C9, Cmid), jnp.float32))
    a2b = (0.05 * jax.random.normal(jax.random.fold_in(key, 99), (C9,),
                                    jnp.float32)).reshape(1, C9)

    # grouping matrix implementing mean over the KK taps (channel o -> o // KK)
    mavg = np.zeros((C9, dim), np.float32)
    for ci in range(dim):
        mavg[ci * KK:(ci + 1) * KK, ci] = 1.0
    mavg = jnp.asarray(mavg)

    return (wk, ks, kb, wv, vs, vb, wa1, a1s, a1b, wa2, a2b, mavg)


def cot_reference(x_nchw, params, kernel_size=3):
    """Pure-JAX f32 reference using the raw (unfolded) params."""
    B, C, H, W = x_nchw.shape
    HW = H * W
    KK = kernel_size * kernel_size
    pad = kernel_size // 2
    (wk, ks, kb, wv, vs, vb, wa1, a1s, a1b, wa2, a2b, mavg) = params
    x = jnp.transpose(x_nchw, (0, 2, 3, 1)).astype(jnp.float32)
    xp = jnp.pad(x, ((0, 0), (pad, pad), (pad, pad), (0, 0)))
    acc = jnp.zeros((B, HW, C), jnp.float32)
    t = 0
    for dy in range(kernel_size):
        for dx in range(kernel_size):
            patch = xp[:, dy:dy + H, dx:dx + W, :].reshape(B, HW, C)
            acc = acc + jnp.einsum('bpc,cd->bpd', patch, wk[t])
            t += 1
    k1 = jnp.maximum(acc * ks + kb, 0.0)
    xf = x.reshape(B, HW, C)
    v = jnp.einsum('bpc,cd->bpd', xf, wv) * vs + vb
    y = jnp.concatenate([k1, xf], axis=-1)
    a1 = jnp.maximum(jnp.einsum('bpc,cd->bpd', y, wa1) * a1s + a1b, 0.0)
    att = jnp.einsum('bpc,cd->bpd', a1, wa2) + a2b
    att_mean = jnp.einsum('bpc,cd->bpd', att, mavg) / KK
    sm = jax.nn.softmax(att_mean, axis=1)            # softmax over spatial
    out = k1 + sm * v
    return jnp.transpose(out, (0, 2, 1)).reshape(B, C, H, W)


if __name__ == "__main__":
    # Small shapes consistent with the module (dim divisible by groups=4):
    # C=128 keeps every matmul operand and the output lane-dense, H=W=16 gives
    # M = H*W = 256 rows per grid step (MXU fill) and nb = 4 grid steps.
    B, C, H, W = 4, 128, 16, 16
    kernel_size = 3

    key = jax.random.PRNGKey(0)
    kx, kp = jax.random.split(key)
    x = jax.random.normal(kx, (B, C, H, W), jnp.float32)
    params = init_params(kp, dim=C, kernel_size=kernel_size)

    out = cot_attention(x, params, kernel_size=kernel_size, block_b=1)
    out = jax.block_until_ready(out)

    ref = cot_reference(x, params, kernel_size=kernel_size)
    assert out.shape == (B, C, H, W)
    err = float(jnp.max(jnp.abs(out - ref)))
    rel = err / (float(jnp.max(jnp.abs(ref))) + 1e-6)
    if rel < 2e-2:   # bf16 matmuls vs f32 reference -> small relative error
        print("KERNEL_OK")
    else:
        print(f"MISMATCH max_abs_err={err} rel_err={rel}")
</pallas_src>

<mosaic_0001>
module attributes {stable_mosaic.version = 11 : i64} {
  func.func @_cot_kernel(%arg0: i32, %arg1: memref<1x18x18x128xbf16, #tpu.memory_space<vmem>>, %arg2: memref<9x128x128xbf16, #tpu.memory_space<vmem>>, %arg3: memref<128x256xbf16, #tpu.memory_space<vmem>>, %arg4: memref<128x128xbf16, #tpu.memory_space<vmem>>, %arg5: memref<128x128xbf16, #tpu.memory_space<vmem>>, %arg6: memref<8x128xf32, #tpu.memory_space<vmem>>, %arg7: memref<1x256x128xf32, #tpu.memory_space<vmem>>) attributes {dimension_semantics = [#tpu.dimension_semantics<parallel>], iteration_bounds = array<i64: 4>, scalar_prefetch = 0 : i64, scratch_operands = 0 : i64, tpu.core_type = #tpu.core_type<tc>, window_params = [{transform_indices = @transform_0, window_bounds = array<i64: 1, 18, 18, 128>}, {pipeline_mode = #tpu.pipeline_mode<synchronous>, transform_indices = @transform_1, window_bounds = array<i64: 9, 128, 128>}, {pipeline_mode = #tpu.pipeline_mode<synchronous>, transform_indices = @transform_2, window_bounds = array<i64: 128, 256>}, {pipeline_mode = #tpu.pipeline_mode<synchronous>, transform_indices = @transform_3, window_bounds = array<i64: 128, 128>}, {pipeline_mode = #tpu.pipeline_mode<synchronous>, transform_indices = @transform_4, window_bounds = array<i64: 128, 128>}, {pipeline_mode = #tpu.pipeline_mode<synchronous>, transform_indices = @transform_5, window_bounds = array<i64: 8, 128>}, {transform_indices = @transform_6, window_bounds = array<i64: 1, 256, 128>}]} {
    %c0 = arith.constant 0 : index
    %c0_0 = arith.constant 0 : index
    %0 = vector.load %arg6[%c0, %c0_0] : memref<8x128xf32, #tpu.memory_space<vmem>>, vector<8x128xf32>
    %1 = vector.extract_strided_slice %0 {offsets = [0, 0], sizes = [1, 128], strides = [1, 1]} : vector<8x128xf32> to vector<1x128xf32>
    %2 = vector.extract_strided_slice %0 {offsets = [1, 0], sizes = [1, 128], strides = [1, 1]} : vector<8x128xf32> to vector<1x128xf32>
    %3 = vector.extract_strided_slice %0 {offsets = [2, 0], sizes = [1, 128], strides = [1, 1]} : vector<8x128xf32> to vector<1x128xf32>
    %4 = vector.extract_strided_slice %0 {offsets = [3, 0], sizes = [1, 128], strides = [1, 1]} : vector<8x128xf32> to vector<1x128xf32>
    %5 = vector.extract_strided_slice %0 {offsets = [4, 0], sizes = [1, 128], strides = [1, 1]} : vector<8x128xf32> to vector<1x128xf32>
    %6 = vector.extract_strided_slice %0 {offsets = [5, 0], sizes = [1, 128], strides = [1, 1]} : vector<8x128xf32> to vector<1x128xf32>
    %7 = vector.extract_strided_slice %0 {offsets = [6, 0], sizes = [1, 128], strides = [1, 1]} : vector<8x128xf32> to vector<1x128xf32>
    %c0_1 = arith.constant 0 : index
    %c0_2 = arith.constant 0 : index
    %c0_3 = arith.constant 0 : index
    %c0_4 = arith.constant 0 : index
    %8 = vector.load %arg1[%c0_1, %c0_2, %c0_3, %c0_4] : memref<1x18x18x128xbf16, #tpu.memory_space<vmem>>, vector<1x18x18x128xbf16>
    %9 = vector.extract_strided_slice %8 {offsets = [0, 0, 0, 0], sizes = [1, 16, 16, 128], strides = [1, 1, 1, 1]} : vector<1x18x18x128xbf16> to vector<1x16x16x128xbf16>
    %10 = vector.shape_cast %9 : vector<1x16x16x128xbf16> to vector<256x128xbf16>
    %c0_5 = arith.constant 0 : index
    %c0_6 = arith.constant 0 : index
    %c0_7 = arith.constant 0 : index
    %11 = vector.load %arg2[%c0_5, %c0_6, %c0_7] : memref<9x128x128xbf16, #tpu.memory_space<vmem>>, vector<1x128x128xbf16>
    %12 = vector.shape_cast %11 : vector<1x128x128xbf16> to vector<128x128xbf16>
    %cst = arith.constant dense<0.000000e+00> : vector<256x128xf32>
    %13 = tpu.matmul %10, %12, %cst {dimension_numbers = #tpu.dot_dimension_numbers<[1], [0], [0], [1], [0, 0, 1, 1], [], []>} : vector<256x128xbf16>, vector<128x128xbf16>, vector<256x128xf32> -> vector<256x128xf32>
    %14 = vector.extract_strided_slice %8 {offsets = [0, 0, 1, 0], sizes = [1, 16, 16, 128], strides = [1, 1, 1, 1]} : vector<1x18x18x128xbf16> to vector<1x16x16x128xbf16>
    %15 = vector.shape_cast %14 : vector<1x16x16x128xbf16> to vector<256x128xbf16>
    %c1 = arith.constant 1 : index
    %c0_8 = arith.constant 0 : index
    %c0_9 = arith.constant 0 : index
    %16 = vector.load %arg2[%c1, %c0_8, %c0_9] : memref<9x128x128xbf16, #tpu.memory_space<vmem>>, vector<1x128x128xbf16>
    %17 = vector.shape_cast %16 : vector<1x128x128xbf16> to vector<128x128xbf16>
    %cst_10 = arith.constant dense<0.000000e+00> : vector<256x128xf32>
    %18 = tpu.matmul %15, %17, %cst_10 {dimension_numbers = #tpu.dot_dimension_numbers<[1], [0], [0], [1], [0, 0, 1, 1], [], []>} : vector<256x128xbf16>, vector<128x128xbf16>, vector<256x128xf32> -> vector<256x128xf32>
    %19 = arith.addf %13, %18 : vector<256x128xf32>
    %20 = vector.extract_strided_slice %8 {offsets = [0, 0, 2, 0], sizes = [1, 16, 16, 128], strides = [1, 1, 1, 1]} : vector<1x18x18x128xbf16> to vector<1x16x16x128xbf16>
    %21 = vector.shape_cast %20 : vector<1x16x16x128xbf16> to vector<256x128xbf16>
    %c2 = arith.constant 2 : index
    %c0_11 = arith.constant 0 : index
    %c0_12 = arith.constant 0 : index
    %22 = vector.load %arg2[%c2, %c0_11, %c0_12] : memref<9x128x128xbf16, #tpu.memory_space<vmem>>, vector<1x128x128xbf16>
    %23 = vector.shape_cast %22 : vector<1x128x128xbf16> to vector<128x128xbf16>
    %cst_13 = arith.constant dense<0.000000e+00> : vector<256x128xf32>
    %24 = tpu.matmul %21, %23, %cst_13 {dimension_numbers = #tpu.dot_dimension_numbers<[1], [0], [0], [1], [0, 0, 1, 1], [], []>} : vector<256x128xbf16>, vector<128x128xbf16>, vector<256x128xf32> -> vector<256x128xf32>
    %25 = arith.addf %19, %24 : vector<256x128xf32>
    %26 = vector.extract_strided_slice %8 {offsets = [0, 1, 0, 0], sizes = [1, 16, 16, 128], strides = [1, 1, 1, 1]} : vector<1x18x18x128xbf16> to vector<1x16x16x128xbf16>
    %27 = vector.shape_cast %26 : vector<1x16x16x128xbf16> to vector<256x128xbf16>
    %c3 = arith.constant 3 : index
    %c0_14 = arith.constant 0 : index
    %c0_15 = arith.constant 0 : index
    %28 = vector.load %arg2[%c3, %c0_14, %c0_15] : memref<9x128x128xbf16, #tpu.memory_space<vmem>>, vector<1x128x128xbf16>
    %29 = vector.shape_cast %28 : vector<1x128x128xbf16> to vector<128x128xbf16>
    %cst_16 = arith.constant dense<0.000000e+00> : vector<256x128xf32>
    %30 = tpu.matmul %27, %29, %cst_16 {dimension_numbers = #tpu.dot_dimension_numbers<[1], [0], [0], [1], [0, 0, 1, 1], [], []>} : vector<256x128xbf16>, vector<128x128xbf16>, vector<256x128xf32> -> vector<256x128xf32>
    %31 = arith.addf %25, %30 : vector<256x128xf32>
    %32 = vector.extract_strided_slice %8 {offsets = [0, 1, 1, 0], sizes = [1, 16, 16, 128], strides = [1, 1, 1, 1]} : vector<1x18x18x128xbf16> to vector<1x16x16x128xbf16>
    %33 = vector.shape_cast %32 : vector<1x16x16x128xbf16> to vector<256x128xbf16>
    %c4 = arith.constant 4 : index
    %c0_17 = arith.constant 0 : index
    %c0_18 = arith.constant 0 : index
    %34 = vector.load %arg2[%c4, %c0_17, %c0_18] : memref<9x128x128xbf16, #tpu.memory_space<vmem>>, vector<1x128x128xbf16>
    %35 = vector.shape_cast %34 : vector<1x128x128xbf16> to vector<128x128xbf16>
    %cst_19 = arith.constant dense<0.000000e+00> : vector<256x128xf32>
    %36 = tpu.matmul %33, %35, %cst_19 {dimension_numbers = #tpu.dot_dimension_numbers<[1], [0], [0], [1], [0, 0, 1, 1], [], []>} : vector<256x128xbf16>, vector<128x128xbf16>, vector<256x128xf32> -> vector<256x128xf32>
    %37 = arith.addf %31, %36 : vector<256x128xf32>
    %38 = vector.extract_strided_slice %8 {offsets = [0, 1, 2, 0], sizes = [1, 16, 16, 128], strides = [1, 1, 1, 1]} : vector<1x18x18x128xbf16> to vector<1x16x16x128xbf16>
    %39 = vector.shape_cast %38 : vector<1x16x16x128xbf16> to vector<256x128xbf16>
    %c5 = arith.constant 5 : index
    %c0_20 = arith.constant 0 : index
    %c0_21 = arith.constant 0 : index
    %40 = vector.load %arg2[%c5, %c0_20, %c0_21] : memref<9x128x128xbf16, #tpu.memory_space<vmem>>, vector<1x128x128xbf16>
    %41 = vector.shape_cast %40 : vector<1x128x128xbf16> to vector<128x128xbf16>
    %cst_22 = arith.constant dense<0.000000e+00> : vector<256x128xf32>
    %42 = tpu.matmul %39, %41, %cst_22 {dimension_numbers = #tpu.dot_dimension_numbers<[1], [0], [0], [1], [0, 0, 1, 1], [], []>} : vector<256x128xbf16>, vector<128x128xbf16>, vector<256x128xf32> -> vector<256x128xf32>
    %43 = arith.addf %37, %42 : vector<256x128xf32>
    %44 = vector.extract_strided_slice %8 {offsets = [0, 2, 0, 0], sizes = [1, 16, 16, 128], strides = [1, 1, 1, 1]} : vector<1x18x18x128xbf16> to vector<1x16x16x128xbf16>
    %45 = vector.shape_cast %44 : vector<1x16x16x128xbf16> to vector<256x128xbf16>
    %c6 = arith.constant 6 : index
    %c0_23 = arith.constant 0 : index
    %c0_24 = arith.constant 0 : index
    %46 = vector.load %arg2[%c6, %c0_23, %c0_24] : memref<9x128x128xbf16, #tpu.memory_space<vmem>>, vector<1x128x128xbf16>
    %47 = vector.shape_cast %46 : vector<1x128x128xbf16> to vector<128x128xbf16>
    %cst_25 = arith.constant dense<0.000000e+00> : vector<256x128xf32>
    %48 = tpu.matmul %45, %47, %cst_25 {dimension_numbers = #tpu.dot_dimension_numbers<[1], [0], [0], [1], [0, 0, 1, 1], [], []>} : vector<256x128xbf16>, vector<128x128xbf16>, vector<256x128xf32> -> vector<256x128xf32>
    %49 = arith.addf %43, %48 : vector<256x128xf32>
    %50 = vector.extract_strided_slice %8 {offsets = [0, 2, 1, 0], sizes = [1, 16, 16, 128], strides = [1, 1, 1, 1]} : vector<1x18x18x128xbf16> to vector<1x16x16x128xbf16>
    %51 = vector.shape_cast %50 : vector<1x16x16x128xbf16> to vector<256x128xbf16>
    %c7 = arith.constant 7 : index
    %c0_26 = arith.constant 0 : index
    %c0_27 = arith.constant 0 : index
    %52 = vector.load %arg2[%c7, %c0_26, %c0_27] : memref<9x128x128xbf16, #tpu.memory_space<vmem>>, vector<1x128x128xbf16>
    %53 = vector.shape_cast %52 : vector<1x128x128xbf16> to vector<128x128xbf16>
    %cst_28 = arith.constant dense<0.000000e+00> : vector<256x128xf32>
    %54 = tpu.matmul %51, %53, %cst_28 {dimension_numbers = #tpu.dot_dimension_numbers<[1], [0], [0], [1], [0, 0, 1, 1], [], []>} : vector<256x128xbf16>, vector<128x128xbf16>, vector<256x128xf32> -> vector<256x128xf32>
    %55 = arith.addf %49, %54 : vector<256x128xf32>
    %56 = vector.extract_strided_slice %8 {offsets = [0, 2, 2, 0], sizes = [1, 16, 16, 128], strides = [1, 1, 1, 1]} : vector<1x18x18x128xbf16> to vector<1x16x16x128xbf16>
    %57 = vector.shape_cast %56 : vector<1x16x16x128xbf16> to vector<256x128xbf16>
    %c8 = arith.constant 8 : index
    %c0_29 = arith.constant 0 : index
    %c0_30 = arith.constant 0 : index
    %58 = vector.load %arg2[%c8, %c0_29, %c0_30] : memref<9x128x128xbf16, #tpu.memory_space<vmem>>, vector<1x128x128xbf16>
    %59 = vector.shape_cast %58 : vector<1x128x128xbf16> to vector<128x128xbf16>
    %cst_31 = arith.constant dense<0.000000e+00> : vector<256x128xf32>
    %60 = tpu.matmul %57, %59, %cst_31 {dimension_numbers = #tpu.dot_dimension_numbers<[1], [0], [0], [1], [0, 0, 1, 1], [], []>} : vector<256x128xbf16>, vector<128x128xbf16>, vector<256x128xf32> -> vector<256x128xf32>
    %61 = arith.addf %55, %60 : vector<256x128xf32>
    %62 = vector.broadcast %1 : vector<1x128xf32> to vector<256x128xf32>
    %63 = arith.mulf %61, %62 : vector<256x128xf32>
    %64 = vector.broadcast %2 : vector<1x128xf32> to vector<256x128xf32>
    %65 = arith.addf %63, %64 : vector<256x128xf32>
    %cst_32 = arith.constant 0.000000e+00 : f32
    %66 = vector.broadcast %cst_32 : f32 to vector<256x128xf32>
    %67 = arith.maximumf %65, %66 : vector<256x128xf32>
    %c0_33 = arith.constant 0 : index
    %c0_34 = arith.constant 0 : index
    %68 = vector.load %arg3[%c0_33, %c0_34] : memref<128x256xbf16, #tpu.memory_space<vmem>>, vector<128x256xbf16>
    %cst_35 = arith.constant dense<0.000000e+00> : vector<256x256xf32>
    %69 = tpu.matmul %33, %68, %cst_35 {dimension_numbers = #tpu.dot_dimension_numbers<[1], [0], [0], [1], [0, 0, 1, 1], [], []>} : vector<256x128xbf16>, vector<128x256xbf16>, vector<256x256xf32> -> vector<256x256xf32>
    %70 = vector.extract_strided_slice %69 {offsets = [0, 0], sizes = [256, 128], strides = [1, 1]} : vector<256x256xf32> to vector<256x128xf32>
    %71 = vector.broadcast %3 : vector<1x128xf32> to vector<256x128xf32>
    %72 = arith.mulf %70, %71 : vector<256x128xf32>
    %73 = vector.broadcast %4 : vector<1x128xf32> to vector<256x128xf32>
    %74 = arith.addf %72, %73 : vector<256x128xf32>
    %75 = arith.truncf %74 : vector<256x128xf32> to vector<256x128xbf16>
    %76 = vector.extract_strided_slice %69 {offsets = [0, 128], sizes = [256, 128], strides = [1, 1]} : vector<256x256xf32> to vector<256x128xf32>
    %77 = arith.truncf %67 : vector<256x128xf32> to vector<256x128xbf16>
    %c0_36 = arith.constant 0 : index
    %c0_37 = arith.constant 0 : index
    %78 = vector.load %arg4[%c0_36, %c0_37] : memref<128x128xbf16, #tpu.memory_space<vmem>>, vector<128x128xbf16>
    %cst_38 = arith.constant dense<0.000000e+00> : vector<256x128xf32>
    %79 = tpu.matmul %77, %78, %cst_38 {dimension_numbers = #tpu.dot_dimension_numbers<[1], [0], [0], [1], [0, 0, 1, 1], [], []>} : vector<256x128xbf16>, vector<128x128xbf16>, vector<256x128xf32> -> vector<256x128xf32>
    %80 = arith.addf %79, %76 : vector<256x128xf32>
    %81 = vector.broadcast %5 : vector<1x128xf32> to vector<256x128xf32>
    %82 = arith.mulf %80, %81 : vector<256x128xf32>
    %83 = vector.broadcast %6 : vector<1x128xf32> to vector<256x128xf32>
    %84 = arith.addf %82, %83 : vector<256x128xf32>
    %cst_39 = arith.constant 0.000000e+00 : f32
    %85 = vector.broadcast %cst_39 : f32 to vector<256x128xf32>
    %86 = arith.maximumf %84, %85 : vector<256x128xf32>
    %87 = arith.truncf %86 : vector<256x128xf32> to vector<256x128xbf16>
    %c0_40 = arith.constant 0 : index
    %c0_41 = arith.constant 0 : index
    %88 = vector.load %arg5[%c0_40, %c0_41] : memref<128x128xbf16, #tpu.memory_space<vmem>>, vector<128x128xbf16>
    %cst_42 = arith.constant dense<0.000000e+00> : vector<256x128xf32>
    %89 = tpu.matmul %87, %88, %cst_42 {dimension_numbers = #tpu.dot_dimension_numbers<[1], [0], [0], [1], [0, 0, 1, 1], [], []>} : vector<256x128xbf16>, vector<128x128xbf16>, vector<256x128xf32> -> vector<256x128xf32>
    %90 = vector.broadcast %7 : vector<1x128xf32> to vector<256x128xf32>
    %91 = arith.addf %89, %90 : vector<256x128xf32>
    %92 = vector.shape_cast %91 : vector<256x128xf32> to vector<1x256x128xf32>
    %cst_43 = arith.constant dense<0xFF800000> : vector<1x128xf32>
    %93 = vector.multi_reduction <maximumf>, %92, %cst_43 [1] : vector<1x256x128xf32> to vector<1x128xf32>
    %94 = vector.shape_cast %93 : vector<1x128xf32> to vector<1x1x128xf32>
    %95 = vector.broadcast %94 : vector<1x1x128xf32> to vector<1x256x128xf32>
    %96 = arith.subf %92, %95 : vector<1x256x128xf32>
    %97 = math.exp %96 : vector<1x256x128xf32>
    %cst_44 = arith.constant dense<0.000000e+00> : vector<1x128xf32>
    %98 = vector.multi_reduction <add>, %97, %cst_44 [1] : vector<1x256x128xf32> to vector<1x128xf32>
    %99 = vector.shape_cast %98 : vector<1x128xf32> to vector<1x1x128xf32>
    %100 = tpu.reciprocal %99 {approx = true} : vector<1x1x128xf32> -> vector<1x1x128xf32>
    %101 = vector.broadcast %100 : vector<1x1x128xf32> to vector<1x256x128xf32>
    %102 = arith.mulf %97, %101 : vector<1x256x128xf32>
    %103 = vector.shape_cast %75 : vector<256x128xbf16> to vector<1x256x128xbf16>
    %104 = arith.extf %103 : vector<1x256x128xbf16> to vector<1x256x128xf32>
    %105 = arith.mulf %102, %104 : vector<1x256x128xf32>
    %106 = vector.shape_cast %67 : vector<256x128xf32> to vector<1x256x128xf32>
    %107 = arith.addf %106, %105 : vector<1x256x128xf32>
    %c0_45 = arith.constant 0 : index
    %c0_46 = arith.constant 0 : index
    %c0_47 = arith.constant 0 : index
    %108 = vector.load %arg7[%c0_45, %c0_46, %c0_47] : memref<1x256x128xf32, #tpu.memory_space<vmem>>, vector<1x256x128xf32>
    tpu.vector_store %arg7[%c0_45, %c0_46, %c0_47], %107 {strides = array<i32>} : memref<1x256x128xf32, #tpu.memory_space<vmem>>, vector<1x256x128xf32>,
    return
  }
  func.func @transform_0(%arg0: i32) -> (i32, i32, i32, i32) {
    %c0_i32 = arith.constant 0 : i32
    %c0_i32_0 = arith.constant 0 : i32
    %c0_i32_1 = arith.constant 0 : i32
    %c0_i32_2 = arith.constant 0 : i32
    return %arg0, %c0_i32, %c0_i32_0, %c0_i32_1 : i32, i32, i32, i32
  }
  func.func @transform_1(%arg0: i32) -> (i32, i32, i32) {
    %c0_i32 = arith.constant 0 : i32
    %c0_i32_0 = arith.constant 0 : i32
    %c0_i32_1 = arith.constant 0 : i32
    %c0_i32_2 = arith.constant 0 : i32
    return %c0_i32, %c0_i32_0, %c0_i32_1 : i32, i32, i32
  }
  func.func @transform_2(%arg0: i32) -> (i32, i32) {
    %c0_i32 = arith.constant 0 : i32
    %c0_i32_0 = arith.constant 0 : i32
    %c0_i32_1 = arith.constant 0 : i32
    return %c0_i32, %c0_i32_0 : i32, i32
  }
  func.func @transform_3(%arg0: i32) -> (i32, i32) {
    %c0_i32 = arith.constant 0 : i32
    %c0_i32_0 = arith.constant 0 : i32
    %c0_i32_1 = arith.constant 0 : i32
    return %c0_i32, %c0_i32_0 : i32, i32
  }
  func.func @transform_4(%arg0: i32) -> (i32, i32) {
    %c0_i32 = arith.constant 0 : i32
    %c0_i32_0 = arith.constant 0 : i32
    %c0_i32_1 = arith.constant 0 : i32
    return %c0_i32, %c0_i32_0 : i32, i32
  }
  func.func @transform_5(%arg0: i32) -> (i32, i32) {
    %c0_i32 = arith.constant 0 : i32
    %c0_i32_0 = arith.constant 0 : i32
    %c0_i32_1 = arith.constant 0 : i32
    return %c0_i32, %c0_i32_0 : i32, i32
  }
  func.func @transform_6(%arg0: i32) -> (i32, i32, i32) {
    %c0_i32 = arith.constant 0 : i32
    %c0_i32_0 = arith.constant 0 : i32
    %c0_i32_1 = arith.constant 0 : i32
    return %arg0, %c0_i32, %c0_i32_0 : i32, i32, i32
  }
}

</mosaic_0001>

<llo_original>
// kernel: tpu_custom_call.1
$region0: #{tpu_custom_call.1}
  #allocation0 [shape = 'u32[]', space=smem, size = 0x4, offset = 0x4, fixed_abs, tag = 'smem constant byte address 0x4 - core index']
  #allocation1 [shape = 'u32[144,128]{1,0:T(1,128)}', space=vmem, size = 0x12000, scoped, tag = 'internal scratch']
  %s0 = inlined_call_operand.vmem [shape: bf16[4,18,18,128], index: 0, kind: input, shape index: {}]
  %s1 = inlined_call_operand.vmem [shape: bf16[9,128,128], index: 1, kind: input, shape index: {}]
  %s2 = inlined_call_operand.vmem [shape: bf16[128,256], index: 2, kind: input, shape index: {}]
  %s3 = inlined_call_operand.vmem [shape: bf16[128,128], index: 3, kind: input, shape index: {}]
  %s4 = inlined_call_operand.vmem [shape: bf16[128,128], index: 4, kind: input, shape index: {}]
  %s5 = inlined_call_operand.vmem [shape: f32[8,128], index: 5, kind: input, shape index: {}]
  %s6 = inlined_call_operand.hbm [shape: f32[4,256,128], index: 6, kind: output, shape index: {}]
  %s7 = sld [smem:[#allocation0]]
  $region57: #{tpu_custom_call.1} parent=0
    _
  %s9 = ssub.s32 1, %s7
  %s10 = scalar_select 0, %s9, %s7
  $region1: #{tpu_custom_call.1} parent=0
    #allocation2 [shape = 'u8[262144]{0}', space=vmem, size = 0x40000, scoped, tag = 'output window, operand 0']
    #allocation3 [shape = 's32[2]{0}', space=sflag, size = 0x8, scoped, tag = 'scoped memory for tpu_custom_call.1']
    %11 = vsyncpa [#allocation3], 0
    %s12 = scalar_lea.sflag [#allocation3], 1
    %13 = vsyncpa %s12, 0
    loop: start=0, step=1, limit=6
    $region2: #{tpu_custom_call.1} parent=1 // loop_pre_header
      _
    $region3: #{tpu_custom_call.1} parent=1 // loop_header
      %s15 = sphi 0, %s19
      %p16 = scmp.ge.s32.totalorder %s15, 6
      %s25 = sphi 0, %s27
      %s28 = sphi 0, %s25
      %s29 = sphi 0, %s28
      %s45 = sphi 0, %s29
      %s49 = sphi 0, %s49
      %s51 = sphi 0, %s49
      %s52 = sphi 0, %s51
      %s66 = sphi 0, %s52
      %s70 = sphi 0, %s70
      %s72 = sphi 0, %s70
      %s73 = sphi 0, %s72
      %s87 = sphi 0, %s73
      %s91 = sphi 0, %s91
      %s93 = sphi 0, %s91
      %s94 = sphi 0, %s93
      %s108 = sphi 0, %s94
      %s112 = sphi 0, %s112
      %s114 = sphi 0, %s112
      %s115 = sphi 0, %s114
      %s129 = sphi 0, %s115
      %s133 = sphi 0, %s133
      %s135 = sphi 0, %s133
      %s136 = sphi 0, %s135
      %s150 = sphi 0, %s136
      %s156 = sphi 0, %s158
      %s159 = sphi 0, %s156
      %s160 = sphi 0, %s159
      %s176 = sphi 0, %s160
    $region4: #{tpu_custom_call.1} parent=1 // loop_header_branch
      %18 = sbr.rel (%p16) target = $region8
    $region5: #{tpu_custom_call.1} parent=1 // loop_body
      %s20 = ssub.s32 %s15, 1
      %s21 = ssub.s32 %s15, 2
      %s22 = sadd.s32 %s15, 1
      %s23 = ssub.s32 %s15, %s22
      %p24 = scmp.eq.s32.totalorder %s23, 0
      %s26 = sadd.s32 %s25, 1
      %s27 = scalar_select %p24, %s25, %s26
      %p30 = pneg %p24
      %p31 = scmp.eq.s32.totalorder %s15, 3
      %p32 = por %p30, %p31
      %p33 = scmp.ne.s32.totalorder %s25, %s28
      %p34 = scmp.eq.s32.totalorder %s15, 0
      %p35 = por %p33, %p34
      %p36 = scmp.ne.s32.totalorder %s25, %s28
      %p37 = scmp.eq.s32.totalorder %s20, 3
      %p38 = por %p36, %p37
      %p39 = scmp.ne.s32.totalorder %s28, %s29
      %p40 = scmp.eq.s32.totalorder %s20, 0
      %p41 = por %p39, %p40
      %p42 = scmp.ne.s32.totalorder %s28, %s29
      %p43 = scmp.eq.s32.totalorder %s21, 3
      %p44 = por %p42, %p43
      %p46 = scmp.ne.s32.totalorder %s29, %s45
      %p47 = scmp.eq.s32.totalorder %s21, 0
      %p48 = por %p46, %p47
      %s50 = sadd.s32 %s49, 1
      %p53 = scmp.eq.s32.totalorder %s15, 3
      %p54 = scmp.ne.s32.totalorder %s49, %s51
      %p55 = scmp.eq.s32.totalorder %s15, 0
      %p56 = por %p54, %p55
      %p57 = scmp.ne.s32.totalorder %s49, %s51
      %p58 = scmp.eq.s32.totalorder %s20, 3
      %p59 = por %p57, %p58
      %p60 = scmp.ne.s32.totalorder %s51, %s52
      %p61 = scmp.eq.s32.totalorder %s20, 0
      %p62 = por %p60, %p61
      %p63 = scmp.ne.s32.totalorder %s51, %s52
      %p64 = scmp.eq.s32.totalorder %s21, 3
      %p65 = por %p63, %p64
      %p67 = scmp.ne.s32.totalorder %s52, %s66
      %p68 = scmp.eq.s32.totalorder %s21, 0
      %p69 = por %p67, %p68
      %s71 = sadd.s32 %s70, 1
      %p74 = scmp.eq.s32.totalorder %s15, 3
      %p75 = scmp.ne.s32.totalorder %s70, %s72
      %p76 = scmp.eq.s32.totalorder %s15, 0
      %p77 = por %p75, %p76
      %p78 = scmp.ne.s32.totalorder %s70, %s72
      %p79 = scmp.eq.s32.totalorder %s20, 3
      %p80 = por %p78, %p79
      %p81 = scmp.ne.s32.totalorder %s72, %s73
      %p82 = scmp.eq.s32.totalorder %s20, 0
      %p83 = por %p81, %p82
      %p84 = scmp.ne.s32.totalorder %s72, %s73
      %p85 = scmp.eq.s32.totalorder %s21, 3
      %p86 = por %p84, %p85
      %p88 = scmp.ne.s32.totalorder %s73, %s87
      %p89 = scmp.eq.s32.totalorder %s21, 0
      %p90 = por %p88, %p89
      %s92 = sadd.s32 %s91, 1
      %p95 = scmp.eq.s32.totalorder %s15, 3
      %p96 = scmp.ne.s32.totalorder %s91, %s93
      %p97 = scmp.eq.s32.totalorder %s15, 0
      %p98 = por %p96, %p97
      %p99 = scmp.ne.s32.totalorder %s91, %s93
      %p100 = scmp.eq.s32.totalorder %s20, 3
      %p101 = por %p99, %p100
      %p102 = scmp.ne.s32.totalorder %s93, %s94
      %p103 = scmp.eq.s32.totalorder %s20, 0
      %p104 = por %p102, %p103
      %p105 = scmp.ne.s32.totalorder %s93, %s94
      %p106 = scmp.eq.s32.totalorder %s21, 3
      %p107 = por %p105, %p106
      %p109 = scmp.ne.s32.totalorder %s94, %s108
      %p110 = scmp.eq.s32.totalorder %s21, 0
      %p111 = por %p109, %p110
      %s113 = sadd.s32 %s112, 1
      %p116 = scmp.eq.s32.totalorder %s15, 3
      %p117 = scmp.ne.s32.totalorder %s112, %s114
      %p118 = scmp.eq.s32.totalorder %s15, 0
      %p119 = por %p117, %p118
      %p120 = scmp.ne.s32.totalorder %s112, %s114
      %p121 = scmp.eq.s32.totalorder %s20, 3
      %p122 = por %p120, %p121
      %p123 = scmp.ne.s32.totalorder %s114, %s115
      %p124 = scmp.eq.s32.totalorder %s20, 0
      %p125 = por %p123, %p124
      %p126 = scmp.ne.s32.totalorder %s114, %s115
      %p127 = scmp.eq.s32.totalorder %s21, 3
      %p128 = por %p126, %p127
      %p130 = scmp.ne.s32.totalorder %s115, %s129
      %p131 = scmp.eq.s32.totalorder %s21, 0
      %p132 = por %p130, %p131
      %s134 = sadd.s32 %s133, 1
      %p137 = scmp.eq.s32.totalorder %s15, 3
      %p138 = scmp.ne.s32.totalorder %s133, %s135
      %p139 = scmp.eq.s32.totalorder %s15, 0
      %p140 = por %p138, %p139
      %p141 = scmp.ne.s32.totalorder %s133, %s135
      %p142 = scmp.eq.s32.totalorder %s20, 3
      %p143 = por %p141, %p142
      %p144 = scmp.ne.s32.totalorder %s135, %s136
      %p145 = scmp.eq.s32.totalorder %s20, 0
      %p146 = por %p144, %p145
      %p147 = scmp.ne.s32.totalorder %s135, %s136
      %p148 = scmp.eq.s32.totalorder %s21, 3
      %p149 = por %p147, %p148
      %p151 = scmp.ne.s32.totalorder %s136, %s150
      %p152 = scmp.eq.s32.totalorder %s21, 0
      %p153 = por %p151, %p152
      %s154 = ssub.s32 %s15, %s22
      %p155 = scmp.eq.s32.totalorder %s154, 0
      %s157 = sadd.s32 %s156, 1
      %s158 = scalar_select %p155, %s156, %s157
      %p161 = pneg %p155
      %p162 = scmp.eq.s32.totalorder %s15, 3
      %p163 = por %p161, %p162
      %p164 = scmp.ne.s32.totalorder %s156, %s159
      %p165 = scmp.eq.s32.totalorder %s15, 0
      %p166 = por %p164, %p165
      %p167 = scmp.ne.s32.totalorder %s156, %s159
      %p168 = scmp.eq.s32.totalorder %s20, 3
      %p169 = por %p167, %p168
      %p170 = scmp.ne.s32.totalorder %s159, %s160
      %p171 = scmp.eq.s32.totalorder %s20, 0
      %p172 = por %p170, %p171
      %p173 = scmp.ne.s32.totalorder %s159, %s160
      %p174 = scmp.eq.s32.totalorder %s21, 3
      %p175 = por %p173, %p174
      %p177 = scmp.ne.s32.totalorder %s160, %s176
      %p178 = scmp.eq.s32.totalorder %s21, 0
      %p179 = por %p177, %p178
      %p180 = scmp.le.s32.totalorder 1, %s15
      %p181 = scmp.lt.s32.totalorder %s15, 5
      %p182 = pnand %p180, %p181
      %p183 = pneg %p182
      // Predicated region
      $region9: #{tpu_custom_call.1} parent=5 // pred_check
        _
      $region10: #{tpu_custom_call.1} parent=5 // pred_check_branch
        %185 = sbr.rel (%p182) target = $region12
      $region11: #{tpu_custom_call.1} parent=5 // pred_region
        %s186 = ssub.s32 %s15, 1
        // Predicated region
        $region13: #{tpu_custom_call.1} parent=11 // pred_check
          %p187 = pneg %p62
        $region14: #{tpu_custom_call.1} parent=11 // pred_check_branch
          %189 = sbr.rel (%p187) target = $region16
        $region15: #{tpu_custom_call.1} parent=11 // pred_region
          _
        $region16: #{tpu_custom_call.1} parent=11 // pred_fallthru
          _
        // Predicated region
        $region17: #{tpu_custom_call.1} parent=11 // pred_check
          %p190 = pneg %p83
        $region18: #{tpu_custom_call.1} parent=11 // pred_check_branch
          %192 = sbr.rel (%p190) target = $region20
        $region19: #{tpu_custom_call.1} parent=11 // pred_region
          _
        $region20: #{tpu_custom_call.1} parent=11 // pred_fallthru
          _
        // Predicated region
        $region21: #{tpu_custom_call.1} parent=11 // pred_check
          %p193 = pneg %p104
        $region22: #{tpu_custom_call.1} parent=11 // pred_check_branch
          %195 = sbr.rel (%p193) target = $region24
        $region23: #{tpu_custom_call.1} parent=11 // pred_region
          _
        $region24: #{tpu_custom_call.1} parent=11 // pred_fallthru
          _
        // Predicated region
        $region25: #{tpu_custom_call.1} parent=11 // pred_check
          %p196 = pneg %p125
        $region26: #{tpu_custom_call.1} parent=11 // pred_check_branch
          %198 = sbr.rel (%p196) target = $region28
        $region27: #{tpu_custom_call.1} parent=11 // pred_region
          _
        $region28: #{tpu_custom_call.1} parent=11 // pred_fallthru
          _
        // Predicated region
        $region29: #{tpu_custom_call.1} parent=11 // pred_check
          %p199 = pneg %p146
        $region30: #{tpu_custom_call.1} parent=11 // pred_check_branch
          %201 = sbr.rel (%p199) target = $region32
        $region31: #{tpu_custom_call.1} parent=11 // pred_region
          _
        $region32: #{tpu_custom_call.1} parent=11 // pred_fallthru
          _
      $region12: #{tpu_custom_call.1} parent=5 // pred_fallthru
        _
      %p202 = scmp.lt.s32.totalorder %s15, 4
      // Predicated region
      $region33: #{tpu_custom_call.1} parent=5 // pred_check
        %p203 = pneg %p202
      $region34: #{tpu_custom_call.1} parent=5 // pred_check_branch
        %205 = sbr.rel (%p203) target = $region36
      $region35: #{tpu_custom_call.1} parent=5 // pred_region
        // Predicated region
        $region37: #{tpu_custom_call.1} parent=35 // pred_check
          %p206 = pneg %p35
        $region38: #{tpu_custom_call.1} parent=35 // pred_check_branch
          %208 = sbr.rel (%p206) target = $region40
        $region39: #{tpu_custom_call.1} parent=35 // pred_region
          %p209 = scmp.lt.s32.totalorder %s15, 3
          %s210 = scalar_select %p209, %s15, 3
          %s211 = smul.addr %s210, 54
          %s212 = smul.addr %s211, 4
          %s213 = scalar_lea.vmem %s0, %s212
        $region40: #{tpu_custom_call.1} parent=35 // pred_fallthru
          _
      $region36: #{tpu_custom_call.1} parent=5 // pred_fallthru
        _
      %p214 = scmp.le.s32.totalorder 1, %s15
      %p215 = scmp.lt.s32.totalorder %s15, 5
      %p216 = pnand %p214, %p215
      %p217 = pneg %p216
      // Predicated region
      $region41: #{tpu_custom_call.1} parent=5 // pred_check
        _
      $region42: #{tpu_custom_call.1} parent=5 // pred_check_branch
        %219 = sbr.rel (%p216) target = $region44
      $region43: #{tpu_custom_call.1} parent=5 // pred_region
        %s220 = ssub.s32 %s15, 1
        %p221 = scmp.lt.s32.totalorder %s20, 3
        %s222 = scalar_select %p221, %s20, 3
        %s223 = smul.addr %s222, 54
        %s224 = smul.addr %s223, 4
        %s225 = scalar_lea.vmem %s0, %s224
        %p226 = pneg %p41
        %p227 = pneg %p38
        %p228 = pneg %p62
        %p229 = pneg %p59
        %p230 = pneg %p83
        %p231 = pneg %p80
        %p232 = pneg %p104
        %p233 = pneg %p101
        %p234 = pneg %p125
        %p235 = pneg %p122
        %p236 = pneg %p146
        %p237 = pneg %p143
        %p238 = pneg %p172
        %p239 = pneg %p169
        %s240 = sand.u32 %s159, 1
        %s241 = scalar_lea.sflag [#allocation3], %s240
        %s242 = sand.u32 %s159, 1
        %s243 = smul.addr %s242, 256
        %s244 = scalar_lea.vmem [#allocation2], %s243
        %p245 = scmp.lt.s32.totalorder %s20, 3
        %s246 = scalar_select %p245, %s20, 3
        %s247 = smul.addr %s246, 54
        %s248 = smul.addr %s247, 4
        %s249 = scalar_lea.vmem %s0, %s248
        %v251 = vld [vmem:[%s5] sm:$0xff]
        %v252 = vld [vmem:[%s249] sm:$0xf]
        %v253 = vld [vmem:[%s249 + $0x4] sm:$0xf]
        %v254 = vld [vmem:[%s249 + $0x8] sm:$0x1]
        %v255 = vld [vmem:[%s249 + $0xc] sm:$0xf]
        %v256 = vld [vmem:[%s249 + $0x10] sm:$0xf]
        %v257 = vld [vmem:[%s249 + $0x14] sm:$0x1]
        %v258 = vld [vmem:[%s249 + $0x18] sm:$0xf]
        %v259 = vld [vmem:[%s249 + $0x1c] sm:$0xf]
        %v260 = vld [vmem:[%s249 + $0x20] sm:$0x1]
        %v261 = vld [vmem:[%s249 + $0x24] sm:$0xf]
        %v262 = vld [vmem:[%s249 + $0x28] sm:$0xf]
        %v263 = vld [vmem:[%s249 + $0x2c] sm:$0x1]
        %v264 = vld [vmem:[%s249 + $0x30] sm:$0xf]
        %v265 = vld [vmem:[%s249 + $0x34] sm:$0xf]
        %v266 = vld [vmem:[%s249 + $0x38] sm:$0x1]
        %v267 = vld [vmem:[%s249 + $0x3c] sm:$0xf]
        %v268 = vld [vmem:[%s249 + $0x40] sm:$0xf]
        %v269 = vld [vmem:[%s249 + $0x44] sm:$0x1]
        %v270 = vld [vmem:[%s249 + $0x48] sm:$0xf]
        %v271 = vld [vmem:[%s249 + $0x4c] sm:$0xf]
        %v272 = vld [vmem:[%s249 + $0x50] sm:$0x1]
        %v273 = vld [vmem:[%s249 + $0x54] sm:$0xf]
        %v274 = vld [vmem:[%s249 + $0x58] sm:$0xf]
        %v275 = vld [vmem:[%s249 + $0x5c] sm:$0x1]
        %v276 = vld [vmem:[%s249 + $0x60] sm:$0xf]
        %v277 = vld [vmem:[%s249 + $0x64] sm:$0xf]
        %v278 = vld [vmem:[%s249 + $0x68] sm:$0x1]
        %v279 = vld [vmem:[%s249 + $0x6c] sm:$0xf]
        %v280 = vld [vmem:[%s249 + $0x70] sm:$0xf]
        %v281 = vld [vmem:[%s249 + $0x74] sm:$0x1]
        %v282 = vld [vmem:[%s249 + $0x78] sm:$0xf]
        %v283 = vld [vmem:[%s249 + $0x7c] sm:$0xf]
        %v284 = vld [vmem:[%s249 + $0x80] sm:$0x1]
        %v285 = vld [vmem:[%s249 + $0x84] sm:$0xf]
        %v286 = vld [vmem:[%s249 + $0x88] sm:$0xf]
        %v287 = vld [vmem:[%s249 + $0x8c] sm:$0x1]
        %v288 = vld [vmem:[%s249 + $0x90] sm:$0xf]
        %v289 = vld [vmem:[%s249 + $0x94] sm:$0xf]
        %v290 = vld [vmem:[%s249 + $0x98] sm:$0x1]
        %v291 = vld [vmem:[%s249 + $0x9c] sm:$0xf]
        %v292 = vld [vmem:[%s249 + $0xa0] sm:$0xf]
        %v293 = vld [vmem:[%s249 + $0xa4] sm:$0x1]
        %v294 = vld [vmem:[%s249 + $0xa8] sm:$0xf]
        %v295 = vld [vmem:[%s249 + $0xac] sm:$0xf]
        %v296 = vld [vmem:[%s249 + $0xb0] sm:$0x1]
        %v297 = vld [vmem:[%s249 + $0xb4] sm:$0xf]
        %v298 = vld [vmem:[%s249 + $0xb8] sm:$0xf]
        %v299 = vld [vmem:[%s249 + $0xbc] sm:$0x1]
        %v300 = vld [vmem:[%s249 + $0xc0] sm:$0xf]
        %v301 = vld [vmem:[%s249 + $0xc4] sm:$0xf]
        %v302 = vld [vmem:[%s249 + $0xc8] sm:$0x1]
        %v303 = vld [vmem:[%s249 + $0xcc] sm:$0xf]
        %v304 = vld [vmem:[%s249 + $0xd0] sm:$0xf]
        %v305 = vld [vmem:[%s249 + $0xd4] sm:$0x1]
        %v306 = vld [vmem:[%s1] sm:$0xf]
        %v307 = vld [vmem:[%s1 + $0x4] sm:$0xf]
        %v308 = vld [vmem:[%s1 + $0x8] sm:$0xf]
        %v309 = vld [vmem:[%s1 + $0xc] sm:$0xf]
        %v310 = vld [vmem:[%s1 + $0x10] sm:$0xf]
        %v311 = vld [vmem:[%s1 + $0x14] sm:$0xf]
        %v312 = vld [vmem:[%s1 + $0x18] sm:$0xf]
        %v313 = vld [vmem:[%s1 + $0x1c] sm:$0xf]
        %v314 = vld [vmem:[%s1 + $0x20] sm:$0xf]
        %v315 = vld [vmem:[%s1 + $0x24] sm:$0xf]
        %v316 = vld [vmem:[%s1 + $0x28] sm:$0xf]
        %v317 = vld [vmem:[%s1 + $0x2c] sm:$0xf]
        %v318 = vld [vmem:[%s1 + $0x30] sm:$0xf]
        %v319 = vld [vmem:[%s1 + $0x34] sm:$0xf]
        %v320 = vld [vmem:[%s1 + $0x38] sm:$0xf]
        %v321 = vld [vmem:[%s1 + $0x3c] sm:$0xf]
        %vm322 = vsmask.f32 3328
        %vm323 = vsmask.f32 7440
        %vm324 = vmor %vm322, %vm323
        %v326 = vshrl.u32 %v252, 16
        %v328 = vrot.slane %v326, 4
        %v329 = vshll.u32 %v252, 16
        %v331 = vrot.slane %v329, 5
        %v332 = vor.u32 %v328, %v331
        %v333 = vrot.slane %v332, 4
        %v335 = vshll.u32 %v253, 16
        %v337 = vrot.slane %v335, 5
        %v338 = vsel %vm324, %v333, %v337
        %v339 = vshrl.u32 %v253, 16
        %v341 = vrot.slane %v339, 4
        %v342 = vor.u32 %v341, %v337
        %v343 = vrot.slane %v342, 4
        %v345 = vshll.u32 %v254, 16
        %v347 = vrot.slane %v345, 5
        %v348 = vsel %vm324, %v343, %v347
        %v350 = vshrl.u32 %v255, 16
        %v352 = vrot.slane %v350, 4
        %v353 = vshll.u32 %v255, 16
        %v355 = vrot.slane %v353, 5
        %v356 = vor.u32 %v352, %v355
        %v357 = vrot.slane %v356, 4
        %v359 = vshll.u32 %v256, 16
        %v361 = vrot.slane %v359, 5
        %v362 = vsel %vm324, %v357, %v361
        %v363 = vshrl.u32 %v256, 16
        %v365 = vrot.slane %v363, 4
        %v366 = vor.u32 %v365, %v361
        %v367 = vrot.slane %v366, 4
        %v369 = vshll.u32 %v257, 16
        %v371 = vrot.slane %v369, 5
        %v372 = vsel %vm324, %v367, %v371
        %v374 = vshrl.u32 %v258, 16
        %v376 = vrot.slane %v374, 4
        %v377 = vshll.u32 %v258, 16
        %v379 = vrot.slane %v377, 5
        %v380 = vor.u32 %v376, %v379
        %v381 = vrot.slane %v380, 4
        %v383 = vshll.u32 %v259, 16
        %v385 = vrot.slane %v383, 5
        %v386 = vsel %vm324, %v381, %v385
        %v387 = vshrl.u32 %v259, 16
        %v389 = vrot.slane %v387, 4
        %v390 = vor.u32 %v389, %v385
        %v391 = vrot.slane %v390, 4
        %v393 = vshll.u32 %v260, 16
        %v395 = vrot.slane %v393, 5
        %v396 = vsel %vm324, %v391, %v395
        %v398 = vshrl.u32 %v261, 16
        %v400 = vrot.slane %v398, 4
        %v401 = vshll.u32 %v261, 16
        %v403 = vrot.slane %v401, 5
        %v404 = vor.u32 %v400, %v403
        %v405 = vrot.slane %v404, 4
        %v407 = vshll.u32 %v262, 16
        %v409 = vrot.slane %v407, 5
        %v410 = vsel %vm324, %v405, %v409
        %v411 = vshrl.u32 %v262, 16
        %v413 = vrot.slane %v411, 4
        %v414 = vor.u32 %v413, %v409
        %v415 = vrot.slane %v414, 4
        %v417 = vshll.u32 %v263, 16
        %v419 = vrot.slane %v417, 5
        %v420 = vsel %vm324, %v415, %v419
        %v422 = vshrl.u32 %v264, 16
        %v424 = vrot.slane %v422, 4
        %v425 = vshll.u32 %v264, 16
        %v427 = vrot.slane %v425, 5
        %v428 = vor.u32 %v424, %v427
        %v429 = vrot.slane %v428, 4
        %v431 = vshll.u32 %v265, 16
        %v433 = vrot.slane %v431, 5
        %v434 = vsel %vm324, %v429, %v433
        %v435 = vshrl.u32 %v265, 16
        %v437 = vrot.slane %v435, 4
        %v438 = vor.u32 %v437, %v433
        %v439 = vrot.slane %v438, 4
        %v441 = vshll.u32 %v266, 16
        %v443 = vrot.slane %v441, 5
        %v444 = vsel %vm324, %v439, %v443
        %v446 = vshrl.u32 %v267, 16
        %v448 = vrot.slane %v446, 4
        %v449 = vshll.u32 %v267, 16
        %v451 = vrot.slane %v449, 5
        %v452 = vor.u32 %v448, %v451
        %v453 = vrot.slane %v452, 4
        %v455 = vshll.u32 %v268, 16
        %v457 = vrot.slane %v455, 5
        %v458 = vsel %vm324, %v453, %v457
        %v459 = vshrl.u32 %v268, 16
        %v461 = vrot.slane %v459, 4
        %v462 = vor.u32 %v461, %v457
        %v463 = vrot.slane %v462, 4
        %v465 = vshll.u32 %v269, 16
        %v467 = vrot.slane %v465, 5
        %v468 = vsel %vm324, %v463, %v467
        %v470 = vshrl.u32 %v270, 16
        %v472 = vrot.slane %v470, 4
        %v473 = vshll.u32 %v270, 16
        %v475 = vrot.slane %v473, 5
        %v476 = vor.u32 %v472, %v475
        %v477 = vrot.slane %v476, 4
        %v479 = vshll.u32 %v271, 16
        %v481 = vrot.slane %v479, 5
        %v482 = vsel %vm324, %v477, %v481
        %v483 = vshrl.u32 %v271, 16
        %v485 = vrot.slane %v483, 4
        %v486 = vor.u32 %v485, %v481
        %v487 = vrot.slane %v486, 4
        %v489 = vshll.u32 %v272, 16
        %v491 = vrot.slane %v489, 5
        %v492 = vsel %vm324, %v487, %v491
        %v494 = vshrl.u32 %v273, 16
        %v496 = vrot.slane %v494, 4
        %v497 = vshll.u32 %v273, 16
        %v499 = vrot.slane %v497, 5
        %v500 = vor.u32 %v496, %v499
        %v501 = vrot.slane %v500, 4
        %v503 = vshll.u32 %v274, 16
        %v505 = vrot.slane %v503, 5
        %v506 = vsel %vm324, %v501, %v505
        %v507 = vshrl.u32 %v274, 16
        %v509 = vrot.slane %v507, 4
        %v510 = vor.u32 %v509, %v505
        %v511 = vrot.slane %v510, 4
        %v513 = vshll.u32 %v275, 16
        %v515 = vrot.slane %v513, 5
        %v516 = vsel %vm324, %v511, %v515
        %v518 = vshrl.u32 %v276, 16
        %v520 = vrot.slane %v518, 4
        %v521 = vshll.u32 %v276, 16
        %v523 = vrot.slane %v521, 5
        %v524 = vor.u32 %v520, %v523
        %v525 = vrot.slane %v524, 4
        %v527 = vshll.u32 %v277, 16
        %v529 = vrot.slane %v527, 5
        %v530 = vsel %vm324, %v525, %v529
        %v531 = vshrl.u32 %v277, 16
        %v533 = vrot.slane %v531, 4
        %v534 = vor.u32 %v533, %v529
        %v535 = vrot.slane %v534, 4
        %v537 = vshll.u32 %v278, 16
        %v539 = vrot.slane %v537, 5
        %v540 = vsel %vm324, %v535, %v539
        %v542 = vshrl.u32 %v279, 16
        %v544 = vrot.slane %v542, 4
        %v545 = vshll.u32 %v279, 16
        %v547 = vrot.slane %v545, 5
        %v548 = vor.u32 %v544, %v547
        %v549 = vrot.slane %v548, 4
        %v551 = vshll.u32 %v280, 16
        %v553 = vrot.slane %v551, 5
        %v554 = vsel %vm324, %v549, %v553
        %v555 = vshrl.u32 %v280, 16
        %v557 = vrot.slane %v555, 4
        %v558 = vor.u32 %v557, %v553
        %v559 = vrot.slane %v558, 4
        %v561 = vshll.u32 %v281, 16
        %v563 = vrot.slane %v561, 5
        %v564 = vsel %vm324, %v559, %v563
        %v566 = vshrl.u32 %v282, 16
        %v568 = vrot.slane %v566, 4
        %v569 = vshll.u32 %v282, 16
        %v571 = vrot.slane %v569, 5
        %v572 = vor.u32 %v568, %v571
        %v573 = vrot.slane %v572, 4
        %v575 = vshll.u32 %v283, 16
        %v577 = vrot.slane %v575, 5
        %v578 = vsel %vm324, %v573, %v577
        %v579 = vshrl.u32 %v283, 16
        %v581 = vrot.slane %v579, 4
        %v582 = vor.u32 %v581, %v577
        %v583 = vrot.slane %v582, 4
        %v585 = vshll.u32 %v284, 16
        %v587 = vrot.slane %v585, 5
        %v588 = vsel %vm324, %v583, %v587
        %v590 = vshrl.u32 %v285, 16
        %v592 = vrot.slane %v590, 4
        %v593 = vshll.u32 %v285, 16
        %v595 = vrot.slane %v593, 5
        %v596 = vor.u32 %v592, %v595
        %v597 = vrot.slane %v596, 4
        %v599 = vshll.u32 %v286, 16
        %v601 = vrot.slane %v599, 5
        %v602 = vsel %vm324, %v597, %v601
        %v603 = vshrl.u32 %v286, 16
        %v605 = vrot.slane %v603, 4
        %v606 = vor.u32 %v605, %v601
        %v607 = vrot.slane %v606, 4
        %v609 = vshll.u32 %v287, 16
        %v611 = vrot.slane %v609, 5
        %v612 = vsel %vm324, %v607, %v611
        %v614 = vshrl.u32 %v288, 16
        %v616 = vrot.slane %v614, 4
        %v617 = vshll.u32 %v288, 16
        %v619 = vrot.slane %v617, 5
        %v620 = vor.u32 %v616, %v619
        %v621 = vrot.slane %v620, 4
        %v623 = vshll.u32 %v289, 16
        %v625 = vrot.slane %v623, 5
        %v626 = vsel %vm324, %v621, %v625
        %v627 = vshrl.u32 %v289, 16
        %v629 = vrot.slane %v627, 4
        %v630 = vor.u32 %v629, %v625
        %v631 = vrot.slane %v630, 4
        %v633 = vshll.u32 %v290, 16
        %v635 = vrot.slane %v633, 5
        %v636 = vsel %vm324, %v631, %v635
        %v638 = vshrl.u32 %v291, 16
        %v640 = vrot.slane %v638, 4
        %v641 = vshll.u32 %v291, 16
        %v643 = vrot.slane %v641, 5
        %v644 = vor.u32 %v640, %v643
        %v645 = vrot.slane %v644, 4
        %v647 = vshll.u32 %v292, 16
        %v649 = vrot.slane %v647, 5
        %v650 = vsel %vm324, %v645, %v649
        %v651 = vshrl.u32 %v292, 16
        %v653 = vrot.slane %v651, 4
        %v654 = vor.u32 %v653, %v649
        %v655 = vrot.slane %v654, 4
        %v657 = vshll.u32 %v293, 16
        %v659 = vrot.slane %v657, 5
        %v660 = vsel %vm324, %v655, %v659
        %v662 = vshrl.u32 %v294, 16
        %v664 = vrot.slane %v662, 4
        %v665 = vshll.u32 %v294, 16
        %v667 = vrot.slane %v665, 5
        %v668 = vor.u32 %v664, %v667
        %v669 = vrot.slane %v668, 4
        %v671 = vshll.u32 %v295, 16
        %v673 = vrot.slane %v671, 5
        %v674 = vsel %vm324, %v669, %v673
        %v675 = vshrl.u32 %v295, 16
        %v677 = vrot.slane %v675, 4
        %v678 = vor.u32 %v677, %v673
        %v679 = vrot.slane %v678, 4
        %v681 = vshll.u32 %v296, 16
        %v683 = vrot.slane %v681, 5
        %v684 = vsel %vm324, %v679, %v683
        %v686 = vshrl.u32 %v297, 16
        %v688 = vrot.slane %v686, 4
        %v689 = vshll.u32 %v297, 16
        %v691 = vrot.slane %v689, 5
        %v692 = vor.u32 %v688, %v691
        %v693 = vrot.slane %v692, 4
        %v695 = vshll.u32 %v298, 16
        %v697 = vrot.slane %v695, 5
        %v698 = vsel %vm324, %v693, %v697
        %v699 = vshrl.u32 %v298, 16
        %v701 = vrot.slane %v699, 4
        %v702 = vor.u32 %v701, %v697
        %v703 = vrot.slane %v702, 4
        %v705 = vshll.u32 %v299, 16
        %v707 = vrot.slane %v705, 5
        %v708 = vsel %vm324, %v703, %v707
        %s709 = scalar_lea.vmem %s1, 64
        %v710 = vld [vmem:[%s709] sm:$0xf]
        %v711 = vld [vmem:[%s709 + $0x4] sm:$0xf]
        %v712 = vld [vmem:[%s709 + $0x8] sm:$0xf]
        %v713 = vld [vmem:[%s709 + $0xc] sm:$0xf]
        %v714 = vld [vmem:[%s709 + $0x10] sm:$0xf]
        %v715 = vld [vmem:[%s709 + $0x14] sm:$0xf]
        %v716 = vld [vmem:[%s709 + $0x18] sm:$0xf]
        %v717 = vld [vmem:[%s709 + $0x1c] sm:$0xf]
        %v718 = vld [vmem:[%s709 + $0x20] sm:$0xf]
        %v719 = vld [vmem:[%s709 + $0x24] sm:$0xf]
        %v720 = vld [vmem:[%s709 + $0x28] sm:$0xf]
        %v721 = vld [vmem:[%s709 + $0x2c] sm:$0xf]
        %v722 = vld [vmem:[%s709 + $0x30] sm:$0xf]
        %v723 = vld [vmem:[%s709 + $0x34] sm:$0xf]
        %v724 = vld [vmem:[%s709 + $0x38] sm:$0xf]
        %v725 = vld [vmem:[%s709 + $0x3c] sm:$0xf]
        %v726 = vunpack.c.l.b16 %v338
        %v727 = vunpack.c.l.b16 %v348
        %v728 = vunpack.c.l.b16 %v362
        %v729 = vunpack.c.l.b16 %v372
        %v730 = vunpack.c.l.b16 %v386
        %v731 = vunpack.c.l.b16 %v396
        %v732 = vunpack.c.l.b16 %v410
        %v733 = vunpack.c.l.b16 %v420
        %v734 = vunpack.c.l.b16 %v434
        %v735 = vunpack.c.l.b16 %v444
        %v736 = vunpack.c.l.b16 %v458
        %v737 = vunpack.c.l.b16 %v468
        %v738 = vunpack.c.l.b16 %v482
        %v739 = vunpack.c.l.b16 %v492
        %v740 = vunpack.c.l.b16 %v506
        %v741 = vunpack.c.l.b16 %v516
        %v742 = vunpack.c.l.b16 %v530
        %v743 = vunpack.c.l.b16 %v540
        %v744 = vunpack.c.l.b16 %v554
        %v745 = vunpack.c.l.b16 %v564
        %v746 = vunpack.c.l.b16 %v578
        %v747 = vunpack.c.l.b16 %v588
        %v748 = vunpack.c.l.b16 %v602
        %v749 = vunpack.c.l.b16 %v612
        %v750 = vunpack.c.l.b16 %v626
        %v751 = vunpack.c.l.b16 %v636
        %v752 = vunpack.c.l.b16 %v650
        %v753 = vunpack.c.l.b16 %v660
        %v754 = vunpack.c.l.b16 %v674
        %v755 = vunpack.c.l.b16 %v684
        %v756 = vunpack.c.l.b16 %v698
        %v757 = vunpack.c.l.b16 %v708
        %v758 = vpack.c.b16 %v727, %v726
        %v759 = vpack.c.b16 %v729, %v728
        %v760 = vpack.c.b16 %v731, %v730
        %v761 = vpack.c.b16 %v733, %v732
        %v762 = vpack.c.b16 %v735, %v734
        %v763 = vpack.c.b16 %v737, %v736
        %v764 = vpack.c.b16 %v739, %v738
        %v765 = vpack.c.b16 %v741, %v740
        %v766 = vpack.c.b16 %v743, %v742
        %v767 = vpack.c.b16 %v745, %v744
        %v768 = vpack.c.b16 %v747, %v746
        %v769 = vpack.c.b16 %v749, %v748
        %v770 = vpack.c.b16 %v751, %v750
        %v771 = vpack.c.b16 %v753, %v752
        %v772 = vpack.c.b16 %v755, %v754
        %v773 = vpack.c.b16 %v757, %v756
        %v806 = vunpack.c.l.b16 %v710
        %v807 = vunpack.c.l.b16 %v711
        %v808 = vunpack.c.l.b16 %v712
        %v809 = vunpack.c.l.b16 %v713
        %v810 = vunpack.c.l.b16 %v714
        %v811 = vunpack.c.l.b16 %v715
        %v812 = vunpack.c.l.b16 %v716
        %v813 = vunpack.c.l.b16 %v717
        %v814 = vunpack.c.l.b16 %v718
        %v815 = vunpack.c.l.b16 %v719
        %v816 = vunpack.c.l.b16 %v720
        %v817 = vunpack.c.l.b16 %v721
        %v818 = vunpack.c.l.b16 %v722
        %v819 = vunpack.c.l.b16 %v723
        %v820 = vunpack.c.l.b16 %v724
        %v821 = vunpack.c.l.b16 %v725
        %v822 = vpack.c.b16 %v807, %v806
        %v823 = vpack.c.b16 %v809, %v808
        %v824 = vpack.c.b16 %v811, %v810
        %v825 = vpack.c.b16 %v813, %v812
        %v826 = vpack.c.b16 %v815, %v814
        %v827 = vpack.c.b16 %v817, %v816
        %v828 = vpack.c.b16 %v819, %v818
        %v829 = vpack.c.b16 %v821, %v820
        %838 = vmatprep.subr.bf16.mxu0 0
        %839 = vmatpush1.bf16.msra.mxu0 %v822
        %840 = vmatprep.subr.bf16.mxu0 0
        %841 = vmatpush1.bf16.msra.mxu0 %v823
        %842 = vmatprep.subr.bf16.mxu0 0
        %843 = vmatpush1.bf16.msra.mxu0 %v824
        %844 = vmatprep.subr.bf16.mxu0 0
        %845 = vmatpush1.bf16.msra.mxu0 %v825
        %846 = vmatprep.subr.bf16.mxu0 0
        %847 = vmatpush1.bf16.msra.mxu0 %v826
        %848 = vmatprep.subr.bf16.mxu0 0
        %849 = vmatpush1.bf16.msra.mxu0 %v827
        %850 = vmatprep.subr.bf16.mxu0 0
        %851 = vmatpush1.bf16.msra.mxu0 %v828
        %852 = vmatprep.subr.bf16.mxu0 0
        %853 = vmatpush1.bf16.msra.mxu0 %v829
        %854 = vmatprep.subr.bf16.mxu0 0
        %855 = vmatpush1.bf16.msra.mxu0 0
        %856 = vmatprep.subr.bf16.mxu0 0
        %857 = vmatpush1.bf16.msra.mxu0 0
        %858 = vmatprep.subr.bf16.mxu0 0
        %859 = vmatpush1.bf16.msra.mxu0 0
        %860 = vmatprep.subr.bf16.mxu0 0
        %861 = vmatpush1.bf16.msra.mxu0 0
        %862 = vmatprep.subr.bf16.mxu0 0
        %863 = vmatpush1.bf16.msra.mxu0 0
        %864 = vmatprep.subr.bf16.mxu0 0
        %865 = vmatpush1.bf16.msra.mxu0 0
        %866 = vmatprep.subr.bf16.mxu0 0
        %867 = vmatpush1.bf16.msra.mxu0 0
        %868 = vmatprep.subr.bf16.mxu0 0
        %869 = vmatpush1.bf16.msra.mxu0 0
        %870 = vmatprep.mubr.bf16.mxu0 0
        %871 = vmatmul.mubr.bf16.gmra.mrb[0].mxu0 %v758
        %v872 = vpop.f32.mrb[0].mxu0
        %v873 = vadd.f32 0.0, %v872
        %v874 = vpop.f32.mrb[0].mxu0
        %v875 = vpop.f32.mrb[0].mxu0
        %v876 = vadd.f32 0.0, %v875
        %v877 = vpop.f32.mrb[0].mxu0
        %878 = vmatprep.mubr.bf16.mxu0 0
        %879 = vmatmul.mubr.bf16.gmra.mrb[0].mxu0 %v759
        %v880 = vpop.f32.mrb[0].mxu0
        %v881 = vadd.f32 0.0, %v880
        %v882 = vpop.f32.mrb[0].mxu0
        %v883 = vpop.f32.mrb[0].mxu0
        %v884 = vadd.f32 0.0, %v883
        %v885 = vpop.f32.mrb[0].mxu0
        %886 = vmatprep.mubr.bf16.mxu0 0
        %887 = vmatmul.mubr.bf16.gmra.mrb[0].mxu0 %v760
        %v888 = vpop.f32.mrb[0].mxu0
        %v889 = vadd.f32 0.0, %v888
        %v890 = vpop.f32.mrb[0].mxu0
        %v891 = vpop.f32.mrb[0].mxu0
        %v892 = vadd.f32 0.0, %v891
        %v893 = vpop.f32.mrb[0].mxu0
        %894 = vmatprep.mubr.bf16.mxu0 0
        %895 = vmatmul.mubr.bf16.gmra.mrb[0].mxu0 %v761
        %v896 = vpop.f32.mrb[0].mxu0
        %v897 = vadd.f32 0.0, %v896
        %v898 = vpop.f32.mrb[0].mxu0
        %v899 = vpop.f32.mrb[0].mxu0
        %v900 = vadd.f32 0.0, %v899
        %v901 = vpop.f32.mrb[0].mxu0
        %902 = vmatprep.mubr.bf16.mxu0 0
        %903 = vmatmul.mubr.bf16.gmra.mrb[0].mxu0 %v762
        %v904 = vpop.f32.mrb[0].mxu0
        %v905 = vadd.f32 0.0, %v904
        %v906 = vpop.f32.mrb[0].mxu0
        %v907 = vpop.f32.mrb[0].mxu0
        %v908 = vadd.f32 0.0, %v907
        %v909 = vpop.f32.mrb[0].mxu0
        %910 = vmatprep.mubr.bf16.mxu0 0
        %911 = vmatmul.mubr.bf16.gmra.mrb[0].mxu0 %v763
        %v912 = vpop.f32.mrb[0].mxu0
        %v913 = vadd.f32 0.0, %v912
        %v914 = vpop.f32.mrb[0].mxu0
        %v915 = vpop.f32.mrb[0].mxu0
        %v916 = vadd.f32 0.0, %v915
        %v917 = vpop.f32.mrb[0].mxu0
        %918 = vmatprep.mubr.bf16.mxu0 0
        %919 = vmatmul.mubr.bf16.gmra.mrb[0].mxu0 %v764
        %v920 = vpop.f32.mrb[0].mxu0
        %v921 = vadd.f32 0.0, %v920
        %v922 = vpop.f32.mrb[0].mxu0
        %v923 = vpop.f32.mrb[0].mxu0
        %v924 = vadd.f32 0.0, %v923
        %v925 = vpop.f32.mrb[0].mxu0
        %926 = vmatprep.mubr.bf16.mxu0 0
        %927 = vmatmul.mubr.bf16.gmra.mrb[0].mxu0 %v765
        %v928 = vpop.f32.mrb[0].mxu0
        %v929 = vadd.f32 0.0, %v928
        %v930 = vpop.f32.mrb[0].mxu0
        %v931 = vpop.f32.mrb[0].mxu0
        %v932 = vadd.f32 0.0, %v931
        %v933 = vpop.f32.mrb[0].mxu0
        %934 = vmatprep.mubr.bf16.mxu0 0
        %935 = vmatmul.mubr.bf16.gmra.mrb[0].mxu0 %v766
        %v936 = vpop.f32.mrb[0].mxu0
        %v937 = vadd.f32 0.0, %v936
        %v938 = vpop.f32.mrb[0].mxu0
        %v939 = vpop.f32.mrb[0].mxu0
        %v940 = vadd.f32 0.0, %v939
        %v941 = vpop.f32.mrb[0].mxu0
        %942 = vmatprep.mubr.bf16.mxu0 0
        %943 = vmatmul.mubr.bf16.gmra.mrb[0].mxu0 %v767
        %v944 = vpop.f32.mrb[0].mxu0
        %v945 = vadd.f32 0.0, %v944
        %v946 = vpop.f32.mrb[0].mxu0
        %v947 = vpop.f32.mrb[0].mxu0
        %v948 = vadd.f32 0.0, %v947
        %v949 = vpop.f32.mrb[0].mxu0
        %950 = vmatprep.mubr.bf16.mxu0 0
        %951 = vmatmul.mubr.bf16.gmra.mrb[0].mxu0 %v768
        %v952 = vpop.f32.mrb[0].mxu0
        %v953 = vadd.f32 0.0, %v952
        %v954 = vpop.f32.mrb[0].mxu0
        %v955 = vpop.f32.mrb[0].mxu0
        %v956 = vadd.f32 0.0, %v955
        %v957 = vpop.f32.mrb[0].mxu0
        %958 = vmatprep.mubr.bf16.mxu0 0
        %959 = vmatmul.mubr.bf16.gmra.mrb[0].mxu0 %v769
        %v960 = vpop.f32.mrb[0].mxu0
        %v961 = vadd.f32 0.0, %v960
        %v962 = vpop.f32.mrb[0].mxu0
        %v963 = vpop.f32.mrb[0].mxu0
        %v964 = vadd.f32 0.0, %v963
        %v965 = vpop.f32.mrb[0].mxu0
        %966 = vmatprep.mubr.bf16.mxu0 0
        %967 = vmatmul.mubr.bf16.gmra.mrb[0].mxu0 %v770
        %v968 = vpop.f32.mrb[0].mxu0
        %v969 = vadd.f32 0.0, %v968
        %v970 = vpop.f32.mrb[0].mxu0
        %v971 = vpop.f32.mrb[0].mxu0
        %v972 = vadd.f32 0.0, %v971
        %v973 = vpop.f32.mrb[0].mxu0
        %974 = vmatprep.mubr.bf16.mxu0 0
        %975 = vmatmul.mubr.bf16.gmra.mrb[0].mxu0 %v771
        %v976 = vpop.f32.mrb[0].mxu0
        %v977 = vadd.f32 0.0, %v976
        %v978 = vpop.f32.mrb[0].mxu0
        %v979 = vpop.f32.mrb[0].mxu0
        %v980 = vadd.f32 0.0, %v979
        %v981 = vpop.f32.mrb[0].mxu0
        %982 = vmatprep.mubr.bf16.mxu0 0
        %983 = vmatmul.mubr.bf16.gmra.mrb[0].mxu0 %v772
        %v984 = vpop.f32.mrb[0].mxu0
        %v985 = vadd.f32 0.0, %v984
        %v986 = vpop.f32.mrb[0].mxu0
        %v987 = vpop.f32.mrb[0].mxu0
        %v988 = vadd.f32 0.0, %v987
        %v989 = vpop.f32.mrb[0].mxu0
        %990 = vmatprep.mubr.bf16.mxu0 0
        %991 = vmatmul.mubr.bf16.gmra.mrb[0].mxu0 %v773
        %v992 = vpop.f32.mrb[0].mxu0
        %v993 = vadd.f32 0.0, %v992
        %v994 = vpop.f32.mrb[0].mxu0
        %v995 = vpop.f32.mrb[0].mxu0
        %v996 = vadd.f32 0.0, %v995
        %v997 = vpop.f32.mrb[0].mxu0
        %998 = vdwg.mxu0
        %v1031 = vunpack.c.l.b16 %v252
        %v1032 = vunpack.c.l.b16 %v253
        %v1033 = vunpack.c.l.b16 %v255
        %v1034 = vunpack.c.l.b16 %v256
        %v1035 = vunpack.c.l.b16 %v258
        %v1036 = vunpack.c.l.b16 %v259
        %v1037 = vunpack.c.l.b16 %v261
        %v1038 = vunpack.c.l.b16 %v262
        %v1039 = vunpack.c.l.b16 %v264
        %v1040 = vunpack.c.l.b16 %v265
        %v1041 = vunpack.c.l.b16 %v267
        %v1042 = vunpack.c.l.b16 %v268
        %v1043 = vunpack.c.l.b16 %v270
        %v1044 = vunpack.c.l.b16 %v271
        %v1045 = vunpack.c.l.b16 %v273
        %v1046 = vunpack.c.l.b16 %v274
        %v1047 = vunpack.c.l.b16 %v276
        %v1048 = vunpack.c.l.b16 %v277
        %v1049 = vunpack.c.l.b16 %v279
        %v1050 = vunpack.c.l.b16 %v280
        %v1051 = vunpack.c.l.b16 %v282
        %v1052 = vunpack.c.l.b16 %v283
        %v1053 = vunpack.c.l.b16 %v285
        %v1054 = vunpack.c.l.b16 %v286
        %v1055 = vunpack.c.l.b16 %v288
        %v1056 = vunpack.c.l.b16 %v289
        %v1057 = vunpack.c.l.b16 %v291
        %v1058 = vunpack.c.l.b16 %v292
        %v1059 = vunpack.c.l.b16 %v294
        %v1060 = vunpack.c.l.b16 %v295
        %v1061 = vunpack.c.l.b16 %v297
        %v1062 = vunpack.c.l.b16 %v298
        %v1063 = vpack.c.b16 %v1032, %v1031
        %v1064 = vpack.c.b16 %v1034, %v1033
        %v1065 = vpack.c.b16 %v1036, %v1035
        %v1066 = vpack.c.b16 %v1038, %v1037
        %v1067 = vpack.c.b16 %v1040, %v1039
        %v1068 = vpack.c.b16 %v1042, %v1041
        %v1069 = vpack.c.b16 %v1044, %v1043
        %v1070 = vpack.c.b16 %v1046, %v1045
        %v1071 = vpack.c.b16 %v1048, %v1047
        %v1072 = vpack.c.b16 %v1050, %v1049
        %v1073 = vpack.c.b16 %v1052, %v1051
        %v1074 = vpack.c.b16 %v1054, %v1053
        %v1075 = vpack.c.b16 %v1056, %v1055
        %v1076 = vpack.c.b16 %v1058, %v1057
        %v1077 = vpack.c.b16 %v1060, %v1059
        %v1078 = vpack.c.b16 %v1062, %v1061
        %v1111 = vunpack.c.l.b16 %v306
        %v1112 = vunpack.c.l.b16 %v307
        %v1113 = vunpack.c.l.b16 %v308
        %v1114 = vunpack.c.l.b16 %v309
        %v1115 = vunpack.c.l.b16 %v310
        %v1116 = vunpack.c.l.b16 %v311
        %v1117 = vunpack.c.l.b16 %v312
        %v1118 = vunpack.c.l.b16 %v313
        %v1119 = vunpack.c.l.b16 %v314
        %v1120 = vunpack.c.l.b16 %v315
        %v1121 = vunpack.c.l.b16 %v316
        %v1122 = vunpack.c.l.b16 %v317
        %v1123 = vunpack.c.l.b16 %v318
        %v1124 = vunpack.c.l.b16 %v319
        %v1125 = vunpack.c.l.b16 %v320
        %v1126 = vunpack.c.l.b16 %v321
        %v1127 = vpack.c.b16 %v1112, %v1111
        %v1128 = vpack.c.b16 %v1114, %v1113
        %v1129 = vpack.c.b16 %v1116, %v1115
        %v1130 = vpack.c.b16 %v1118, %v1117
        %v1131 = vpack.c.b16 %v1120, %v1119
        %v1132 = vpack.c.b16 %v1122, %v1121
        %v1133 = vpack.c.b16 %v1124, %v1123
        %v1134 = vpack.c.b16 %v1126, %v1125
        %1143 = vmatprep.subr.bf16.mxu0 0
        %1144 = vmatpush1.bf16.msra.mxu0 %v1127
        %1145 = vmatprep.subr.bf16.mxu0 0
        %1146 = vmatpush1.bf16.msra.mxu0 %v1128
        %1147 = vmatprep.subr.bf16.mxu0 0
        %1148 = vmatpush1.bf16.msra.mxu0 %v1129
        %1149 = vmatprep.subr.bf16.mxu0 0
        %1150 = vmatpush1.bf16.msra.mxu0 %v1130
        %1151 = vmatprep.subr.bf16.mxu0 0
        %1152 = vmatpush1.bf16.msra.mxu0 %v1131
        %1153 = vmatprep.subr.bf16.mxu0 0
        %1154 = vmatpush1.bf16.msra.mxu0 %v1132
        %1155 = vmatprep.subr.bf16.mxu0 0
        %1156 = vmatpush1.bf16.msra.mxu0 %v1133
        %1157 = vmatprep.subr.bf16.mxu0 0
        %1158 = vmatpush1.bf16.msra.mxu0 %v1134
        %1159 = vmatprep.subr.bf16.mxu0 0
        %1160 = vmatpush1.bf16.msra.mxu0 0
        %1161 = vmatprep.subr.bf16.mxu0 0
        %1162 = vmatpush1.bf16.msra.mxu0 0
        %1163 = vmatprep.subr.bf16.mxu0 0
        %1164 = vmatpush1.bf16.msra.mxu0 0
        %1165 = vmatprep.subr.bf16.mxu0 0
        %1166 = vmatpush1.bf16.msra.mxu0 0
        %1167 = vmatprep.subr.bf16.mxu0 0
        %1168 = vmatpush1.bf16.msra.mxu0 0
        %1169 = vmatprep.subr.bf16.mxu0 0
        %1170 = vmatpush1.bf16.msra.mxu0 0
        %1171 = vmatprep.subr.bf16.mxu0 0
        %1172 = vmatpush1.bf16.msra.mxu0 0
        %1173 = vmatprep.subr.bf16.mxu0 0
        %1174 = vmatpush1.bf16.msra.mxu0 0
        %1175 = vmatprep.mubr.bf16.mxu0 0
        %1176 = vmatmul.mubr.bf16.gmra.mrb[0].mxu0 %v1063
        %v1177 = vpop.f32.mrb[0].mxu0
        %v1178 = vadd.f32 %v873, %v1177
        %v1179 = vpop.f32.mrb[0].mxu0
        %v1180 = vpop.f32.mrb[0].mxu0
        %v1181 = vadd.f32 %v876, %v1180
        %v1182 = vpop.f32.mrb[0].mxu0
        %1183 = vmatprep.mubr.bf16.mxu0 0
        %1184 = vmatmul.mubr.bf16.gmra.mrb[0].mxu0 %v1064
        %v1185 = vpop.f32.mrb[0].mxu0
        %v1186 = vadd.f32 %v881, %v1185
        %v1187 = vpop.f32.mrb[0].mxu0
        %v1188 = vpop.f32.mrb[0].mxu0
        %v1189 = vadd.f32 %v884, %v1188
        %v1190 = vpop.f32.mrb[0].mxu0
        %1191 = vmatprep.mubr.bf16.mxu0 0
        %1192 = vmatmul.mubr.bf16.gmra.mrb[0].mxu0 %v1065
        %v1193 = vpop.f32.mrb[0].mxu0
        %v1194 = vadd.f32 %v889, %v1193
        %v1195 = vpop.f32.mrb[0].mxu0
        %v1196 = vpop.f32.mrb[0].mxu0
        %v1197 = vadd.f32 %v892, %v1196
        %v1198 = vpop.f32.mrb[0].mxu0
        %1199 = vmatprep.mubr.bf16.mxu0 0
        %1200 = vmatmul.mubr.bf16.gmra.mrb[0].mxu0 %v1066
        %v1201 = vpop.f32.mrb[0].mxu0
        %v1202 = vadd.f32 %v897, %v1201
        %v1203 = vpop.f32.mrb[0].mxu0
        %v1204 = vpop.f32.mrb[0].mxu0
        %v1205 = vadd.f32 %v900, %v1204
        %v1206 = vpop.f32.mrb[0].mxu0
        %1207 = vmatprep.mubr.bf16.mxu0 0
        %1208 = vmatmul.mubr.bf16.gmra.mrb[0].mxu0 %v1067
        %v1209 = vpop.f32.mrb[0].mxu0
        %v1210 = vadd.f32 %v905, %v1209
        %v1211 = vpop.f32.mrb[0].mxu0
        %v1212 = vpop.f32.mrb[0].mxu0
        %v1213 = vadd.f32 %v908, %v1212
        %v1214 = vpop.f32.mrb[0].mxu0
        %1215 = vmatprep.mubr.bf16.mxu0 0
        %1216 = vmatmul.mubr.bf16.gmra.mrb[0].mxu0 %v1068
        %v1217 = vpop.f32.mrb[0].mxu0
        %v1218 = vadd.f32 %v913, %v1217
        %v1219 = vpop.f32.mrb[0].mxu0
        %v1220 = vpop.f32.mrb[0].mxu0
        %v1221 = vadd.f32 %v916, %v1220
        %v1222 = vpop.f32.mrb[0].mxu0
        %1223 = vmatprep.mubr.bf16.mxu0 0
        %1224 = vmatmul.mubr.bf16.gmra.mrb[0].mxu0 %v1069
        %v1225 = vpop.f32.mrb[0].mxu0
        %v1226 = vadd.f32 %v921, %v1225
        %v1227 = vpop.f32.mrb[0].mxu0
        %v1228 = vpop.f32.mrb[0].mxu0
        %v1229 = vadd.f32 %v924, %v1228
        %v1230 = vpop.f32.mrb[0].mxu0
        %1231 = vmatprep.mubr.bf16.mxu0 0
        %1232 = vmatmul.mubr.bf16.gmra.mrb[0].mxu0 %v1070
        %v1233 = vpop.f32.mrb[0].mxu0
        %v1234 = vadd.f32 %v929, %v1233
        %v1235 = vpop.f32.mrb[0].mxu0
        %v1236 = vpop.f32.mrb[0].mxu0
        %v1237 = vadd.f32 %v932, %v1236
        %v1238 = vpop.f32.mrb[0].mxu0
        %1239 = vmatprep.mubr.bf16.mxu0 0
        %1240 = vmatmul.mubr.bf16.gmra.mrb[0].mxu0 %v1071
        %v1241 = vpop.f32.mrb[0].mxu0
        %v1242 = vadd.f32 %v937, %v1241
        %v1243 = vpop.f32.mrb[0].mxu0
        %v1244 = vpop.f32.mrb[0].mxu0
        %v1245 = vadd.f32 %v940, %v1244
        %v1246 = vpop.f32.mrb[0].mxu0
        %1247 = vmatprep.mubr.bf16.mxu0 0
        %1248 = vmatmul.mubr.bf16.gmra.mrb[0].mxu0 %v1072
        %v1249 = vpop.f32.mrb[0].mxu0
        %v1250 = vadd.f32 %v945, %v1249
        %v1251 = vpop.f32.mrb[0].mxu0
        %v1252 = vpop.f32.mrb[0].mxu0
        %v1253 = vadd.f32 %v948, %v1252
        %v1254 = vpop.f32.mrb[0].mxu0
        %1255 = vmatprep.mubr.bf16.mxu0 0
        %1256 = vmatmul.mubr.bf16.gmra.mrb[0].mxu0 %v1073
        %v1257 = vpop.f32.mrb[0].mxu0
        %v1258 = vadd.f32 %v953, %v1257
        %v1259 = vpop.f32.mrb[0].mxu0
        %v1260 = vpop.f32.mrb[0].mxu0
        %v1261 = vadd.f32 %v956, %v1260
        %v1262 = vpop.f32.mrb[0].mxu0
        %1263 = vmatprep.mubr.bf16.mxu0 0
        %1264 = vmatmul.mubr.bf16.gmra.mrb[0].mxu0 %v1074
        %v1265 = vpop.f32.mrb[0].mxu0
        %v1266 = vadd.f32 %v961, %v1265
        %v1267 = vpop.f32.mrb[0].mxu0
        %v1268 = vpop.f32.mrb[0].mxu0
        %v1269 = vadd.f32 %v964, %v1268
        %v1270 = vpop.f32.mrb[0].mxu0
        %1271 = vmatprep.mubr.bf16.mxu0 0
        %1272 = vmatmul.mubr.bf16.gmra.mrb[0].mxu0 %v1075
        %v1273 = vpop.f32.mrb[0].mxu0
        %v1274 = vadd.f32 %v969, %v1273
        %v1275 = vpop.f32.mrb[0].mxu0
        %v1276 = vpop.f32.mrb[0].mxu0
        %v1277 = vadd.f32 %v972, %v1276
        %v1278 = vpop.f32.mrb[0].mxu0
        %1279 = vmatprep.mubr.bf16.mxu0 0
        %1280 = vmatmul.mubr.bf16.gmra.mrb[0].mxu0 %v1076
        %v1281 = vpop.f32.mrb[0].mxu0
        %v1282 = vadd.f32 %v977, %v1281
        %v1283 = vpop.f32.mrb[0].mxu0
        %v1284 = vpop.f32.mrb[0].mxu0
        %v1285 = vadd.f32 %v980, %v1284
        %v1286 = vpop.f32.mrb[0].mxu0
        %1287 = vmatprep.mubr.bf16.mxu0 0
        %1288 = vmatmul.mubr.bf16.gmra.mrb[0].mxu0 %v1077
        %v1289 = vpop.f32.mrb[0].mxu0
        %v1290 = vadd.f32 %v985, %v1289
        %v1291 = vpop.f32.mrb[0].mxu0
        %v1292 = vpop.f32.mrb[0].mxu0
        %v1293 = vadd.f32 %v988, %v1292
        %v1294 = vpop.f32.mrb[0].mxu0
        %1295 = vmatprep.mubr.bf16.mxu0 0
        %1296 = vmatmul.mubr.bf16.gmra.mrb[0].mxu0 %v1078
        %v1297 = vpop.f32.mrb[0].mxu0
        %v1298 = vadd.f32 %v993, %v1297
        %v1299 = vpop.f32.mrb[0].mxu0
        %v1300 = vpop.f32.mrb[0].mxu0
        %v1301 = vadd.f32 %v996, %v1300
        %v1302 = vpop.f32.mrb[0].mxu0
        %1303 = vdwg.mxu0
        %vm1320 = vcmask 1042432
        %vm1321 = vcmask 1046532
        %vm1322 = vmor %vm1320, %vm1321
        %v1323 = vrot.slane %v252, 5
        %v1324 = vrot.slane %v1323, 4
        %v1325 = vrot.slane %v253, 5
        %v1326 = vsel %vm1322, %v1324, %v1325
        %v1327 = vrot.slane %v1325, 4
        %v1328 = vrot.slane %v254, 5
        %v1329 = vsel %vm1322, %v1327, %v1328
        %v1330 = vrot.slane %v255, 5
        %v1331 = vrot.slane %v1330, 4
        %v1332 = vrot.slane %v256, 5
        %v1333 = vsel %vm1322, %v1331, %v1332
        %v1334 = vrot.slane %v1332, 4
        %v1335 = vrot.slane %v257, 5
        %v1336 = vsel %vm1322, %v1334, %v1335
        %v1337 = vrot.slane %v258, 5
        %v1338 = vrot.slane %v1337, 4
        %v1339 = vrot.slane %v259, 5
        %v1340 = vsel %vm1322, %v1338, %v1339
        %v1341 = vrot.slane %v1339, 4
        %v1342 = vrot.slane %v260, 5
        %v1343 = vsel %vm1322, %v1341, %v1342
        %v1344 = vrot.slane %v261, 5
        %v1345 = vrot.slane %v1344, 4
        %v1346 = vrot.slane %v262, 5
        %v1347 = vsel %vm1322, %v1345, %v1346
        %v1348 = vrot.slane %v1346, 4
        %v1349 = vrot.slane %v263, 5
        %v1350 = vsel %vm1322, %v1348, %v1349
        %v1351 = vrot.slane %v264, 5
        %v1352 = vrot.slane %v1351, 4
        %v1353 = vrot.slane %v265, 5
        %v1354 = vsel %vm1322, %v1352, %v1353
        %v1355 = vrot.slane %v1353, 4
        %v1356 = vrot.slane %v266, 5
        %v1357 = vsel %vm1322, %v1355, %v1356
        %v1358 = vrot.slane %v267, 5
        %v1359 = vrot.slane %v1358, 4
        %v1360 = vrot.slane %v268, 5
        %v1361 = vsel %vm1322, %v1359, %v1360
        %v1362 = vrot.slane %v1360, 4
        %v1363 = vrot.slane %v269, 5
        %v1364 = vsel %vm1322, %v1362, %v1363
        %v1365 = vrot.slane %v270, 5
        %v1366 = vrot.slane %v1365, 4
        %v1367 = vrot.slane %v271, 5
        %v1368 = vsel %vm1322, %v1366, %v1367
        %v1369 = vrot.slane %v1367, 4
        %v1370 = vrot.slane %v272, 5
        %v1371 = vsel %vm1322, %v1369, %v1370
        %v1372 = vrot.slane %v273, 5
        %v1373 = vrot.slane %v1372, 4
        %v1374 = vrot.slane %v274, 5
        %v1375 = vsel %vm1322, %v1373, %v1374
        %v1376 = vrot.slane %v1374, 4
        %v1377 = vrot.slane %v275, 5
        %v1378 = vsel %vm1322, %v1376, %v1377
        %v1379 = vrot.slane %v276, 5
        %v1380 = vrot.slane %v1379, 4
        %v1381 = vrot.slane %v277, 5
        %v1382 = vsel %vm1322, %v1380, %v1381
        %v1383 = vrot.slane %v1381, 4
        %v1384 = vrot.slane %v278, 5
        %v1385 = vsel %vm1322, %v1383, %v1384
        %v1386 = vrot.slane %v279, 5
        %v1387 = vrot.slane %v1386, 4
        %v1388 = vrot.slane %v280, 5
        %v1389 = vsel %vm1322, %v1387, %v1388
        %v1390 = vrot.slane %v1388, 4
        %v1391 = vrot.slane %v281, 5
        %v1392 = vsel %vm1322, %v1390, %v1391
        %v1393 = vrot.slane %v282, 5
        %v1394 = vrot.slane %v1393, 4
        %v1395 = vrot.slane %v283, 5
        %v1396 = vsel %vm1322, %v1394, %v1395
        %v1397 = vrot.slane %v1395, 4
        %v1398 = vrot.slane %v284, 5
        %v1399 = vsel %vm1322, %v1397, %v1398
        %v1400 = vrot.slane %v285, 5
        %v1401 = vrot.slane %v1400, 4
        %v1402 = vrot.slane %v286, 5
        %v1403 = vsel %vm1322, %v1401, %v1402
        %v1404 = vrot.slane %v1402, 4
        %v1405 = vrot.slane %v287, 5
        %v1406 = vsel %vm1322, %v1404, %v1405
        %v1407 = vrot.slane %v288, 5
        %v1408 = vrot.slane %v1407, 4
        %v1409 = vrot.slane %v289, 5
        %v1410 = vsel %vm1322, %v1408, %v1409
        %v1411 = vrot.slane %v1409, 4
        %v1412 = vrot.slane %v290, 5
        %v1413 = vsel %vm1322, %v1411, %v1412
        %v1414 = vrot.slane %v291, 5
        %v1415 = vrot.slane %v1414, 4
        %v1416 = vrot.slane %v292, 5
        %v1417 = vsel %vm1322, %v1415, %v1416
        %v1418 = vrot.slane %v1416, 4
        %v1419 = vrot.slane %v293, 5
        %v1420 = vsel %vm1322, %v1418, %v1419
        %v1421 = vrot.slane %v294, 5
        %v1422 = vrot.slane %v1421, 4
        %v1423 = vrot.slane %v295, 5
        %v1424 = vsel %vm1322, %v1422, %v1423
        %v1425 = vrot.slane %v1423, 4
        %v1426 = vrot.slane %v296, 5
        %v1427 = vsel %vm1322, %v1425, %v1426
        %v1428 = vrot.slane %v297, 5
        %v1429 = vrot.slane %v1428, 4
        %v1430 = vrot.slane %v298, 5
        %v1431 = vsel %vm1322, %v1429, %v1430
        %v1432 = vrot.slane %v1430, 4
        %v1433 = vrot.slane %v299, 5
        %v1434 = vsel %vm1322, %v1432, %v1433
        %s1435 = scalar_lea.vmem %s1, 128
        %v1436 = vld [vmem:[%s1435] sm:$0xf]
        %v1437 = vld [vmem:[%s1435 + $0x4] sm:$0xf]
        %v1438 = vld [vmem:[%s1435 + $0x8] sm:$0xf]
        %v1439 = vld [vmem:[%s1435 + $0xc] sm:$0xf]
        %v1440 = vld [vmem:[%s1435 + $0x10] sm:$0xf]
        %v1441 = vld [vmem:[%s1435 + $0x14] sm:$0xf]
        %v1442 = vld [vmem:[%s1435 + $0x18] sm:$0xf]
        %v1443 = vld [vmem:[%s1435 + $0x1c] sm:$0xf]
        %v1444 = vld [vmem:[%s1435 + $0x20] sm:$0xf]
        %v1445 = vld [vmem:[%s1435 + $0x24] sm:$0xf]
        %v1446 = vld [vmem:[%s1435 + $0x28] sm:$0xf]
        %v1447 = vld [vmem:[%s1435 + $0x2c] sm:$0xf]
        %v1448 = vld [vmem:[%s1435 + $0x30] sm:$0xf]
        %v1449 = vld [vmem:[%s1435 + $0x34] sm:$0xf]
        %v1450 = vld [vmem:[%s1435 + $0x38] sm:$0xf]
        %v1451 = vld [vmem:[%s1435 + $0x3c] sm:$0xf]
        %v1452 = vunpack.c.l.b16 %v1326
        %v1453 = vunpack.c.l.b16 %v1329
        %v1454 = vunpack.c.l.b16 %v1333
        %v1455 = vunpack.c.l.b16 %v1336
        %v1456 = vunpack.c.l.b16 %v1340
        %v1457 = vunpack.c.l.b16 %v1343
        %v1458 = vunpack.c.l.b16 %v1347
        %v1459 = vunpack.c.l.b16 %v1350
        %v1460 = vunpack.c.l.b16 %v1354
        %v1461 = vunpack.c.l.b16 %v1357
        %v1462 = vunpack.c.l.b16 %v1361
        %v1463 = vunpack.c.l.b16 %v1364
        %v1464 = vunpack.c.l.b16 %v1368
        %v1465 = vunpack.c.l.b16 %v1371
        %v1466 = vunpack.c.l.b16 %v1375
        %v1467 = vunpack.c.l.b16 %v1378
        %v1468 = vunpack.c.l.b16 %v1382
        %v1469 = vunpack.c.l.b16 %v1385
        %v1470 = vunpack.c.l.b16 %v1389
        %v1471 = vunpack.c.l.b16 %v1392
        %v1472 = vunpack.c.l.b16 %v1396
        %v1473 = vunpack.c.l.b16 %v1399
        %v1474 = vunpack.c.l.b16 %v1403
        %v1475 = vunpack.c.l.b16 %v1406
        %v1476 = vunpack.c.l.b16 %v1410
        %v1477 = vunpack.c.l.b16 %v1413
        %v1478 = vunpack.c.l.b16 %v1417
        %v1479 = vunpack.c.l.b16 %v1420
        %v1480 = vunpack.c.l.b16 %v1424
        %v1481 = vunpack.c.l.b16 %v1427
        %v1482 = vunpack.c.l.b16 %v1431
        %v1483 = vunpack.c.l.b16 %v1434
        %v1484 = vpack.c.b16 %v1453, %v1452
        %v1485 = vpack.c.b16 %v1455, %v1454
        %v1486 = vpack.c.b16 %v1457, %v1456
        %v1487 = vpack.c.b16 %v1459, %v1458
        %v1488 = vpack.c.b16 %v1461, %v1460
        %v1489 = vpack.c.b16 %v1463, %v1462
        %v1490 = vpack.c.b16 %v1465, %v1464
        %v1491 = vpack.c.b16 %v1467, %v1466
        %v1492 = vpack.c.b16 %v1469, %v1468
        %v1493 = vpack.c.b16 %v1471, %v1470
        %v1494 = vpack.c.b16 %v1473, %v1472
        %v1495 = vpack.c.b16 %v1475, %v1474
        %v1496 = vpack.c.b16 %v1477, %v1476
        %v1497 = vpack.c.b16 %v1479, %v1478
        %v1498 = vpack.c.b16 %v1481, %v1480
        %v1499 = vpack.c.b16 %v1483, %v1482
        %v1532 = vunpack.c.l.b16 %v1436
        %v1533 = vunpack.c.l.b16 %v1437
        %v1534 = vunpack.c.l.b16 %v1438
        %v1535 = vunpack.c.l.b16 %v1439
        %v1536 = vunpack.c.l.b16 %v1440
        %v1537 = vunpack.c.l.b16 %v1441
        %v1538 = vunpack.c.l.b16 %v1442
        %v1539 = vunpack.c.l.b16 %v1443
        %v1540 = vunpack.c.l.b16 %v1444
        %v1541 = vunpack.c.l.b16 %v1445
        %v1542 = vunpack.c.l.b16 %v1446
        %v1543 = vunpack.c.l.b16 %v1447
        %v1544 = vunpack.c.l.b16 %v1448
        %v1545 = vunpack.c.l.b16 %v1449
        %v1546 = vunpack.c.l.b16 %v1450
        %v1547 = vunpack.c.l.b16 %v1451
        %v1548 = vpack.c.b16 %v1533, %v1532
        %v1549 = vpack.c.b16 %v1535, %v1534
        %v1550 = vpack.c.b16 %v1537, %v1536
        %v1551 = vpack.c.b16 %v1539, %v1538
        %v1552 = vpack.c.b16 %v1541, %v1540
        %v1553 = vpack.c.b16 %v1543, %v1542
        %v1554 = vpack.c.b16 %v1545, %v1544
        %v1555 = vpack.c.b16 %v1547, %v1546
        %1564 = vmatprep.subr.bf16.mxu0 0
        %1565 = vmatpush1.bf16.msra.mxu0 %v1548
        %1566 = vmatprep.subr.bf16.mxu0 0
        %1567 = vmatpush1.bf16.msra.mxu0 %v1549
        %1568 = vmatprep.subr.bf16.mxu0 0
        %1569 = vmatpush1.bf16.msra.mxu0 %v1550
        %1570 = vmatprep.subr.bf16.mxu0 0
        %1571 = vmatpush1.bf16.msra.mxu0 %v1551
        %1572 = vmatprep.subr.bf16.mxu0 0
        %1573 = vmatpush1.bf16.msra.mxu0 %v1552
        %1574 = vmatprep.subr.bf16.mxu0 0
        %1575 = vmatpush1.bf16.msra.mxu0 %v1553
        %1576 = vmatprep.subr.bf16.mxu0 0
        %1577 = vmatpush1.bf16.msra.mxu0 %v1554
        %1578 = vmatprep.subr.bf16.mxu0 0
        %1579 = vmatpush1.bf16.msra.mxu0 %v1555
        %1580 = vmatprep.subr.bf16.mxu0 0
        %1581 = vmatpush1.bf16.msra.mxu0 0
        %1582 = vmatprep.subr.bf16.mxu0 0
        %1583 = vmatpush1.bf16.msra.mxu0 0
        %1584 = vmatprep.subr.bf16.mxu0 0
        %1585 = vmatpush1.bf16.msra.mxu0 0
        %1586 = vmatprep.subr.bf16.mxu0 0
        %1587 = vmatpush1.bf16.msra.mxu0 0
        %1588 = vmatprep.subr.bf16.mxu0 0
        %1589 = vmatpush1.bf16.msra.mxu0 0
        %1590 = vmatprep.subr.bf16.mxu0 0
        %1591 = vmatpush1.bf16.msra.mxu0 0
        %1592 = vmatprep.subr.bf16.mxu0 0
        %1593 = vmatpush1.bf16.msra.mxu0 0
        %1594 = vmatprep.subr.bf16.mxu0 0
        %1595 = vmatpush1.bf16.msra.mxu0 0
        %1596 = vmatprep.mubr.bf16.mxu0 0
        %1597 = vmatmul.mubr.bf16.gmra.mrb[0].mxu0 %v1484
        %v1598 = vpop.f32.mrb[0].mxu0
        %v1599 = vadd.f32 0.0, %v1598
        %v1600 = vpop.f32.mrb[0].mxu0
        %v1601 = vpop.f32.mrb[0].mxu0
        %v1602 = vadd.f32 0.0, %v1601
        %v1603 = vpop.f32.mrb[0].mxu0
        %1604 = vmatprep.mubr.bf16.mxu0 0
        %1605 = vmatmul.mubr.bf16.gmra.mrb[0].mxu0 %v1485
        %v1606 = vpop.f32.mrb[0].mxu0
        %v1607 = vadd.f32 0.0, %v1606
        %v1608 = vpop.f32.mrb[0].mxu0
        %v1609 = vpop.f32.mrb[0].mxu0
        %v1610 = vadd.f32 0.0, %v1609
        %v1611 = vpop.f32.mrb[0].mxu0
        %1612 = vmatprep.mubr.bf16.mxu0 0
        %1613 = vmatmul.mubr.bf16.gmra.mrb[0].mxu0 %v1486
        %v1614 = vpop.f32.mrb[0].mxu0
        %v1615 = vadd.f32 0.0, %v1614
        %v1616 = vpop.f32.mrb[0].mxu0
        %v1617 = vpop.f32.mrb[0].mxu0
        %v1618 = vadd.f32 0.0, %v1617
        %v1619 = vpop.f32.mrb[0].mxu0
        %1620 = vmatprep.mubr.bf16.mxu0 0
        %1621 = vmatmul.mubr.bf16.gmra.mrb[0].mxu0 %v1487
        %v1622 = vpop.f32.mrb[0].mxu0
        %v1623 = vadd.f32 0.0, %v1622
        %v1624 = vpop.f32.mrb[0].mxu0
        %v1625 = vpop.f32.mrb[0].mxu0
        %v1626 = vadd.f32 0.0, %v1625
        %v1627 = vpop.f32.mrb[0].mxu0
        %1628 = vmatprep.mubr.bf16.mxu0 0
        %1629 = vmatmul.mubr.bf16.gmra.mrb[0].mxu0 %v1488
        %v1630 = vpop.f32.mrb[0].mxu0
        %v1631 = vadd.f32 0.0, %v1630
        %v1632 = vpop.f32.mrb[0].mxu0
        %v1633 = vpop.f32.mrb[0].mxu0
        %v1634 = vadd.f32 0.0, %v1633
        %v1635 = vpop.f32.mrb[0].mxu0
        %1636 = vmatprep.mubr.bf16.mxu0 0
        %1637 = vmatmul.mubr.bf16.gmra.mrb[0].mxu0 %v1489
        %v1638 = vpop.f32.mrb[0].mxu0
        %v1639 = vadd.f32 0.0, %v1638
        %v1640 = vpop.f32.mrb[0].mxu0
        %v1641 = vpop.f32.mrb[0].mxu0
        %v1642 = vadd.f32 0.0, %v1641
        %v1643 = vpop.f32.mrb[0].mxu0
        %1644 = vmatprep.mubr.bf16.mxu0 0
        %1645 = vmatmul.mubr.bf16.gmra.mrb[0].mxu0 %v1490
        %v1646 = vpop.f32.mrb[0].mxu0
        %v1647 = vadd.f32 0.0, %v1646
        %v1648 = vpop.f32.mrb[0].mxu0
        %v1649 = vpop.f32.mrb[0].mxu0
        %v1650 = vadd.f32 0.0, %v1649
        %v1651 = vpop.f32.mrb[0].mxu0
        %1652 = vmatprep.mubr.bf16.mxu0 0
        %1653 = vmatmul.mubr.bf16.gmra.mrb[0].mxu0 %v1491
        %v1654 = vpop.f32.mrb[0].mxu0
        %v1655 = vadd.f32 0.0, %v1654
        %v1656 = vpop.f32.mrb[0].mxu0
        %v1657 = vpop.f32.mrb[0].mxu0
        %v1658 = vadd.f32 0.0, %v1657
        %v1659 = vpop.f32.mrb[0].mxu0
        %1660 = vmatprep.mubr.bf16.mxu0 0
        %1661 = vmatmul.mubr.bf16.gmra.mrb[0].mxu0 %v1492
        %v1662 = vpop.f32.mrb[0].mxu0
        %v1663 = vadd.f32 0.0, %v1662
        %v1664 = vpop.f32.mrb[0].mxu0
        %v1665 = vpop.f32.mrb[0].mxu0
        %v1666 = vadd.f32 0.0, %v1665
        %v1667 = vpop.f32.mrb[0].mxu0
        %1668 = vmatprep.mubr.bf16.mxu0 0
        %1669 = vmatmul.mubr.bf16.gmra.mrb[0].mxu0 %v1493
        %v1670 = vpop.f32.mrb[0].mxu0
        %v1671 = vadd.f32 0.0, %v1670
        %v1672 = vpop.f32.mrb[0].mxu0
        %v1673 = vpop.f32.mrb[0].mxu0
        %v1674 = vadd.f32 0.0, %v1673
        %v1675 = vpop.f32.mrb[0].mxu0
        %1676 = vmatprep.mubr.bf16.mxu0 0
        %1677 = vmatmul.mubr.bf16.gmra.mrb[0].mxu0 %v1494
        %v1678 = vpop.f32.mrb[0].mxu0
        %v1679 = vadd.f32 0.0, %v1678
        %v1680 = vpop.f32.mrb[0].mxu0
        %v1681 = vpop.f32.mrb[0].mxu0
        %v1682 = vadd.f32 0.0, %v1681
        %v1683 = vpop.f32.mrb[0].mxu0
        %1684 = vmatprep.mubr.bf16.mxu0 0
        %1685 = vmatmul.mubr.bf16.gmra.mrb[0].mxu0 %v1495
        %v1686 = vpop.f32.mrb[0].mxu0
        %v1687 = vadd.f32 0.0, %v1686
        %v1688 = vpop.f32.mrb[0].mxu0
        %v1689 = vpop.f32.mrb[0].mxu0
        %v1690 = vadd.f32 0.0, %v1689
        %v1691 = vpop.f32.mrb[0].mxu0
        %1692 = vmatprep.mubr.bf16.mxu0 0
        %1693 = vmatmul.mubr.bf16.gmra.mrb[0].mxu0 %v1496
        %v1694 = vpop.f32.mrb[0].mxu0
        %v1695 = vadd.f32 0.0, %v1694
        %v1696 = vpop.f32.mrb[0].mxu0
        %v1697 = vpop.f32.mrb[0].mxu0
        %v1698 = vadd.f32 0.0, %v1697
        %v1699 = vpop.f32.mrb[0].mxu0
        %1700 = vmatprep.mubr.bf16.mxu0 0
        %1701 = vmatmul.mubr.bf16.gmra.mrb[0].mxu0 %v1497
        %v1702 = vpop.f32.mrb[0].mxu0
        %v1703 = vadd.f32 0.0, %v1702
        %v1704 = vpop.f32.mrb[0].mxu0
        %v1705 = vpop.f32.mrb[0].mxu0
        %v1706 = vadd.f32 0.0, %v1705
        %v1707 = vpop.f32.mrb[0].mxu0
        %1708 = vmatprep.mubr.bf16.mxu0 0
        %1709 = vmatmul.mubr.bf16.gmra.mrb[0].mxu0 %v1498
        %v1710 = vpop.f32.mrb[0].mxu0
        %v1711 = vadd.f32 0.0, %v1710
        %v1712 = vpop.f32.mrb[0].mxu0
        %v1713 = vpop.f32.mrb[0].mxu0
        %v1714 = vadd.f32 0.0, %v1713
        %v1715 = vpop.f32.mrb[0].mxu0
        %1716 = vmatprep.mubr.bf16.mxu0 0
        %1717 = vmatmul.mubr.bf16.gmra.mrb[0].mxu0 %v1499
        %v1718 = vpop.f32.mrb[0].mxu0
        %v1719 = vadd.f32 0.0, %v1718
        %v1720 = vpop.f32.mrb[0].mxu0
        %v1721 = vpop.f32.mrb[0].mxu0
        %v1722 = vadd.f32 0.0, %v1721
        %v1723 = vpop.f32.mrb[0].mxu0
        %1724 = vdwg.mxu0
        %v1725 = vadd.f32 %v1178, %v1599
        %v1726 = vadd.f32 %v1181, %v1602
        %v1727 = vadd.f32 %v1186, %v1607
        %v1728 = vadd.f32 %v1189, %v1610
        %v1729 = vadd.f32 %v1194, %v1615
        %v1730 = vadd.f32 %v1197, %v1618
        %v1731 = vadd.f32 %v1202, %v1623
        %v1732 = vadd.f32 %v1205, %v1626
        %v1733 = vadd.f32 %v1210, %v1631
        %v1734 = vadd.f32 %v1213, %v1634
        %v1735 = vadd.f32 %v1218, %v1639
        %v1736 = vadd.f32 %v1221, %v1642
        %v1737 = vadd.f32 %v1226, %v1647
        %v1738 = vadd.f32 %v1229, %v1650
        %v1739 = vadd.f32 %v1234, %v1655
        %v1740 = vadd.f32 %v1237, %v1658
        %v1741 = vadd.f32 %v1242, %v1663
        %v1742 = vadd.f32 %v1245, %v1666
        %v1743 = vadd.f32 %v1250, %v1671
        %v1744 = vadd.f32 %v1253, %v1674
        %v1745 = vadd.f32 %v1258, %v1679
        %v1746 = vadd.f32 %v1261, %v1682
        %v1747 = vadd.f32 %v1266, %v1687
        %v1748 = vadd.f32 %v1269, %v1690
        %v1749 = vadd.f32 %v1274, %v1695
        %v1750 = vadd.f32 %v1277, %v1698
        %v1751 = vadd.f32 %v1282, %v1703
        %v1752 = vadd.f32 %v1285, %v1706
        %v1753 = vadd.f32 %v1290, %v1711
        %v1754 = vadd.f32 %v1293, %v1714
        %v1755 = vadd.f32 %v1298, %v1719
        %v1756 = vadd.f32 %v1301, %v1722
        %s1757 = scalar_lea.vmem %s1, 192
        %v1758 = vld [vmem:[%s1757] sm:$0xf]
        %v1759 = vld [vmem:[%s1757 + $0x4] sm:$0xf]
        %v1760 = vld [vmem:[%s1757 + $0x8] sm:$0xf]
        %v1761 = vld [vmem:[%s1757 + $0xc] sm:$0xf]
        %v1762 = vld [vmem:[%s1757 + $0x10] sm:$0xf]
        %v1763 = vld [vmem:[%s1757 + $0x14] sm:$0xf]
        %v1764 = vld [vmem:[%s1757 + $0x18] sm:$0xf]
        %v1765 = vld [vmem:[%s1757 + $0x1c] sm:$0xf]
        %v1766 = vld [vmem:[%s1757 + $0x20] sm:$0xf]
        %v1767 = vld [vmem:[%s1757 + $0x24] sm:$0xf]
        %v1768 = vld [vmem:[%s1757 + $0x28] sm:$0xf]
        %v1769 = vld [vmem:[%s1757 + $0x2c] sm:$0xf]
        %v1770 = vld [vmem:[%s1757 + $0x30] sm:$0xf]
        %v1771 = vld [vmem:[%s1757 + $0x34] sm:$0xf]
        %v1772 = vld [vmem:[%s1757 + $0x38] sm:$0xf]
        %v1773 = vld [vmem:[%s1757 + $0x3c] sm:$0xf]
        %v1776 = vunpack.c.l.b16 %v300
        %v1777 = vunpack.c.l.b16 %v301
        %v1778 = vpack.c.b16 %v1777, %v1776
        %v1796 = vunpack.c.l.b16 %v1758
        %v1797 = vunpack.c.l.b16 %v1759
        %v1798 = vunpack.c.l.b16 %v1760
        %v1799 = vunpack.c.l.b16 %v1761
        %v1800 = vunpack.c.l.b16 %v1762
        %v1801 = vunpack.c.l.b16 %v1763
        %v1802 = vunpack.c.l.b16 %v1764
        %v1803 = vunpack.c.l.b16 %v1765
        %v1804 = vunpack.c.l.b16 %v1766
        %v1805 = vunpack.c.l.b16 %v1767
        %v1806 = vunpack.c.l.b16 %v1768
        %v1807 = vunpack.c.l.b16 %v1769
        %v1808 = vunpack.c.l.b16 %v1770
        %v1809 = vunpack.c.l.b16 %v1771
        %v1810 = vunpack.c.l.b16 %v1772
        %v1811 = vunpack.c.l.b16 %v1773
        %v1812 = vpack.c.b16 %v1797, %v1796
        %v1813 = vpack.c.b16 %v1799, %v1798
        %v1814 = vpack.c.b16 %v1801, %v1800
        %v1815 = vpack.c.b16 %v1803, %v1802
        %v1816 = vpack.c.b16 %v1805, %v1804
        %v1817 = vpack.c.b16 %v1807, %v1806
        %v1818 = vpack.c.b16 %v1809, %v1808
        %v1819 = vpack.c.b16 %v1811, %v1810
        %1828 = vmatprep.subr.bf16.mxu0 0
        %1829 = vmatpush1.bf16.msra.mxu0 %v1812
        %1830 = vmatprep.subr.bf16.mxu0 0
        %1831 = vmatpush1.bf16.msra.mxu0 %v1813
        %1832 = vmatprep.subr.bf16.mxu0 0
        %1833 = vmatpush1.bf16.msra.mxu0 %v1814
        %1834 = vmatprep.subr.bf16.mxu0 0
        %1835 = vmatpush1.bf16.msra.mxu0 %v1815
        %1836 = vmatprep.subr.bf16.mxu0 0
        %1837 = vmatpush1.bf16.msra.mxu0 %v1816
        %1838 = vmatprep.subr.bf16.mxu0 0
        %1839 = vmatpush1.bf16.msra.mxu0 %v1817
        %1840 = vmatprep.subr.bf16.mxu0 0
        %1841 = vmatpush1.bf16.msra.mxu0 %v1818
        %1842 = vmatprep.subr.bf16.mxu0 0
        %1843 = vmatpush1.bf16.msra.mxu0 %v1819
        %1844 = vmatprep.subr.bf16.mxu0 0
        %1845 = vmatpush1.bf16.msra.mxu0 0
        %1846 = vmatprep.subr.bf16.mxu0 0
        %1847 = vmatpush1.bf16.msra.mxu0 0
        %1848 = vmatprep.subr.bf16.mxu0 0
        %1849 = vmatpush1.bf16.msra.mxu0 0
        %1850 = vmatprep.subr.bf16.mxu0 0
        %1851 = vmatpush1.bf16.msra.mxu0 0
        %1852 = vmatprep.subr.bf16.mxu0 0
        %1853 = vmatpush1.bf16.msra.mxu0 0
        %1854 = vmatprep.subr.bf16.mxu0 0
        %1855 = vmatpush1.bf16.msra.mxu0 0
        %1856 = vmatprep.subr.bf16.mxu0 0
        %1857 = vmatpush1.bf16.msra.mxu0 0
        %1858 = vmatprep.subr.bf16.mxu0 0
        %1859 = vmatpush1.bf16.msra.mxu0 0
        %1860 = vmatprep.mubr.bf16.mxu0 0
        %1861 = vmatmul.mubr.bf16.gmra.mrb[0].mxu0 %v1064
        %v1862 = vpop.f32.mrb[0].mxu0
        %v1863 = vadd.f32 0.0, %v1862
        %v1864 = vpop.f32.mrb[0].mxu0
        %v1865 = vpop.f32.mrb[0].mxu0
        %v1866 = vadd.f32 0.0, %v1865
        %v1867 = vpop.f32.mrb[0].mxu0
        %1868 = vmatprep.mubr.bf16.mxu0 0
        %1869 = vmatmul.mubr.bf16.gmra.mrb[0].mxu0 %v1065
        %v1870 = vpop.f32.mrb[0].mxu0
        %v1871 = vadd.f32 0.0, %v1870
        %v1872 = vpop.f32.mrb[0].mxu0
        %v1873 = vpop.f32.mrb[0].mxu0
        %v1874 = vadd.f32 0.0, %v1873
        %v1875 = vpop.f32.mrb[0].mxu0
        %1876 = vmatprep.mubr.bf16.mxu0 0
        %1877 = vmatmul.mubr.bf16.gmra.mrb[0].mxu0 %v1066
        %v1878 = vpop.f32.mrb[0].mxu0
        %v1879 = vadd.f32 0.0, %v1878
        %v1880 = vpop.f32.mrb[0].mxu0
        %v1881 = vpop.f32.mrb[0].mxu0
        %v1882 = vadd.f32 0.0, %v1881
        %v1883 = vpop.f32.mrb[0].mxu0
        %1884 = vmatprep.mubr.bf16.mxu0 0
        %1885 = vmatmul.mubr.bf16.gmra.mrb[0].mxu0 %v1067
        %v1886 = vpop.f32.mrb[0].mxu0
        %v1887 = vadd.f32 0.0, %v1886
        %v1888 = vpop.f32.mrb[0].mxu0
        %v1889 = vpop.f32.mrb[0].mxu0
        %v1890 = vadd.f32 0.0, %v1889
        %v1891 = vpop.f32.mrb[0].mxu0
        %1892 = vmatprep.mubr.bf16.mxu0 0
        %1893 = vmatmul.mubr.bf16.gmra.mrb[0].mxu0 %v1068
        %v1894 = vpop.f32.mrb[0].mxu0
        %v1895 = vadd.f32 0.0, %v1894
        %v1896 = vpop.f32.mrb[0].mxu0
        %v1897 = vpop.f32.mrb[0].mxu0
        %v1898 = vadd.f32 0.0, %v1897
        %v1899 = vpop.f32.mrb[0].mxu0
        %1900 = vmatprep.mubr.bf16.mxu0 0
        %1901 = vmatmul.mubr.bf16.gmra.mrb[0].mxu0 %v1069
        %v1902 = vpop.f32.mrb[0].mxu0
        %v1903 = vadd.f32 0.0, %v1902
        %v1904 = vpop.f32.mrb[0].mxu0
        %v1905 = vpop.f32.mrb[0].mxu0
        %v1906 = vadd.f32 0.0, %v1905
        %v1907 = vpop.f32.mrb[0].mxu0
        %1908 = vmatprep.mubr.bf16.mxu0 0
        %1909 = vmatmul.mubr.bf16.gmra.mrb[0].mxu0 %v1070
        %v1910 = vpop.f32.mrb[0].mxu0
        %v1911 = vadd.f32 0.0, %v1910
        %v1912 = vpop.f32.mrb[0].mxu0
        %v1913 = vpop.f32.mrb[0].mxu0
        %v1914 = vadd.f32 0.0, %v1913
        %v1915 = vpop.f32.mrb[0].mxu0
        %1916 = vmatprep.mubr.bf16.mxu0 0
        %1917 = vmatmul.mubr.bf16.gmra.mrb[0].mxu0 %v1071
        %v1918 = vpop.f32.mrb[0].mxu0
        %v1919 = vadd.f32 0.0, %v1918
        %v1920 = vpop.f32.mrb[0].mxu0
        %v1921 = vpop.f32.mrb[0].mxu0
        %v1922 = vadd.f32 0.0, %v1921
        %v1923 = vpop.f32.mrb[0].mxu0
        %1924 = vmatprep.mubr.bf16.mxu0 0
        %1925 = vmatmul.mubr.bf16.gmra.mrb[0].mxu0 %v1072
        %v1926 = vpop.f32.mrb[0].mxu0
        %v1927 = vadd.f32 0.0, %v1926
        %v1928 = vpop.f32.mrb[0].mxu0
        %v1929 = vpop.f32.mrb[0].mxu0
        %v1930 = vadd.f32 0.0, %v1929
        %v1931 = vpop.f32.mrb[0].mxu0
        %1932 = vmatprep.mubr.bf16.mxu0 0
        %1933 = vmatmul.mubr.bf16.gmra.mrb[0].mxu0 %v1073
        %v1934 = vpop.f32.mrb[0].mxu0
        %v1935 = vadd.f32 0.0, %v1934
        %v1936 = vpop.f32.mrb[0].mxu0
        %v1937 = vpop.f32.mrb[0].mxu0
        %v1938 = vadd.f32 0.0, %v1937
        %v1939 = vpop.f32.mrb[0].mxu0
        %1940 = vmatprep.mubr.bf16.mxu0 0
        %1941 = vmatmul.mubr.bf16.gmra.mrb[0].mxu0 %v1074
        %v1942 = vpop.f32.mrb[0].mxu0
        %v1943 = vadd.f32 0.0, %v1942
        %v1944 = vpop.f32.mrb[0].mxu0
        %v1945 = vpop.f32.mrb[0].mxu0
        %v1946 = vadd.f32 0.0, %v1945
        %v1947 = vpop.f32.mrb[0].mxu0
        %1948 = vmatprep.mubr.bf16.mxu0 0
        %1949 = vmatmul.mubr.bf16.gmra.mrb[0].mxu0 %v1075
        %v1950 = vpop.f32.mrb[0].mxu0
        %v1951 = vadd.f32 0.0, %v1950
        %v1952 = vpop.f32.mrb[0].mxu0
        %v1953 = vpop.f32.mrb[0].mxu0
        %v1954 = vadd.f32 0.0, %v1953
        %v1955 = vpop.f32.mrb[0].mxu0
        %1956 = vmatprep.mubr.bf16.mxu0 0
        %1957 = vmatmul.mubr.bf16.gmra.mrb[0].mxu0 %v1076
        %v1958 = vpop.f32.mrb[0].mxu0
        %v1959 = vadd.f32 0.0, %v1958
        %v1960 = vpop.f32.mrb[0].mxu0
        %v1961 = vpop.f32.mrb[0].mxu0
        %v1962 = vadd.f32 0.0, %v1961
        %v1963 = vpop.f32.mrb[0].mxu0
        %1964 = vmatprep.mubr.bf16.mxu0 0
        %1965 = vmatmul.mubr.bf16.gmra.mrb[0].mxu0 %v1077
        %v1966 = vpop.f32.mrb[0].mxu0
        %v1967 = vadd.f32 0.0, %v1966
        %v1968 = vpop.f32.mrb[0].mxu0
        %v1969 = vpop.f32.mrb[0].mxu0
        %v1970 = vadd.f32 0.0, %v1969
        %v1971 = vpop.f32.mrb[0].mxu0
        %1972 = vmatprep.mubr.bf16.mxu0 0
        %1973 = vmatmul.mubr.bf16.gmra.mrb[0].mxu0 %v1078
        %v1974 = vpop.f32.mrb[0].mxu0
        %v1975 = vadd.f32 0.0, %v1974
        %v1976 = vpop.f32.mrb[0].mxu0
        %v1977 = vpop.f32.mrb[0].mxu0
        %v1978 = vadd.f32 0.0, %v1977
        %v1979 = vpop.f32.mrb[0].mxu0
        %1980 = vmatprep.mubr.bf16.mxu0 0
        %1981 = vmatmul.mubr.bf16.gmra.mrb[0].mxu0 %v1778
        %v1982 = vpop.f32.mrb[0].mxu0
        %v1983 = vadd.f32 0.0, %v1982
        %v1984 = vpop.f32.mrb[0].mxu0
        %v1985 = vpop.f32.mrb[0].mxu0
        %v1986 = vadd.f32 0.0, %v1985
        %v1987 = vpop.f32.mrb[0].mxu0
        %1988 = vdwg.mxu0
        %v1989 = vadd.f32 %v1725, %v1863
        %v1990 = vadd.f32 %v1726, %v1866
        %v1991 = vadd.f32 %v1727, %v1871
        %v1992 = vadd.f32 %v1728, %v1874
        %v1993 = vadd.f32 %v1729, %v1879
        %v1994 = vadd.f32 %v1730, %v1882
        %v1995 = vadd.f32 %v1731, %v1887
        %v1996 = vadd.f32 %v1732, %v1890
        %v1997 = vadd.f32 %v1733, %v1895
        %v1998 = vadd.f32 %v1734, %v1898
        %v1999 = vadd.f32 %v1735, %v1903
        %v2000 = vadd.f32 %v1736, %v1906
        %v2001 = vadd.f32 %v1737, %v1911
        %v2002 = vadd.f32 %v1738, %v1914
        %v2003 = vadd.f32 %v1739, %v1919
        %v2004 = vadd.f32 %v1740, %v1922
        %v2005 = vadd.f32 %v1741, %v1927
        %v2006 = vadd.f32 %v1742, %v1930
        %v2007 = vadd.f32 %v1743, %v1935
        %v2008 = vadd.f32 %v1744, %v1938
        %v2009 = vadd.f32 %v1745, %v1943
        %v2010 = vadd.f32 %v1746, %v1946
        %v2011 = vadd.f32 %v1747, %v1951
        %v2012 = vadd.f32 %v1748, %v1954
        %v2013 = vadd.f32 %v1749, %v1959
        %v2014 = vadd.f32 %v1750, %v1962
        %v2015 = vadd.f32 %v1751, %v1967
        %v2016 = vadd.f32 %v1752, %v1970
        %v2017 = vadd.f32 %v1753, %v1975
        %v2018 = vadd.f32 %v1754, %v1978
        %v2019 = vadd.f32 %v1755, %v1983
        %v2020 = vadd.f32 %v1756, %v1986
        %v2022 = vshrl.u32 %v300, 16
        %v2024 = vrot.slane %v2022, 4
        %v2025 = vshll.u32 %v300, 16
        %v2027 = vrot.slane %v2025, 5
        %v2028 = vor.u32 %v2024, %v2027
        %v2029 = vrot.slane %v2028, 4
        %v2031 = vshll.u32 %v301, 16
        %v2033 = vrot.slane %v2031, 5
        %v2034 = vsel %vm324, %v2029, %v2033
        %v2035 = vshrl.u32 %v301, 16
        %v2037 = vrot.slane %v2035, 4
        %v2038 = vor.u32 %v2037, %v2033
        %v2039 = vrot.slane %v2038, 4
        %v2041 = vshll.u32 %v302, 16
        %v2043 = vrot.slane %v2041, 5
        %v2044 = vsel %vm324, %v2039, %v2043
        %s2045 = scalar_lea.vmem %s1, 256
        %v2046 = vld [vmem:[%s2045] sm:$0xf]
        %v2047 = vld [vmem:[%s2045 + $0x4] sm:$0xf]
        %v2048 = vld [vmem:[%s2045 + $0x8] sm:$0xf]
        %v2049 = vld [vmem:[%s2045 + $0xc] sm:$0xf]
        %v2050 = vld [vmem:[%s2045 + $0x10] sm:$0xf]
        %v2051 = vld [vmem:[%s2045 + $0x14] sm:$0xf]
        %v2052 = vld [vmem:[%s2045 + $0x18] sm:$0xf]
        %v2053 = vld [vmem:[%s2045 + $0x1c] sm:$0xf]
        %v2054 = vld [vmem:[%s2045 + $0x20] sm:$0xf]
        %v2055 = vld [vmem:[%s2045 + $0x24] sm:$0xf]
        %v2056 = vld [vmem:[%s2045 + $0x28] sm:$0xf]
        %v2057 = vld [vmem:[%s2045 + $0x2c] sm:$0xf]
        %v2058 = vld [vmem:[%s2045 + $0x30] sm:$0xf]
        %v2059 = vld [vmem:[%s2045 + $0x34] sm:$0xf]
        %v2060 = vld [vmem:[%s2045 + $0x38] sm:$0xf]
        %v2061 = vld [vmem:[%s2045 + $0x3c] sm:$0xf]
        %v2062 = vunpack.c.l.b16 %v2034
        %v2063 = vunpack.c.l.b16 %v2044
        %v2064 = vpack.c.b16 %v2063, %v2062
        %v2082 = vunpack.c.l.b16 %v2046
        %v2083 = vunpack.c.l.b16 %v2047
        %v2084 = vunpack.c.l.b16 %v2048
        %v2085 = vunpack.c.l.b16 %v2049
        %v2086 = vunpack.c.l.b16 %v2050
        %v2087 = vunpack.c.l.b16 %v2051
        %v2088 = vunpack.c.l.b16 %v2052
        %v2089 = vunpack.c.l.b16 %v2053
        %v2090 = vunpack.c.l.b16 %v2054
        %v2091 = vunpack.c.l.b16 %v2055
        %v2092 = vunpack.c.l.b16 %v2056
        %v2093 = vunpack.c.l.b16 %v2057
        %v2094 = vunpack.c.l.b16 %v2058
        %v2095 = vunpack.c.l.b16 %v2059
        %v2096 = vunpack.c.l.b16 %v2060
        %v2097 = vunpack.c.l.b16 %v2061
        %v2098 = vpack.c.b16 %v2083, %v2082
        %v2099 = vpack.c.b16 %v2085, %v2084
        %v2100 = vpack.c.b16 %v2087, %v2086
        %v2101 = vpack.c.b16 %v2089, %v2088
        %v2102 = vpack.c.b16 %v2091, %v2090
        %v2103 = vpack.c.b16 %v2093, %v2092
        %v2104 = vpack.c.b16 %v2095, %v2094
        %v2105 = vpack.c.b16 %v2097, %v2096
        %2114 = vmatprep.subr.bf16.mxu0 0
        %2115 = vmatpush1.bf16.msra.mxu0 %v2098
        %2116 = vmatprep.subr.bf16.mxu0 0
        %2117 = vmatpush1.bf16.msra.mxu0 %v2099
        %2118 = vmatprep.subr.bf16.mxu0 0
        %2119 = vmatpush1.bf16.msra.mxu0 %v2100
        %2120 = vmatprep.subr.bf16.mxu0 0
        %2121 = vmatpush1.bf16.msra.mxu0 %v2101
        %2122 = vmatprep.subr.bf16.mxu0 0
        %2123 = vmatpush1.bf16.msra.mxu0 %v2102
        %2124 = vmatprep.subr.bf16.mxu0 0
        %2125 = vmatpush1.bf16.msra.mxu0 %v2103
        %2126 = vmatprep.subr.bf16.mxu0 0
        %2127 = vmatpush1.bf16.msra.mxu0 %v2104
        %2128 = vmatprep.subr.bf16.mxu0 0
        %2129 = vmatpush1.bf16.msra.mxu0 %v2105
        %2130 = vmatprep.subr.bf16.mxu0 0
        %2131 = vmatpush1.bf16.msra.mxu0 0
        %2132 = vmatprep.subr.bf16.mxu0 0
        %2133 = vmatpush1.bf16.msra.mxu0 0
        %2134 = vmatprep.subr.bf16.mxu0 0
        %2135 = vmatpush1.bf16.msra.mxu0 0
        %2136 = vmatprep.subr.bf16.mxu0 0
        %2137 = vmatpush1.bf16.msra.mxu0 0
        %2138 = vmatprep.subr.bf16.mxu0 0
        %2139 = vmatpush1.bf16.msra.mxu0 0
        %2140 = vmatprep.subr.bf16.mxu0 0
        %2141 = vmatpush1.bf16.msra.mxu0 0
        %2142 = vmatprep.subr.bf16.mxu0 0
        %2143 = vmatpush1.bf16.msra.mxu0 0
        %2144 = vmatprep.subr.bf16.mxu0 0
        %2145 = vmatpush1.bf16.msra.mxu0 0
        %2146 = vmatprep.mubr.bf16.mxu0 0
        %2147 = vmatmul.mubr.bf16.gmra.mrb[0].mxu0 %v759
        %v2148 = vpop.f32.mrb[0].mxu0
        %v2149 = vadd.f32 0.0, %v2148
        %v2150 = vpop.f32.mrb[0].mxu0
        %v2151 = vpop.f32.mrb[0].mxu0
        %v2152 = vadd.f32 0.0, %v2151
        %v2153 = vpop.f32.mrb[0].mxu0
        %2154 = vmatprep.mubr.bf16.mxu0 0
        %2155 = vmatmul.mubr.bf16.gmra.mrb[0].mxu0 %v760
        %v2156 = vpop.f32.mrb[0].mxu0
        %v2157 = vadd.f32 0.0, %v2156
        %v2158 = vpop.f32.mrb[0].mxu0
        %v2159 = vpop.f32.mrb[0].mxu0
        %v2160 = vadd.f32 0.0, %v2159
        %v2161 = vpop.f32.mrb[0].mxu0
        %2162 = vmatprep.mubr.bf16.mxu0 0
        %2163 = vmatmul.mubr.bf16.gmra.mrb[0].mxu0 %v761
        %v2164 = vpop.f32.mrb[0].mxu0
        %v2165 = vadd.f32 0.0, %v2164
        %v2166 = vpop.f32.mrb[0].mxu0
        %v2167 = vpop.f32.mrb[0].mxu0
        %v2168 = vadd.f32 0.0, %v2167
        %v2169 = vpop.f32.mrb[0].mxu0
        %2170 = vmatprep.mubr.bf16.mxu0 0
        %2171 = vmatmul.mubr.bf16.gmra.mrb[0].mxu0 %v762
        %v2172 = vpop.f32.mrb[0].mxu0
        %v2173 = vadd.f32 0.0, %v2172
        %v2174 = vpop.f32.mrb[0].mxu0
        %v2175 = vpop.f32.mrb[0].mxu0
        %v2176 = vadd.f32 0.0, %v2175
        %v2177 = vpop.f32.mrb[0].mxu0
        %2178 = vmatprep.mubr.bf16.mxu0 0
        %2179 = vmatmul.mubr.bf16.gmra.mrb[0].mxu0 %v763
        %v2180 = vpop.f32.mrb[0].mxu0
        %v2181 = vadd.f32 0.0, %v2180
        %v2182 = vpop.f32.mrb[0].mxu0
        %v2183 = vpop.f32.mrb[0].mxu0
        %v2184 = vadd.f32 0.0, %v2183
        %v2185 = vpop.f32.mrb[0].mxu0
        %2186 = vmatprep.mubr.bf16.mxu0 0
        %2187 = vmatmul.mubr.bf16.gmra.mrb[0].mxu0 %v764
        %v2188 = vpop.f32.mrb[0].mxu0
        %v2189 = vadd.f32 0.0, %v2188
        %v2190 = vpop.f32.mrb[0].mxu0
        %v2191 = vpop.f32.mrb[0].mxu0
        %v2192 = vadd.f32 0.0, %v2191
        %v2193 = vpop.f32.mrb[0].mxu0
        %2194 = vmatprep.mubr.bf16.mxu0 0
        %2195 = vmatmul.mubr.bf16.gmra.mrb[0].mxu0 %v765
        %v2196 = vpop.f32.mrb[0].mxu0
        %v2197 = vadd.f32 0.0, %v2196
        %v2198 = vpop.f32.mrb[0].mxu0
        %v2199 = vpop.f32.mrb[0].mxu0
        %v2200 = vadd.f32 0.0, %v2199
        %v2201 = vpop.f32.mrb[0].mxu0
        %2202 = vmatprep.mubr.bf16.mxu0 0
        %2203 = vmatmul.mubr.bf16.gmra.mrb[0].mxu0 %v766
        %v2204 = vpop.f32.mrb[0].mxu0
        %v2205 = vadd.f32 0.0, %v2204
        %v2206 = vpop.f32.mrb[0].mxu0
        %v2207 = vpop.f32.mrb[0].mxu0
        %v2208 = vadd.f32 0.0, %v2207
        %v2209 = vpop.f32.mrb[0].mxu0
        %2210 = vmatprep.mubr.bf16.mxu0 0
        %2211 = vmatmul.mubr.bf16.gmra.mrb[0].mxu0 %v767
        %v2212 = vpop.f32.mrb[0].mxu0
        %v2213 = vadd.f32 0.0, %v2212
        %v2214 = vpop.f32.mrb[0].mxu0
        %v2215 = vpop.f32.mrb[0].mxu0
        %v2216 = vadd.f32 0.0, %v2215
        %v2217 = vpop.f32.mrb[0].mxu0
        %2218 = vmatprep.mubr.bf16.mxu0 0
        %2219 = vmatmul.mubr.bf16.gmra.mrb[0].mxu0 %v768
        %v2220 = vpop.f32.mrb[0].mxu0
        %v2221 = vadd.f32 0.0, %v2220
        %v2222 = vpop.f32.mrb[0].mxu0
        %v2223 = vpop.f32.mrb[0].mxu0
        %v2224 = vadd.f32 0.0, %v2223
        %v2225 = vpop.f32.mrb[0].mxu0
        %2226 = vmatprep.mubr.bf16.mxu0 0
        %2227 = vmatmul.mubr.bf16.gmra.mrb[0].mxu0 %v769
        %v2228 = vpop.f32.mrb[0].mxu0
        %v2229 = vadd.f32 0.0, %v2228
        %v2230 = vpop.f32.mrb[0].mxu0
        %v2231 = vpop.f32.mrb[0].mxu0
        %v2232 = vadd.f32 0.0, %v2231
        %v2233 = vpop.f32.mrb[0].mxu0
        %2234 = vmatprep.mubr.bf16.mxu0 0
        %2235 = vmatmul.mubr.bf16.gmra.mrb[0].mxu0 %v770
        %v2236 = vpop.f32.mrb[0].mxu0
        %v2237 = vadd.f32 0.0, %v2236
        %v2238 = vpop.f32.mrb[0].mxu0
        %v2239 = vpop.f32.mrb[0].mxu0
        %v2240 = vadd.f32 0.0, %v2239
        %v2241 = vpop.f32.mrb[0].mxu0
        %2242 = vmatprep.mubr.bf16.mxu0 0
        %2243 = vmatmul.mubr.bf16.gmra.mrb[0].mxu0 %v771
        %v2244 = vpop.f32.mrb[0].mxu0
        %v2245 = vadd.f32 0.0, %v2244
        %v2246 = vpop.f32.mrb[0].mxu0
        %v2247 = vpop.f32.mrb[0].mxu0
        %v2248 = vadd.f32 0.0, %v2247
        %v2249 = vpop.f32.mrb[0].mxu0
        %2250 = vmatprep.mubr.bf16.mxu0 0
        %2251 = vmatmul.mubr.bf16.gmra.mrb[0].mxu0 %v772
        %v2252 = vpop.f32.mrb[0].mxu0
        %v2253 = vadd.f32 0.0, %v2252
        %v2254 = vpop.f32.mrb[0].mxu0
        %v2255 = vpop.f32.mrb[0].mxu0
        %v2256 = vadd.f32 0.0, %v2255
        %v2257 = vpop.f32.mrb[0].mxu0
        %2258 = vmatprep.mubr.bf16.mxu0 0
        %2259 = vmatmul.mubr.bf16.gmra.mrb[0].mxu0 %v773
        %v2260 = vpop.f32.mrb[0].mxu0
        %v2261 = vadd.f32 0.0, %v2260
        %v2262 = vpop.f32.mrb[0].mxu0
        %v2263 = vpop.f32.mrb[0].mxu0
        %v2264 = vadd.f32 0.0, %v2263
        %v2265 = vpop.f32.mrb[0].mxu0
        %2266 = vmatprep.mubr.bf16.mxu0 0
        %2267 = vmatmul.mubr.bf16.gmra.mrb[0].mxu0 %v2064
        %v2268 = vpop.f32.mrb[0].mxu0
        %v2269 = vadd.f32 0.0, %v2268
        %v2270 = vpop.f32.mrb[0].mxu0
        %v2271 = vpop.f32.mrb[0].mxu0
        %v2272 = vadd.f32 0.0, %v2271
        %v2273 = vpop.f32.mrb[0].mxu0
        %2274 = vdwg.mxu0
        %v2275 = vadd.f32 %v1989, %v2149
        %v2276 = vadd.f32 %v1990, %v2152
        %v2277 = vadd.f32 %v1991, %v2157
        %v2278 = vadd.f32 %v1992, %v2160
        %v2279 = vadd.f32 %v1993, %v2165
        %v2280 = vadd.f32 %v1994, %v2168
        %v2281 = vadd.f32 %v1995, %v2173
        %v2282 = vadd.f32 %v1996, %v2176
        %v2283 = vadd.f32 %v1997, %v2181
        %v2284 = vadd.f32 %v1998, %v2184
        %v2285 = vadd.f32 %v1999, %v2189
        %v2286 = vadd.f32 %v2000, %v2192
        %v2287 = vadd.f32 %v2001, %v2197
        %v2288 = vadd.f32 %v2002, %v2200
        %v2289 = vadd.f32 %v2003, %v2205
        %v2290 = vadd.f32 %v2004, %v2208
        %v2291 = vadd.f32 %v2005, %v2213
        %v2292 = vadd.f32 %v2006, %v2216
        %v2293 = vadd.f32 %v2007, %v2221
        %v2294 = vadd.f32 %v2008, %v2224
        %v2295 = vadd.f32 %v2009, %v2229
        %v2296 = vadd.f32 %v2010, %v2232
        %v2297 = vadd.f32 %v2011, %v2237
        %v2298 = vadd.f32 %v2012, %v2240
        %v2299 = vadd.f32 %v2013, %v2245
        %v2300 = vadd.f32 %v2014, %v2248
        %v2301 = vadd.f32 %v2015, %v2253
        %v2302 = vadd.f32 %v2016, %v2256
        %v2303 = vadd.f32 %v2017, %v2261
        %v2304 = vadd.f32 %v2018, %v2264
        %v2305 = vadd.f32 %v2019, %v2269
        %v2306 = vadd.f32 %v2020, %v2272
        %v2308 = vrot.slane %v300, 5
        %v2309 = vrot.slane %v2308, 4
        %v2310 = vrot.slane %v301, 5
        %v2311 = vsel %vm1322, %v2309, %v2310
        %v2312 = vrot.slane %v2310, 4
        %v2313 = vrot.slane %v302, 5
        %v2314 = vsel %vm1322, %v2312, %v2313
        %s2315 = scalar_lea.vmem %s1, 320
        %v2316 = vld [vmem:[%s2315] sm:$0xf]
        %v2317 = vld [vmem:[%s2315 + $0x4] sm:$0xf]
        %v2318 = vld [vmem:[%s2315 + $0x8] sm:$0xf]
        %v2319 = vld [vmem:[%s2315 + $0xc] sm:$0xf]
        %v2320 = vld [vmem:[%s2315 + $0x10] sm:$0xf]
        %v2321 = vld [vmem:[%s2315 + $0x14] sm:$0xf]
        %v2322 = vld [vmem:[%s2315 + $0x18] sm:$0xf]
        %v2323 = vld [vmem:[%s2315 + $0x1c] sm:$0xf]
        %v2324 = vld [vmem:[%s2315 + $0x20] sm:$0xf]
        %v2325 = vld [vmem:[%s2315 + $0x24] sm:$0xf]
        %v2326 = vld [vmem:[%s2315 + $0x28] sm:$0xf]
        %v2327 = vld [vmem:[%s2315 + $0x2c] sm:$0xf]
        %v2328 = vld [vmem:[%s2315 + $0x30] sm:$0xf]
        %v2329 = vld [vmem:[%s2315 + $0x34] sm:$0xf]
        %v2330 = vld [vmem:[%s2315 + $0x38] sm:$0xf]
        %v2331 = vld [vmem:[%s2315 + $0x3c] sm:$0xf]
        %v2332 = vunpack.c.l.b16 %v2311
        %v2333 = vunpack.c.l.b16 %v2314
        %v2334 = vpack.c.b16 %v2333, %v2332
        %v2352 = vunpack.c.l.b16 %v2316
        %v2353 = vunpack.c.l.b16 %v2317
        %v2354 = vunpack.c.l.b16 %v2318
        %v2355 = vunpack.c.l.b16 %v2319
        %v2356 = vunpack.c.l.b16 %v2320
        %v2357 = vunpack.c.l.b16 %v2321
        %v2358 = vunpack.c.l.b16 %v2322
        %v2359 = vunpack.c.l.b16 %v2323
        %v2360 = vunpack.c.l.b16 %v2324
        %v2361 = vunpack.c.l.b16 %v2325
        %v2362 = vunpack.c.l.b16 %v2326
        %v2363 = vunpack.c.l.b16 %v2327
        %v2364 = vunpack.c.l.b16 %v2328
        %v2365 = vunpack.c.l.b16 %v2329
        %v2366 = vunpack.c.l.b16 %v2330
        %v2367 = vunpack.c.l.b16 %v2331
        %v2368 = vpack.c.b16 %v2353, %v2352
        %v2369 = vpack.c.b16 %v2355, %v2354
        %v2370 = vpack.c.b16 %v2357, %v2356
        %v2371 = vpack.c.b16 %v2359, %v2358
        %v2372 = vpack.c.b16 %v2361, %v2360
        %v2373 = vpack.c.b16 %v2363, %v2362
        %v2374 = vpack.c.b16 %v2365, %v2364
        %v2375 = vpack.c.b16 %v2367, %v2366
        %2384 = vmatprep.subr.bf16.mxu0 0
        %2385 = vmatpush1.bf16.msra.mxu0 %v2368
        %2386 = vmatprep.subr.bf16.mxu0 0
        %2387 = vmatpush1.bf16.msra.mxu0 %v2369
        %2388 = vmatprep.subr.bf16.mxu0 0
        %2389 = vmatpush1.bf16.msra.mxu0 %v2370
        %2390 = vmatprep.subr.bf16.mxu0 0
        %2391 = vmatpush1.bf16.msra.mxu0 %v2371
        %2392 = vmatprep.subr.bf16.mxu0 0
        %2393 = vmatpush1.bf16.msra.mxu0 %v2372
        %2394 = vmatprep.subr.bf16.mxu0 0
        %2395 = vmatpush1.bf16.msra.mxu0 %v2373
        %2396 = vmatprep.subr.bf16.mxu0 0
        %2397 = vmatpush1.bf16.msra.mxu0 %v2374
        %2398 = vmatprep.subr.bf16.mxu0 0
        %2399 = vmatpush1.bf16.msra.mxu0 %v2375
        %2400 = vmatprep.subr.bf16.mxu0 0
        %2401 = vmatpush1.bf16.msra.mxu0 0
        %2402 = vmatprep.subr.bf16.mxu0 0
        %2403 = vmatpush1.bf16.msra.mxu0 0
        %2404 = vmatprep.subr.bf16.mxu0 0
        %2405 = vmatpush1.bf16.msra.mxu0 0
        %2406 = vmatprep.subr.bf16.mxu0 0
        %2407 = vmatpush1.bf16.msra.mxu0 0
        %2408 = vmatprep.subr.bf16.mxu0 0
        %2409 = vmatpush1.bf16.msra.mxu0 0
        %2410 = vmatprep.subr.bf16.mxu0 0
        %2411 = vmatpush1.bf16.msra.mxu0 0
        %2412 = vmatprep.subr.bf16.mxu0 0
        %2413 = vmatpush1.bf16.msra.mxu0 0
        %2414 = vmatprep.subr.bf16.mxu0 0
        %2415 = vmatpush1.bf16.msra.mxu0 0
        %2416 = vmatprep.mubr.bf16.mxu0 0
        %2417 = vmatmul.mubr.bf16.gmra.mrb[0].mxu0 %v1485
        %v2418 = vpop.f32.mrb[0].mxu0
        %v2419 = vadd.f32 0.0, %v2418
        %v2420 = vpop.f32.mrb[0].mxu0
        %v2421 = vpop.f32.mrb[0].mxu0
        %v2422 = vadd.f32 0.0, %v2421
        %v2423 = vpop.f32.mrb[0].mxu0
        %2424 = vmatprep.mubr.bf16.mxu0 0
        %2425 = vmatmul.mubr.bf16.gmra.mrb[0].mxu0 %v1486
        %v2426 = vpop.f32.mrb[0].mxu0
        %v2427 = vadd.f32 0.0, %v2426
        %v2428 = vpop.f32.mrb[0].mxu0
        %v2429 = vpop.f32.mrb[0].mxu0
        %v2430 = vadd.f32 0.0, %v2429
        %v2431 = vpop.f32.mrb[0].mxu0
        %2432 = vmatprep.mubr.bf16.mxu0 0
        %2433 = vmatmul.mubr.bf16.gmra.mrb[0].mxu0 %v1487
        %v2434 = vpop.f32.mrb[0].mxu0
        %v2435 = vadd.f32 0.0, %v2434
        %v2436 = vpop.f32.mrb[0].mxu0
        %v2437 = vpop.f32.mrb[0].mxu0
        %v2438 = vadd.f32 0.0, %v2437
        %v2439 = vpop.f32.mrb[0].mxu0
        %2440 = vmatprep.mubr.bf16.mxu0 0
        %2441 = vmatmul.mubr.bf16.gmra.mrb[0].mxu0 %v1488
        %v2442 = vpop.f32.mrb[0].mxu0
        %v2443 = vadd.f32 0.0, %v2442
        %v2444 = vpop.f32.mrb[0].mxu0
        %v2445 = vpop.f32.mrb[0].mxu0
        %v2446 = vadd.f32 0.0, %v2445
        %v2447 = vpop.f32.mrb[0].mxu0
        %2448 = vmatprep.mubr.bf16.mxu0 0
        %2449 = vmatmul.mubr.bf16.gmra.mrb[0].mxu0 %v1489
        %v2450 = vpop.f32.mrb[0].mxu0
        %v2451 = vadd.f32 0.0, %v2450
        %v2452 = vpop.f32.mrb[0].mxu0
        %v2453 = vpop.f32.mrb[0].mxu0
        %v2454 = vadd.f32 0.0, %v2453
        %v2455 = vpop.f32.mrb[0].mxu0
        %2456 = vmatprep.mubr.bf16.mxu0 0
        %2457 = vmatmul.mubr.bf16.gmra.mrb[0].mxu0 %v1490
        %v2458 = vpop.f32.mrb[0].mxu0
        %v2459 = vadd.f32 0.0, %v2458
        %v2460 = vpop.f32.mrb[0].mxu0
        %v2461 = vpop.f32.mrb[0].mxu0
        %v2462 = vadd.f32 0.0, %v2461
        %v2463 = vpop.f32.mrb[0].mxu0
        %2464 = vmatprep.mubr.bf16.mxu0 0
        %2465 = vmatmul.mubr.bf16.gmra.mrb[0].mxu0 %v1491
        %v2466 = vpop.f32.mrb[0].mxu0
        %v2467 = vadd.f32 0.0, %v2466
        %v2468 = vpop.f32.mrb[0].mxu0
        %v2469 = vpop.f32.mrb[0].mxu0
        %v2470 = vadd.f32 0.0, %v2469
        %v2471 = vpop.f32.mrb[0].mxu0
        %2472 = vmatprep.mubr.bf16.mxu0 0
        %2473 = vmatmul.mubr.bf16.gmra.mrb[0].mxu0 %v1492
        %v2474 = vpop.f32.mrb[0].mxu0
        %v2475 = vadd.f32 0.0, %v2474
        %v2476 = vpop.f32.mrb[0].mxu0
        %v2477 = vpop.f32.mrb[0].mxu0
        %v2478 = vadd.f32 0.0, %v2477
        %v2479 = vpop.f32.mrb[0].mxu0
        %2480 = vmatprep.mubr.bf16.mxu0 0
        %2481 = vmatmul.mubr.bf16.gmra.mrb[0].mxu0 %v1493
        %v2482 = vpop.f32.mrb[0].mxu0
        %v2483 = vadd.f32 0.0, %v2482
        %v2484 = vpop.f32.mrb[0].mxu0
        %v2485 = vpop.f32.mrb[0].mxu0
        %v2486 = vadd.f32 0.0, %v2485
        %v2487 = vpop.f32.mrb[0].mxu0
        %2488 = vmatprep.mubr.bf16.mxu0 0
        %2489 = vmatmul.mubr.bf16.gmra.mrb[0].mxu0 %v1494
        %v2490 = vpop.f32.mrb[0].mxu0
        %v2491 = vadd.f32 0.0, %v2490
        %v2492 = vpop.f32.mrb[0].mxu0
        %v2493 = vpop.f32.mrb[0].mxu0
        %v2494 = vadd.f32 0.0, %v2493
        %v2495 = vpop.f32.mrb[0].mxu0
        %2496 = vmatprep.mubr.bf16.mxu0 0
        %2497 = vmatmul.mubr.bf16.gmra.mrb[0].mxu0 %v1495
        %v2498 = vpop.f32.mrb[0].mxu0
        %v2499 = vadd.f32 0.0, %v2498
        %v2500 = vpop.f32.mrb[0].mxu0
        %v2501 = vpop.f32.mrb[0].mxu0
        %v2502 = vadd.f32 0.0, %v2501
        %v2503 = vpop.f32.mrb[0].mxu0
        %2504 = vmatprep.mubr.bf16.mxu0 0
        %2505 = vmatmul.mubr.bf16.gmra.mrb[0].mxu0 %v1496
        %v2506 = vpop.f32.mrb[0].mxu0
        %v2507 = vadd.f32 0.0, %v2506
        %v2508 = vpop.f32.mrb[0].mxu0
        %v2509 = vpop.f32.mrb[0].mxu0
        %v2510 = vadd.f32 0.0, %v2509
        %v2511 = vpop.f32.mrb[0].mxu0
        %2512 = vmatprep.mubr.bf16.mxu0 0
        %2513 = vmatmul.mubr.bf16.gmra.mrb[0].mxu0 %v1497
        %v2514 = vpop.f32.mrb[0].mxu0
        %v2515 = vadd.f32 0.0, %v2514
        %v2516 = vpop.f32.mrb[0].mxu0
        %v2517 = vpop.f32.mrb[0].mxu0
        %v2518 = vadd.f32 0.0, %v2517
        %v2519 = vpop.f32.mrb[0].mxu0
        %2520 = vmatprep.mubr.bf16.mxu0 0
        %2521 = vmatmul.mubr.bf16.gmra.mrb[0].mxu0 %v1498
        %v2522 = vpop.f32.mrb[0].mxu0
        %v2523 = vadd.f32 0.0, %v2522
        %v2524 = vpop.f32.mrb[0].mxu0
        %v2525 = vpop.f32.mrb[0].mxu0
        %v2526 = vadd.f32 0.0, %v2525
        %v2527 = vpop.f32.mrb[0].mxu0
        %2528 = vmatprep.mubr.bf16.mxu0 0
        %2529 = vmatmul.mubr.bf16.gmra.mrb[0].mxu0 %v1499
        %v2530 = vpop.f32.mrb[0].mxu0
        %v2531 = vadd.f32 0.0, %v2530
        %v2532 = vpop.f32.mrb[0].mxu0
        %v2533 = vpop.f32.mrb[0].mxu0
        %v2534 = vadd.f32 0.0, %v2533
        %v2535 = vpop.f32.mrb[0].mxu0
        %2536 = vmatprep.mubr.bf16.mxu0 0
        %2537 = vmatmul.mubr.bf16.gmra.mrb[0].mxu0 %v2334
        %v2538 = vpop.f32.mrb[0].mxu0
        %v2539 = vadd.f32 0.0, %v2538
        %v2540 = vpop.f32.mrb[0].mxu0
        %v2541 = vpop.f32.mrb[0].mxu0
        %v2542 = vadd.f32 0.0, %v2541
        %v2543 = vpop.f32.mrb[0].mxu0
        %2544 = vdwg.mxu0
        %v2545 = vadd.f32 %v2275, %v2419
        %v2546 = vadd.f32 %v2276, %v2422
        %v2547 = vadd.f32 %v2277, %v2427
        %v2548 = vadd.f32 %v2278, %v2430
        %v2549 = vadd.f32 %v2279, %v2435
        %v2550 = vadd.f32 %v2280, %v2438
        %v2551 = vadd.f32 %v2281, %v2443
        %v2552 = vadd.f32 %v2282, %v2446
        %v2553 = vadd.f32 %v2283, %v2451
        %v2554 = vadd.f32 %v2284, %v2454
        %v2555 = vadd.f32 %v2285, %v2459
        %v2556 = vadd.f32 %v2286, %v2462
        %v2557 = vadd.f32 %v2287, %v2467
        %v2558 = vadd.f32 %v2288, %v2470
        %v2559 = vadd.f32 %v2289, %v2475
        %v2560 = vadd.f32 %v2290, %v2478
        %v2561 = vadd.f32 %v2291, %v2483
        %v2562 = vadd.f32 %v2292, %v2486
        %v2563 = vadd.f32 %v2293, %v2491
        %v2564 = vadd.f32 %v2294, %v2494
        %v2565 = vadd.f32 %v2295, %v2499
        %v2566 = vadd.f32 %v2296, %v2502
        %v2567 = vadd.f32 %v2297, %v2507
        %v2568 = vadd.f32 %v2298, %v2510
        %v2569 = vadd.f32 %v2299, %v2515
        %v2570 = vadd.f32 %v2300, %v2518
        %v2571 = vadd.f32 %v2301, %v2523
        %v2572 = vadd.f32 %v2302, %v2526
        %v2573 = vadd.f32 %v2303, %v2531
        %v2574 = vadd.f32 %v2304, %v2534
        %v2575 = vadd.f32 %v2305, %v2539
        %v2576 = vadd.f32 %v2306, %v2542
        %s2577 = scalar_lea.vmem %s1, 384
        %v2578 = vld [vmem:[%s2577] sm:$0xf]
        %v2579 = vld [vmem:[%s2577 + $0x4] sm:$0xf]
        %v2580 = vld [vmem:[%s2577 + $0x8] sm:$0xf]
        %v2581 = vld [vmem:[%s2577 + $0xc] sm:$0xf]
        %v2582 = vld [vmem:[%s2577 + $0x10] sm:$0xf]
        %v2583 = vld [vmem:[%s2577 + $0x14] sm:$0xf]
        %v2584 = vld [vmem:[%s2577 + $0x18] sm:$0xf]
        %v2585 = vld [vmem:[%s2577 + $0x1c] sm:$0xf]
        %v2586 = vld [vmem:[%s2577 + $0x20] sm:$0xf]
        %v2587 = vld [vmem:[%s2577 + $0x24] sm:$0xf]
        %v2588 = vld [vmem:[%s2577 + $0x28] sm:$0xf]
        %v2589 = vld [vmem:[%s2577 + $0x2c] sm:$0xf]
        %v2590 = vld [vmem:[%s2577 + $0x30] sm:$0xf]
        %v2591 = vld [vmem:[%s2577 + $0x34] sm:$0xf]
        %v2592 = vld [vmem:[%s2577 + $0x38] sm:$0xf]
        %v2593 = vld [vmem:[%s2577 + $0x3c] sm:$0xf]
        %v2596 = vunpack.c.l.b16 %v303
        %v2597 = vunpack.c.l.b16 %v304
        %v2598 = vpack.c.b16 %v2597, %v2596
        %v2616 = vunpack.c.l.b16 %v2578
        %v2617 = vunpack.c.l.b16 %v2579
        %v2618 = vunpack.c.l.b16 %v2580
        %v2619 = vunpack.c.l.b16 %v2581
        %v2620 = vunpack.c.l.b16 %v2582
        %v2621 = vunpack.c.l.b16 %v2583
        %v2622 = vunpack.c.l.b16 %v2584
        %v2623 = vunpack.c.l.b16 %v2585
        %v2624 = vunpack.c.l.b16 %v2586
        %v2625 = vunpack.c.l.b16 %v2587
        %v2626 = vunpack.c.l.b16 %v2588
        %v2627 = vunpack.c.l.b16 %v2589
        %v2628 = vunpack.c.l.b16 %v2590
        %v2629 = vunpack.c.l.b16 %v2591
        %v2630 = vunpack.c.l.b16 %v2592
        %v2631 = vunpack.c.l.b16 %v2593
        %v2632 = vpack.c.b16 %v2617, %v2616
        %v2633 = vpack.c.b16 %v2619, %v2618
        %v2634 = vpack.c.b16 %v2621, %v2620
        %v2635 = vpack.c.b16 %v2623, %v2622
        %v2636 = vpack.c.b16 %v2625, %v2624
        %v2637 = vpack.c.b16 %v2627, %v2626
        %v2638 = vpack.c.b16 %v2629, %v2628
        %v2639 = vpack.c.b16 %v2631, %v2630
        %2648 = vmatprep.subr.bf16.mxu0 0
        %2649 = vmatpush1.bf16.msra.mxu0 %v2632
        %2650 = vmatprep.subr.bf16.mxu0 0
        %2651 = vmatpush1.bf16.msra.mxu0 %v2633
        %2652 = vmatprep.subr.bf16.mxu0 0
        %2653 = vmatpush1.bf16.msra.mxu0 %v2634
        %2654 = vmatprep.subr.bf16.mxu0 0
        %2655 = vmatpush1.bf16.msra.mxu0 %v2635
        %2656 = vmatprep.subr.bf16.mxu0 0
        %2657 = vmatpush1.bf16.msra.mxu0 %v2636
        %2658 = vmatprep.subr.bf16.mxu0 0
        %2659 = vmatpush1.bf16.msra.mxu0 %v2637
        %2660 = vmatprep.subr.bf16.mxu0 0
        %2661 = vmatpush1.bf16.msra.mxu0 %v2638
        %2662 = vmatprep.subr.bf16.mxu0 0
        %2663 = vmatpush1.bf16.msra.mxu0 %v2639
        %2664 = vmatprep.subr.bf16.mxu0 0
        %2665 = vmatpush1.bf16.msra.mxu0 0
        %2666 = vmatprep.subr.bf16.mxu0 0
        %2667 = vmatpush1.bf16.msra.mxu0 0
        %2668 = vmatprep.subr.bf16.mxu0 0
        %2669 = vmatpush1.bf16.msra.mxu0 0
        %2670 = vmatprep.subr.bf16.mxu0 0
        %2671 = vmatpush1.bf16.msra.mxu0 0
        %2672 = vmatprep.subr.bf16.mxu0 0
        %2673 = vmatpush1.bf16.msra.mxu0 0
        %2674 = vmatprep.subr.bf16.mxu0 0
        %2675 = vmatpush1.bf16.msra.mxu0 0
        %2676 = vmatprep.subr.bf16.mxu0 0
        %2677 = vmatpush1.bf16.msra.mxu0 0
        %2678 = vmatprep.subr.bf16.mxu0 0
        %2679 = vmatpush1.bf16.msra.mxu0 0
        %2680 = vmatprep.mubr.bf16.mxu0 0
        %2681 = vmatmul.mubr.bf16.gmra.mrb[0].mxu0 %v1065
        %v2682 = vpop.f32.mrb[0].mxu0
        %v2683 = vadd.f32 0.0, %v2682
        %v2684 = vpop.f32.mrb[0].mxu0
        %v2685 = vpop.f32.mrb[0].mxu0
        %v2686 = vadd.f32 0.0, %v2685
        %v2687 = vpop.f32.mrb[0].mxu0
        %2688 = vmatprep.mubr.bf16.mxu0 0
        %2689 = vmatmul.mubr.bf16.gmra.mrb[0].mxu0 %v1066
        %v2690 = vpop.f32.mrb[0].mxu0
        %v2691 = vadd.f32 0.0, %v2690
        %v2692 = vpop.f32.mrb[0].mxu0
        %v2693 = vpop.f32.mrb[0].mxu0
        %v2694 = vadd.f32 0.0, %v2693
        %v2695 = vpop.f32.mrb[0].mxu0
        %2696 = vmatprep.mubr.bf16.mxu0 0
        %2697 = vmatmul.mubr.bf16.gmra.mrb[0].mxu0 %v1067
        %v2698 = vpop.f32.mrb[0].mxu0
        %v2699 = vadd.f32 0.0, %v2698
        %v2700 = vpop.f32.mrb[0].mxu0
        %v2701 = vpop.f32.mrb[0].mxu0
        %v2702 = vadd.f32 0.0, %v2701
        %v2703 = vpop.f32.mrb[0].mxu0
        %2704 = vmatprep.mubr.bf16.mxu0 0
        %2705 = vmatmul.mubr.bf16.gmra.mrb[0].mxu0 %v1068
        %v2706 = vpop.f32.mrb[0].mxu0
        %v2707 = vadd.f32 0.0, %v2706
        %v2708 = vpop.f32.mrb[0].mxu0
        %v2709 = vpop.f32.mrb[0].mxu0
        %v2710 = vadd.f32 0.0, %v2709
        %v2711 = vpop.f32.mrb[0].mxu0
        %2712 = vmatprep.mubr.bf16.mxu0 0
        %2713 = vmatmul.mubr.bf16.gmra.mrb[0].mxu0 %v1069
        %v2714 = vpop.f32.mrb[0].mxu0
        %v2715 = vadd.f32 0.0, %v2714
        %v2716 = vpop.f32.mrb[0].mxu0
        %v2717 = vpop.f32.mrb[0].mxu0
        %v2718 = vadd.f32 0.0, %v2717
        %v2719 = vpop.f32.mrb[0].mxu0
        %2720 = vmatprep.mubr.bf16.mxu0 0
        %2721 = vmatmul.mubr.bf16.gmra.mrb[0].mxu0 %v1070
        %v2722 = vpop.f32.mrb[0].mxu0
        %v2723 = vadd.f32 0.0, %v2722
        %v2724 = vpop.f32.mrb[0].mxu0
        %v2725 = vpop.f32.mrb[0].mxu0
        %v2726 = vadd.f32 0.0, %v2725
        %v2727 = vpop.f32.mrb[0].mxu0
        %2728 = vmatprep.mubr.bf16.mxu0 0
        %2729 = vmatmul.mubr.bf16.gmra.mrb[0].mxu0 %v1071
        %v2730 = vpop.f32.mrb[0].mxu0
        %v2731 = vadd.f32 0.0, %v2730
        %v2732 = vpop.f32.mrb[0].mxu0
        %v2733 = vpop.f32.mrb[0].mxu0
        %v2734 = vadd.f32 0.0, %v2733
        %v2735 = vpop.f32.mrb[0].mxu0
        %2736 = vmatprep.mubr.bf16.mxu0 0
        %2737 = vmatmul.mubr.bf16.gmra.mrb[0].mxu0 %v1072
        %v2738 = vpop.f32.mrb[0].mxu0
        %v2739 = vadd.f32 0.0, %v2738
        %v2740 = vpop.f32.mrb[0].mxu0
        %v2741 = vpop.f32.mrb[0].mxu0
        %v2742 = vadd.f32 0.0, %v2741
        %v2743 = vpop.f32.mrb[0].mxu0
        %2744 = vmatprep.mubr.bf16.mxu0 0
        %2745 = vmatmul.mubr.bf16.gmra.mrb[0].mxu0 %v1073
        %v2746 = vpop.f32.mrb[0].mxu0
        %v2747 = vadd.f32 0.0, %v2746
        %v2748 = vpop.f32.mrb[0].mxu0
        %v2749 = vpop.f32.mrb[0].mxu0
        %v2750 = vadd.f32 0.0, %v2749
        %v2751 = vpop.f32.mrb[0].mxu0
        %2752 = vmatprep.mubr.bf16.mxu0 0
        %2753 = vmatmul.mubr.bf16.gmra.mrb[0].mxu0 %v1074
        %v2754 = vpop.f32.mrb[0].mxu0
        %v2755 = vadd.f32 0.0, %v2754
        %v2756 = vpop.f32.mrb[0].mxu0
        %v2757 = vpop.f32.mrb[0].mxu0
        %v2758 = vadd.f32 0.0, %v2757
        %v2759 = vpop.f32.mrb[0].mxu0
        %2760 = vmatprep.mubr.bf16.mxu0 0
        %2761 = vmatmul.mubr.bf16.gmra.mrb[0].mxu0 %v1075
        %v2762 = vpop.f32.mrb[0].mxu0
        %v2763 = vadd.f32 0.0, %v2762
        %v2764 = vpop.f32.mrb[0].mxu0
        %v2765 = vpop.f32.mrb[0].mxu0
        %v2766 = vadd.f32 0.0, %v2765
        %v2767 = vpop.f32.mrb[0].mxu0
        %2768 = vmatprep.mubr.bf16.mxu0 0
        %2769 = vmatmul.mubr.bf16.gmra.mrb[0].mxu0 %v1076
        %v2770 = vpop.f32.mrb[0].mxu0
        %v2771 = vadd.f32 0.0, %v2770
        %v2772 = vpop.f32.mrb[0].mxu0
        %v2773 = vpop.f32.mrb[0].mxu0
        %v2774 = vadd.f32 0.0, %v2773
        %v2775 = vpop.f32.mrb[0].mxu0
        %2776 = vmatprep.mubr.bf16.mxu0 0
        %2777 = vmatmul.mubr.bf16.gmra.mrb[0].mxu0 %v1077
        %v2778 = vpop.f32.mrb[0].mxu0
        %v2779 = vadd.f32 0.0, %v2778
        %v2780 = vpop.f32.mrb[0].mxu0
        %v2781 = vpop.f32.mrb[0].mxu0
        %v2782 = vadd.f32 0.0, %v2781
        %v2783 = vpop.f32.mrb[0].mxu0
        %2784 = vmatprep.mubr.bf16.mxu0 0
        %2785 = vmatmul.mubr.bf16.gmra.mrb[0].mxu0 %v1078
        %v2786 = vpop.f32.mrb[0].mxu0
        %v2787 = vadd.f32 0.0, %v2786
        %v2788 = vpop.f32.mrb[0].mxu0
        %v2789 = vpop.f32.mrb[0].mxu0
        %v2790 = vadd.f32 0.0, %v2789
        %v2791 = vpop.f32.mrb[0].mxu0
        %2792 = vmatprep.mubr.bf16.mxu0 0
        %2793 = vmatmul.mubr.bf16.gmra.mrb[0].mxu0 %v1778
        %v2794 = vpop.f32.mrb[0].mxu0
        %v2795 = vadd.f32 0.0, %v2794
        %v2796 = vpop.f32.mrb[0].mxu0
        %v2797 = vpop.f32.mrb[0].mxu0
        %v2798 = vadd.f32 0.0, %v2797
        %v2799 = vpop.f32.mrb[0].mxu0
        %2800 = vmatprep.mubr.bf16.mxu0 0
        %2801 = vmatmul.mubr.bf16.gmra.mrb[0].mxu0 %v2598
        %v2802 = vpop.f32.mrb[0].mxu0
        %v2803 = vadd.f32 0.0, %v2802
        %v2804 = vpop.f32.mrb[0].mxu0
        %v2805 = vpop.f32.mrb[0].mxu0
        %v2806 = vadd.f32 0.0, %v2805
        %v2807 = vpop.f32.mrb[0].mxu0
        %2808 = vdwg.mxu0
        %v2809 = vadd.f32 %v2545, %v2683
        %v2810 = vadd.f32 %v2546, %v2686
        %v2811 = vadd.f32 %v2547, %v2691
        %v2812 = vadd.f32 %v2548, %v2694
        %v2813 = vadd.f32 %v2549, %v2699
        %v2814 = vadd.f32 %v2550, %v2702
        %v2815 = vadd.f32 %v2551, %v2707
        %v2816 = vadd.f32 %v2552, %v2710
        %v2817 = vadd.f32 %v2553, %v2715
        %v2818 = vadd.f32 %v2554, %v2718
        %v2819 = vadd.f32 %v2555, %v2723
        %v2820 = vadd.f32 %v2556, %v2726
        %v2821 = vadd.f32 %v2557, %v2731
        %v2822 = vadd.f32 %v2558, %v2734
        %v2823 = vadd.f32 %v2559, %v2739
        %v2824 = vadd.f32 %v2560, %v2742
        %v2825 = vadd.f32 %v2561, %v2747
        %v2826 = vadd.f32 %v2562, %v2750
        %v2827 = vadd.f32 %v2563, %v2755
        %v2828 = vadd.f32 %v2564, %v2758
        %v2829 = vadd.f32 %v2565, %v2763
        %v2830 = vadd.f32 %v2566, %v2766
        %v2831 = vadd.f32 %v2567, %v2771
        %v2832 = vadd.f32 %v2568, %v2774
        %v2833 = vadd.f32 %v2569, %v2779
        %v2834 = vadd.f32 %v2570, %v2782
        %v2835 = vadd.f32 %v2571, %v2787
        %v2836 = vadd.f32 %v2572, %v2790
        %v2837 = vadd.f32 %v2573, %v2795
        %v2838 = vadd.f32 %v2574, %v2798
        %v2839 = vadd.f32 %v2575, %v2803
        %v2840 = vadd.f32 %v2576, %v2806
        %v2842 = vshrl.u32 %v303, 16
        %v2844 = vrot.slane %v2842, 4
        %v2845 = vshll.u32 %v303, 16
        %v2847 = vrot.slane %v2845, 5
        %v2848 = vor.u32 %v2844, %v2847
        %v2849 = vrot.slane %v2848, 4
        %v2851 = vshll.u32 %v304, 16
        %v2853 = vrot.slane %v2851, 5
        %v2854 = vsel %vm324, %v2849, %v2853
        %v2855 = vshrl.u32 %v304, 16
        %v2857 = vrot.slane %v2855, 4
        %v2858 = vor.u32 %v2857, %v2853
        %v2859 = vrot.slane %v2858, 4
        %v2861 = vshll.u32 %v305, 16
        %v2863 = vrot.slane %v2861, 5
        %v2864 = vsel %vm324, %v2859, %v2863
        %s2865 = scalar_lea.vmem %s1, 448
        %v2866 = vld [vmem:[%s2865] sm:$0xf]
        %v2867 = vld [vmem:[%s2865 + $0x4] sm:$0xf]
        %v2868 = vld [vmem:[%s2865 + $0x8] sm:$0xf]
        %v2869 = vld [vmem:[%s2865 + $0xc] sm:$0xf]
        %v2870 = vld [vmem:[%s2865 + $0x10] sm:$0xf]
        %v2871 = vld [vmem:[%s2865 + $0x14] sm:$0xf]
        %v2872 = vld [vmem:[%s2865 + $0x18] sm:$0xf]
        %v2873 = vld [vmem:[%s2865 + $0x1c] sm:$0xf]
        %v2874 = vld [vmem:[%s2865 + $0x20] sm:$0xf]
        %v2875 = vld [vmem:[%s2865 + $0x24] sm:$0xf]
        %v2876 = vld [vmem:[%s2865 + $0x28] sm:$0xf]
        %v2877 = vld [vmem:[%s2865 + $0x2c] sm:$0xf]
        %v2878 = vld [vmem:[%s2865 + $0x30] sm:$0xf]
        %v2879 = vld [vmem:[%s2865 + $0x34] sm:$0xf]
        %v2880 = vld [vmem:[%s2865 + $0x38] sm:$0xf]
        %v2881 = vld [vmem:[%s2865 + $0x3c] sm:$0xf]
        %v2882 = vunpack.c.l.b16 %v2854
        %v2883 = vunpack.c.l.b16 %v2864
        %v2884 = vpack.c.b16 %v2883, %v2882
        %v2902 = vunpack.c.l.b16 %v2866
        %v2903 = vunpack.c.l.b16 %v2867
        %v2904 = vunpack.c.l.b16 %v2868
        %v2905 = vunpack.c.l.b16 %v2869
        %v2906 = vunpack.c.l.b16 %v2870
        %v2907 = vunpack.c.l.b16 %v2871
        %v2908 = vunpack.c.l.b16 %v2872
        %v2909 = vunpack.c.l.b16 %v2873
        %v2910 = vunpack.c.l.b16 %v2874
        %v2911 = vunpack.c.l.b16 %v2875
        %v2912 = vunpack.c.l.b16 %v2876
        %v2913 = vunpack.c.l.b16 %v2877
        %v2914 = vunpack.c.l.b16 %v2878
        %v2915 = vunpack.c.l.b16 %v2879
        %v2916 = vunpack.c.l.b16 %v2880
        %v2917 = vunpack.c.l.b16 %v2881
        %v2918 = vpack.c.b16 %v2903, %v2902
        %v2919 = vpack.c.b16 %v2905, %v2904
        %v2920 = vpack.c.b16 %v2907, %v2906
        %v2921 = vpack.c.b16 %v2909, %v2908
        %v2922 = vpack.c.b16 %v2911, %v2910
        %v2923 = vpack.c.b16 %v2913, %v2912
        %v2924 = vpack.c.b16 %v2915, %v2914
        %v2925 = vpack.c.b16 %v2917, %v2916
        %2934 = vmatprep.subr.bf16.mxu0 0
        %2935 = vmatpush1.bf16.msra.mxu0 %v2918
        %2936 = vmatprep.subr.bf16.mxu0 0
        %2937 = vmatpush1.bf16.msra.mxu0 %v2919
        %2938 = vmatprep.subr.bf16.mxu0 0
        %2939 = vmatpush1.bf16.msra.mxu0 %v2920
        %2940 = vmatprep.subr.bf16.mxu0 0
        %2941 = vmatpush1.bf16.msra.mxu0 %v2921
        %2942 = vmatprep.subr.bf16.mxu0 0
        %2943 = vmatpush1.bf16.msra.mxu0 %v2922
        %2944 = vmatprep.subr.bf16.mxu0 0
        %2945 = vmatpush1.bf16.msra.mxu0 %v2923
        %2946 = vmatprep.subr.bf16.mxu0 0
        %2947 = vmatpush1.bf16.msra.mxu0 %v2924
        %2948 = vmatprep.subr.bf16.mxu0 0
        %2949 = vmatpush1.bf16.msra.mxu0 %v2925
        %2950 = vmatprep.subr.bf16.mxu0 0
        %2951 = vmatpush1.bf16.msra.mxu0 0
        %2952 = vmatprep.subr.bf16.mxu0 0
        %2953 = vmatpush1.bf16.msra.mxu0 0
        %2954 = vmatprep.subr.bf16.mxu0 0
        %2955 = vmatpush1.bf16.msra.mxu0 0
        %2956 = vmatprep.subr.bf16.mxu0 0
        %2957 = vmatpush1.bf16.msra.mxu0 0
        %2958 = vmatprep.subr.bf16.mxu0 0
        %2959 = vmatpush1.bf16.msra.mxu0 0
        %2960 = vmatprep.subr.bf16.mxu0 0
        %2961 = vmatpush1.bf16.msra.mxu0 0
        %2962 = vmatprep.subr.bf16.mxu0 0
        %2963 = vmatpush1.bf16.msra.mxu0 0
        %2964 = vmatprep.subr.bf16.mxu0 0
        %2965 = vmatpush1.bf16.msra.mxu0 0
        %2966 = vmatprep.mubr.bf16.mxu0 0
        %2967 = vmatmul.mubr.bf16.gmra.mrb[0].mxu0 %v760
        %v2968 = vpop.f32.mrb[0].mxu0
        %v2969 = vadd.f32 0.0, %v2968
        %v2970 = vpop.f32.mrb[0].mxu0
        %v2971 = vpop.f32.mrb[0].mxu0
        %v2972 = vadd.f32 0.0, %v2971
        %v2973 = vpop.f32.mrb[0].mxu0
        %2974 = vmatprep.mubr.bf16.mxu0 0
        %2975 = vmatmul.mubr.bf16.gmra.mrb[0].mxu0 %v761
        %v2976 = vpop.f32.mrb[0].mxu0
        %v2977 = vadd.f32 0.0, %v2976
        %v2978 = vpop.f32.mrb[0].mxu0
        %v2979 = vpop.f32.mrb[0].mxu0
        %v2980 = vadd.f32 0.0, %v2979
        %v2981 = vpop.f32.mrb[0].mxu0
        %2982 = vmatprep.mubr.bf16.mxu0 0
        %2983 = vmatmul.mubr.bf16.gmra.mrb[0].mxu0 %v762
        %v2984 = vpop.f32.mrb[0].mxu0
        %v2985 = vadd.f32 0.0, %v2984
        %v2986 = vpop.f32.mrb[0].mxu0
        %v2987 = vpop.f32.mrb[0].mxu0
        %v2988 = vadd.f32 0.0, %v2987
        %v2989 = vpop.f32.mrb[0].mxu0
        %2990 = vmatprep.mubr.bf16.mxu0 0
        %2991 = vmatmul.mubr.bf16.gmra.mrb[0].mxu0 %v763
        %v2992 = vpop.f32.mrb[0].mxu0
        %v2993 = vadd.f32 0.0, %v2992
        %v2994 = vpop.f32.mrb[0].mxu0
        %v2995 = vpop.f32.mrb[0].mxu0
        %v2996 = vadd.f32 0.0, %v2995
        %v2997 = vpop.f32.mrb[0].mxu0
        %2998 = vmatprep.mubr.bf16.mxu0 0
        %2999 = vmatmul.mubr.bf16.gmra.mrb[0].mxu0 %v764
        %v3000 = vpop.f32.mrb[0].mxu0
        %v3001 = vadd.f32 0.0, %v3000
        %v3002 = vpop.f32.mrb[0].mxu0
        %v3003 = vpop.f32.mrb[0].mxu0
        %v3004 = vadd.f32 0.0, %v3003
        %v3005 = vpop.f32.mrb[0].mxu0
        %3006 = vmatprep.mubr.bf16.mxu0 0
        %3007 = vmatmul.mubr.bf16.gmra.mrb[0].mxu0 %v765
        %v3008 = vpop.f32.mrb[0].mxu0
        %v3009 = vadd.f32 0.0, %v3008
        %v3010 = vpop.f32.mrb[0].mxu0
        %v3011 = vpop.f32.mrb[0].mxu0
        %v3012 = vadd.f32 0.0, %v3011
        %v3013 = vpop.f32.mrb[0].mxu0
        %3014 = vmatprep.mubr.bf16.mxu0 0
        %3015 = vmatmul.mubr.bf16.gmra.mrb[0].mxu0 %v766
        %v3016 = vpop.f32.mrb[0].mxu0
        %v3017 = vadd.f32 0.0, %v3016
        %v3018 = vpop.f32.mrb[0].mxu0
        %v3019 = vpop.f32.mrb[0].mxu0
        %v3020 = vadd.f32 0.0, %v3019
        %v3021 = vpop.f32.mrb[0].mxu0
        %3022 = vmatprep.mubr.bf16.mxu0 0
        %3023 = vmatmul.mubr.bf16.gmra.mrb[0].mxu0 %v767
        %v3024 = vpop.f32.mrb[0].mxu0
        %v3025 = vadd.f32 0.0, %v3024
        %v3026 = vpop.f32.mrb[0].mxu0
        %v3027 = vpop.f32.mrb[0].mxu0
        %v3028 = vadd.f32 0.0, %v3027
        %v3029 = vpop.f32.mrb[0].mxu0
        %3030 = vmatprep.mubr.bf16.mxu0 0
        %3031 = vmatmul.mubr.bf16.gmra.mrb[0].mxu0 %v768
        %v3032 = vpop.f32.mrb[0].mxu0
        %v3033 = vadd.f32 0.0, %v3032
        %v3034 = vpop.f32.mrb[0].mxu0
        %v3035 = vpop.f32.mrb[0].mxu0
        %v3036 = vadd.f32 0.0, %v3035
        %v3037 = vpop.f32.mrb[0].mxu0
        %3038 = vmatprep.mubr.bf16.mxu0 0
        %3039 = vmatmul.mubr.bf16.gmra.mrb[0].mxu0 %v769
        %v3040 = vpop.f32.mrb[0].mxu0
        %v3041 = vadd.f32 0.0, %v3040
        %v3042 = vpop.f32.mrb[0].mxu0
        %v3043 = vpop.f32.mrb[0].mxu0
        %v3044 = vadd.f32 0.0, %v3043
        %v3045 = vpop.f32.mrb[0].mxu0
        %3046 = vmatprep.mubr.bf16.mxu0 0
        %3047 = vmatmul.mubr.bf16.gmra.mrb[0].mxu0 %v770
        %v3048 = vpop.f32.mrb[0].mxu0
        %v3049 = vadd.f32 0.0, %v3048
        %v3050 = vpop.f32.mrb[0].mxu0
        %v3051 = vpop.f32.mrb[0].mxu0
        %v3052 = vadd.f32 0.0, %v3051
        %v3053 = vpop.f32.mrb[0].mxu0
        %3054 = vmatprep.mubr.bf16.mxu0 0
        %3055 = vmatmul.mubr.bf16.gmra.mrb[0].mxu0 %v771
        %v3056 = vpop.f32.mrb[0].mxu0
        %v3057 = vadd.f32 0.0, %v3056
        %v3058 = vpop.f32.mrb[0].mxu0
        %v3059 = vpop.f32.mrb[0].mxu0
        %v3060 = vadd.f32 0.0, %v3059
        %v3061 = vpop.f32.mrb[0].mxu0
        %3062 = vmatprep.mubr.bf16.mxu0 0
        %3063 = vmatmul.mubr.bf16.gmra.mrb[0].mxu0 %v772
        %v3064 = vpop.f32.mrb[0].mxu0
        %v3065 = vadd.f32 0.0, %v3064
        %v3066 = vpop.f32.mrb[0].mxu0
        %v3067 = vpop.f32.mrb[0].mxu0
        %v3068 = vadd.f32 0.0, %v3067
        %v3069 = vpop.f32.mrb[0].mxu0
        %3070 = vmatprep.mubr.bf16.mxu0 0
        %3071 = vmatmul.mubr.bf16.gmra.mrb[0].mxu0 %v773
        %v3072 = vpop.f32.mrb[0].mxu0
        %v3073 = vadd.f32 0.0, %v3072
        %v3074 = vpop.f32.mrb[0].mxu0
        %v3075 = vpop.f32.mrb[0].mxu0
        %v3076 = vadd.f32 0.0, %v3075
        %v3077 = vpop.f32.mrb[0].mxu0
        %3078 = vmatprep.mubr.bf16.mxu0 0
        %3079 = vmatmul.mubr.bf16.gmra.mrb[0].mxu0 %v2064
        %v3080 = vpop.f32.mrb[0].mxu0
        %v3081 = vadd.f32 0.0, %v3080
        %v3082 = vpop.f32.mrb[0].mxu0
        %v3083 = vpop.f32.mrb[0].mxu0
        %v3084 = vadd.f32 0.0, %v3083
        %v3085 = vpop.f32.mrb[0].mxu0
        %3086 = vmatprep.mubr.bf16.mxu0 0
        %3087 = vmatmul.mubr.bf16.gmra.mrb[0].mxu0 %v2884
        %v3088 = vpop.f32.mrb[0].mxu0
        %v3089 = vadd.f32 0.0, %v3088
        %v3090 = vpop.f32.mrb[0].mxu0
        %v3091 = vpop.f32.mrb[0].mxu0
        %v3092 = vadd.f32 0.0, %v3091
        %v3093 = vpop.f32.mrb[0].mxu0
        %3094 = vdwg.mxu0
        %v3095 = vadd.f32 %v2809, %v2969
        %v3096 = vadd.f32 %v2810, %v2972
        %v3097 = vadd.f32 %v2811, %v2977
        %v3098 = vadd.f32 %v2812, %v2980
        %v3099 = vadd.f32 %v2813, %v2985
        %v3100 = vadd.f32 %v2814, %v2988
        %v3101 = vadd.f32 %v2815, %v2993
        %v3102 = vadd.f32 %v2816, %v2996
        %v3103 = vadd.f32 %v2817, %v3001
        %v3104 = vadd.f32 %v2818, %v3004
        %v3105 = vadd.f32 %v2819, %v3009
        %v3106 = vadd.f32 %v2820, %v3012
        %v3107 = vadd.f32 %v2821, %v3017
        %v3108 = vadd.f32 %v2822, %v3020
        %v3109 = vadd.f32 %v2823, %v3025
        %v3110 = vadd.f32 %v2824, %v3028
        %v3111 = vadd.f32 %v2825, %v3033
        %v3112 = vadd.f32 %v2826, %v3036
        %v3113 = vadd.f32 %v2827, %v3041
        %v3114 = vadd.f32 %v2828, %v3044
        %v3115 = vadd.f32 %v2829, %v3049
        %v3116 = vadd.f32 %v2830, %v3052
        %v3117 = vadd.f32 %v2831, %v3057
        %v3118 = vadd.f32 %v2832, %v3060
        %v3119 = vadd.f32 %v2833, %v3065
        %v3120 = vadd.f32 %v2834, %v3068
        %v3121 = vadd.f32 %v2835, %v3073
        %v3122 = vadd.f32 %v2836, %v3076
        %v3123 = vadd.f32 %v2837, %v3081
        %v3124 = vadd.f32 %v2838, %v3084
        %v3125 = vadd.f32 %v2839, %v3089
        %v3126 = vadd.f32 %v2840, %v3092
        %v3128 = vrot.slane %v303, 5
        %v3129 = vrot.slane %v3128, 4
        %v3130 = vrot.slane %v304, 5
        %v3131 = vsel %vm1322, %v3129, %v3130
        %v3132 = vrot.slane %v3130, 4
        %v3133 = vrot.slane %v305, 5
        %v3134 = vsel %vm1322, %v3132, %v3133
        %s3135 = scalar_lea.vmem %s1, 512
        %v3136 = vld [vmem:[%s3135] sm:$0xf]
        %v3137 = vld [vmem:[%s3135 + $0x4] sm:$0xf]
        %v3138 = vld [vmem:[%s3135 + $0x8] sm:$0xf]
        %v3139 = vld [vmem:[%s3135 + $0xc] sm:$0xf]
        %v3140 = vld [vmem:[%s3135 + $0x10] sm:$0xf]
        %v3141 = vld [vmem:[%s3135 + $0x14] sm:$0xf]
        %v3142 = vld [vmem:[%s3135 + $0x18] sm:$0xf]
        %v3143 = vld [vmem:[%s3135 + $0x1c] sm:$0xf]
        %v3144 = vld [vmem:[%s3135 + $0x20] sm:$0xf]
        %v3145 = vld [vmem:[%s3135 + $0x24] sm:$0xf]
        %v3146 = vld [vmem:[%s3135 + $0x28] sm:$0xf]
        %v3147 = vld [vmem:[%s3135 + $0x2c] sm:$0xf]
        %v3148 = vld [vmem:[%s3135 + $0x30] sm:$0xf]
        %v3149 = vld [vmem:[%s3135 + $0x34] sm:$0xf]
        %v3150 = vld [vmem:[%s3135 + $0x38] sm:$0xf]
        %v3151 = vld [vmem:[%s3135 + $0x3c] sm:$0xf]
        %v3152 = vunpack.c.l.b16 %v3131
        %v3153 = vunpack.c.l.b16 %v3134
        %v3154 = vpack.c.b16 %v3153, %v3152
        %v3172 = vunpack.c.l.b16 %v3136
        %v3173 = vunpack.c.l.b16 %v3137
        %v3174 = vunpack.c.l.b16 %v3138
        %v3175 = vunpack.c.l.b16 %v3139
        %v3176 = vunpack.c.l.b16 %v3140
        %v3177 = vunpack.c.l.b16 %v3141
        %v3178 = vunpack.c.l.b16 %v3142
        %v3179 = vunpack.c.l.b16 %v3143
        %v3180 = vunpack.c.l.b16 %v3144
        %v3181 = vunpack.c.l.b16 %v3145
        %v3182 = vunpack.c.l.b16 %v3146
        %v3183 = vunpack.c.l.b16 %v3147
        %v3184 = vunpack.c.l.b16 %v3148
        %v3185 = vunpack.c.l.b16 %v3149
        %v3186 = vunpack.c.l.b16 %v3150
        %v3187 = vunpack.c.l.b16 %v3151
        %v3188 = vpack.c.b16 %v3173, %v3172
        %v3189 = vpack.c.b16 %v3175, %v3174
        %v3190 = vpack.c.b16 %v3177, %v3176
        %v3191 = vpack.c.b16 %v3179, %v3178
        %v3192 = vpack.c.b16 %v3181, %v3180
        %v3193 = vpack.c.b16 %v3183, %v3182
        %v3194 = vpack.c.b16 %v3185, %v3184
        %v3195 = vpack.c.b16 %v3187, %v3186
        %3204 = vmatprep.subr.bf16.mxu0 0
        %3205 = vmatpush1.bf16.msra.mxu0 %v3188
        %3206 = vmatprep.subr.bf16.mxu0 0
        %3207 = vmatpush1.bf16.msra.mxu0 %v3189
        %3208 = vmatprep.subr.bf16.mxu0 0
        %3209 = vmatpush1.bf16.msra.mxu0 %v3190
        %3210 = vmatprep.subr.bf16.mxu0 0
        %3211 = vmatpush1.bf16.msra.mxu0 %v3191
        %3212 = vmatprep.subr.bf16.mxu0 0
        %3213 = vmatpush1.bf16.msra.mxu0 %v3192
        %3214 = vmatprep.subr.bf16.mxu0 0
        %3215 = vmatpush1.bf16.msra.mxu0 %v3193
        %3216 = vmatprep.subr.bf16.mxu0 0
        %3217 = vmatpush1.bf16.msra.mxu0 %v3194
        %3218 = vmatprep.subr.bf16.mxu0 0
        %3219 = vmatpush1.bf16.msra.mxu0 %v3195
        %3220 = vmatprep.subr.bf16.mxu0 0
        %3221 = vmatpush1.bf16.msra.mxu0 0
        %3222 = vmatprep.subr.bf16.mxu0 0
        %3223 = vmatpush1.bf16.msra.mxu0 0
        %3224 = vmatprep.subr.bf16.mxu0 0
        %3225 = vmatpush1.bf16.msra.mxu0 0
        %3226 = vmatprep.subr.bf16.mxu0 0
        %3227 = vmatpush1.bf16.msra.mxu0 0
        %3228 = vmatprep.subr.bf16.mxu0 0
        %3229 = vmatpush1.bf16.msra.mxu0 0
        %3230 = vmatprep.subr.bf16.mxu0 0
        %3231 = vmatpush1.bf16.msra.mxu0 0
        %3232 = vmatprep.subr.bf16.mxu0 0
        %3233 = vmatpush1.bf16.msra.mxu0 0
        %3234 = vmatprep.subr.bf16.mxu0 0
        %3235 = vmatpush1.bf16.msra.mxu0 0
        %3236 = vmatprep.mubr.bf16.mxu0 0
        %3237 = vmatmul.mubr.bf16.gmra.mrb[0].mxu0 %v1486
        %v3238 = vpop.f32.mrb[0].mxu0
        %v3239 = vadd.f32 0.0, %v3238
        %v3240 = vpop.f32.mrb[0].mxu0
        %v3241 = vpop.f32.mrb[0].mxu0
        %v3242 = vadd.f32 0.0, %v3241
        %v3243 = vpop.f32.mrb[0].mxu0
        %3244 = vmatprep.mubr.bf16.mxu0 0
        %3245 = vmatmul.mubr.bf16.gmra.mrb[0].mxu0 %v1487
        %v3246 = vpop.f32.mrb[0].mxu0
        %v3247 = vadd.f32 0.0, %v3246
        %v3248 = vpop.f32.mrb[0].mxu0
        %v3249 = vpop.f32.mrb[0].mxu0
        %v3250 = vadd.f32 0.0, %v3249
        %v3251 = vpop.f32.mrb[0].mxu0
        %3252 = vmatprep.mubr.bf16.mxu0 0
        %3253 = vmatmul.mubr.bf16.gmra.mrb[0].mxu0 %v1488
        %v3254 = vpop.f32.mrb[0].mxu0
        %v3255 = vadd.f32 0.0, %v3254
        %v3256 = vpop.f32.mrb[0].mxu0
        %v3257 = vpop.f32.mrb[0].mxu0
        %v3258 = vadd.f32 0.0, %v3257
        %v3259 = vpop.f32.mrb[0].mxu0
        %3260 = vmatprep.mubr.bf16.mxu0 0
        %3261 = vmatmul.mubr.bf16.gmra.mrb[0].mxu0 %v1489
        %v3262 = vpop.f32.mrb[0].mxu0
        %v3263 = vadd.f32 0.0, %v3262
        %v3264 = vpop.f32.mrb[0].mxu0
        %v3265 = vpop.f32.mrb[0].mxu0
        %v3266 = vadd.f32 0.0, %v3265
        %v3267 = vpop.f32.mrb[0].mxu0
        %3268 = vmatprep.mubr.bf16.mxu0 0
        %3269 = vmatmul.mubr.bf16.gmra.mrb[0].mxu0 %v1490
        %v3270 = vpop.f32.mrb[0].mxu0
        %v3271 = vadd.f32 0.0, %v3270
        %v3272 = vpop.f32.mrb[0].mxu0
        %v3273 = vpop.f32.mrb[0].mxu0
        %v3274 = vadd.f32 0.0, %v3273
        %v3275 = vpop.f32.mrb[0].mxu0
        %3276 = vmatprep.mubr.bf16.mxu0 0
        %3277 = vmatmul.mubr.bf16.gmra.mrb[0].mxu0 %v1491
        %v3278 = vpop.f32.mrb[0].mxu0
        %v3279 = vadd.f32 0.0, %v3278
        %v3280 = vpop.f32.mrb[0].mxu0
        %v3281 = vpop.f32.mrb[0].mxu0
        %v3282 = vadd.f32 0.0, %v3281
        %v3283 = vpop.f32.mrb[0].mxu0
        %3284 = vmatprep.mubr.bf16.mxu0 0
        %3285 = vmatmul.mubr.bf16.gmra.mrb[0].mxu0 %v1492
        %v3286 = vpop.f32.mrb[0].mxu0
        %v3287 = vadd.f32 0.0, %v3286
        %v3288 = vpop.f32.mrb[0].mxu0
        %v3289 = vpop.f32.mrb[0].mxu0
        %v3290 = vadd.f32 0.0, %v3289
        %v3291 = vpop.f32.mrb[0].mxu0
        %3292 = vmatprep.mubr.bf16.mxu0 0
        %3293 = vmatmul.mubr.bf16.gmra.mrb[0].mxu0 %v1493
        %v3294 = vpop.f32.mrb[0].mxu0
        %v3295 = vadd.f32 0.0, %v3294
        %v3296 = vpop.f32.mrb[0].mxu0
        %v3297 = vpop.f32.mrb[0].mxu0
        %v3298 = vadd.f32 0.0, %v3297
        %v3299 = vpop.f32.mrb[0].mxu0
        %3300 = vmatprep.mubr.bf16.mxu0 0
        %3301 = vmatmul.mubr.bf16.gmra.mrb[0].mxu0 %v1494
        %v3302 = vpop.f32.mrb[0].mxu0
        %v3303 = vadd.f32 0.0, %v3302
        %v3304 = vpop.f32.mrb[0].mxu0
        %v3305 = vpop.f32.mrb[0].mxu0
        %v3306 = vadd.f32 0.0, %v3305
        %v3307 = vpop.f32.mrb[0].mxu0
        %3308 = vmatprep.mubr.bf16.mxu0 0
        %3309 = vmatmul.mubr.bf16.gmra.mrb[0].mxu0 %v1495
        %v3310 = vpop.f32.mrb[0].mxu0
        %v3311 = vadd.f32 0.0, %v3310
        %v3312 = vpop.f32.mrb[0].mxu0
        %v3313 = vpop.f32.mrb[0].mxu0
        %v3314 = vadd.f32 0.0, %v3313
        %v3315 = vpop.f32.mrb[0].mxu0
        %3316 = vmatprep.mubr.bf16.mxu0 0
        %3317 = vmatmul.mubr.bf16.gmra.mrb[0].mxu0 %v1496
        %v3318 = vpop.f32.mrb[0].mxu0
        %v3319 = vadd.f32 0.0, %v3318
        %v3320 = vpop.f32.mrb[0].mxu0
        %v3321 = vpop.f32.mrb[0].mxu0
        %v3322 = vadd.f32 0.0, %v3321
        %v3323 = vpop.f32.mrb[0].mxu0
        %3324 = vmatprep.mubr.bf16.mxu0 0
        %3325 = vmatmul.mubr.bf16.gmra.mrb[0].mxu0 %v1497
        %v3326 = vpop.f32.mrb[0].mxu0
        %v3327 = vadd.f32 0.0, %v3326
        %v3328 = vpop.f32.mrb[0].mxu0
        %v3329 = vpop.f32.mrb[0].mxu0
        %v3330 = vadd.f32 0.0, %v3329
        %v3331 = vpop.f32.mrb[0].mxu0
        %3332 = vmatprep.mubr.bf16.mxu0 0
        %3333 = vmatmul.mubr.bf16.gmra.mrb[0].mxu0 %v1498
        %v3334 = vpop.f32.mrb[0].mxu0
        %v3335 = vadd.f32 0.0, %v3334
        %v3336 = vpop.f32.mrb[0].mxu0
        %v3337 = vpop.f32.mrb[0].mxu0
        %v3338 = vadd.f32 0.0, %v3337
        %v3339 = vpop.f32.mrb[0].mxu0
        %3340 = vmatprep.mubr.bf16.mxu0 0
        %3341 = vmatmul.mubr.bf16.gmra.mrb[0].mxu0 %v1499
        %v3342 = vpop.f32.mrb[0].mxu0
        %v3343 = vadd.f32 0.0, %v3342
        %v3344 = vpop.f32.mrb[0].mxu0
        %v3345 = vpop.f32.mrb[0].mxu0
        %v3346 = vadd.f32 0.0, %v3345
        %v3347 = vpop.f32.mrb[0].mxu0
        %3348 = vmatprep.mubr.bf16.mxu0 0
        %3349 = vmatmul.mubr.bf16.gmra.mrb[0].mxu0 %v2334
        %v3350 = vpop.f32.mrb[0].mxu0
        %v3351 = vadd.f32 0.0, %v3350
        %v3352 = vpop.f32.mrb[0].mxu0
        %v3353 = vpop.f32.mrb[0].mxu0
        %v3354 = vadd.f32 0.0, %v3353
        %v3355 = vpop.f32.mrb[0].mxu0
        %3356 = vmatprep.mubr.bf16.mxu0 0
        %3357 = vmatmul.mubr.bf16.gmra.mrb[0].mxu0 %v3154
        %v3358 = vpop.f32.mrb[0].mxu0
        %v3359 = vadd.f32 0.0, %v3358
        %v3360 = vpop.f32.mrb[0].mxu0
        %v3361 = vpop.f32.mrb[0].mxu0
        %v3362 = vadd.f32 0.0, %v3361
        %v3363 = vpop.f32.mrb[0].mxu0
        %3364 = vdwg.mxu0
        %v3365 = vadd.f32 %v3095, %v3239
        %v3366 = vadd.f32 %v3096, %v3242
        %v3367 = vadd.f32 %v3097, %v3247
        %v3368 = vadd.f32 %v3098, %v3250
        %v3369 = vadd.f32 %v3099, %v3255
        %v3370 = vadd.f32 %v3100, %v3258
        %v3371 = vadd.f32 %v3101, %v3263
        %v3372 = vadd.f32 %v3102, %v3266
        %v3373 = vadd.f32 %v3103, %v3271
        %v3374 = vadd.f32 %v3104, %v3274
        %v3375 = vadd.f32 %v3105, %v3279
        %v3376 = vadd.f32 %v3106, %v3282
        %v3377 = vadd.f32 %v3107, %v3287
        %v3378 = vadd.f32 %v3108, %v3290
        %v3379 = vadd.f32 %v3109, %v3295
        %v3380 = vadd.f32 %v3110, %v3298
        %v3381 = vadd.f32 %v3111, %v3303
        %v3382 = vadd.f32 %v3112, %v3306
        %v3383 = vadd.f32 %v3113, %v3311
        %v3384 = vadd.f32 %v3114, %v3314
        %v3385 = vadd.f32 %v3115, %v3319
        %v3386 = vadd.f32 %v3116, %v3322
        %v3387 = vadd.f32 %v3117, %v3327
        %v3388 = vadd.f32 %v3118, %v3330
        %v3389 = vadd.f32 %v3119, %v3335
        %v3390 = vadd.f32 %v3120, %v3338
        %v3391 = vadd.f32 %v3121, %v3343
        %v3392 = vadd.f32 %v3122, %v3346
        %v3393 = vadd.f32 %v3123, %v3351
        %v3394 = vadd.f32 %v3124, %v3354
        %v3395 = vadd.f32 %v3125, %v3359
        %v3396 = vadd.f32 %v3126, %v3362
        %v3397 = vlaneseq
        %v3398 = vshrl.u32 %v3397, 7
        %v3399 = vsub.s32 0, %v3398
        %v3400 = vrot.slane %v251, %v3399
        %v3401 = vmul.f32 %v3365, %v3400
        %v3402 = vmul.f32 %v3366, %v3400
        %v3403 = vmul.f32 %v3367, %v3400
        %v3404 = vmul.f32 %v3368, %v3400
        %v3405 = vmul.f32 %v3369, %v3400
        %v3406 = vmul.f32 %v3370, %v3400
        %v3407 = vmul.f32 %v3371, %v3400
        %v3408 = vmul.f32 %v3372, %v3400
        %v3409 = vmul.f32 %v3373, %v3400
        %v3410 = vmul.f32 %v3374, %v3400
        %v3411 = vmul.f32 %v3375, %v3400
        %v3412 = vmul.f32 %v3376, %v3400
        %v3413 = vmul.f32 %v3377, %v3400
        %v3414 = vmul.f32 %v3378, %v3400
        %v3415 = vmul.f32 %v3379, %v3400
        %v3416 = vmul.f32 %v3380, %v3400
        %v3417 = vmul.f32 %v3381, %v3400
        %v3418 = vmul.f32 %v3382, %v3400
        %v3419 = vmul.f32 %v3383, %v3400
        %v3420 = vmul.f32 %v3384, %v3400
        %v3421 = vmul.f32 %v3385, %v3400
        %v3422 = vmul.f32 %v3386, %v3400
        %v3423 = vmul.f32 %v3387, %v3400
        %v3424 = vmul.f32 %v3388, %v3400
        %v3425 = vmul.f32 %v3389, %v3400
        %v3426 = vmul.f32 %v3390, %v3400
        %v3427 = vmul.f32 %v3391, %v3400
        %v3428 = vmul.f32 %v3392, %v3400
        %v3429 = vmul.f32 %v3393, %v3400
        %v3430 = vmul.f32 %v3394, %v3400
        %v3431 = vmul.f32 %v3395, %v3400
        %v3432 = vmul.f32 %v3396, %v3400
        %v3433 = vlaneseq
        %v3434 = vshrl.u32 %v3433, 7
        %v3435 = vsub.s32 1, %v3434
        %v3436 = vrot.slane %v251, %v3435
        %v3437 = vadd.f32 %v3401, %v3436
        %v3438 = vadd.f32 %v3402, %v3436
        %v3439 = vadd.f32 %v3403, %v3436
        %v3440 = vadd.f32 %v3404, %v3436
        %v3441 = vadd.f32 %v3405, %v3436
        %v3442 = vadd.f32 %v3406, %v3436
        %v3443 = vadd.f32 %v3407, %v3436
        %v3444 = vadd.f32 %v3408, %v3436
        %v3445 = vadd.f32 %v3409, %v3436
        %v3446 = vadd.f32 %v3410, %v3436
        %v3447 = vadd.f32 %v3411, %v3436
        %v3448 = vadd.f32 %v3412, %v3436
        %v3449 = vadd.f32 %v3413, %v3436
        %v3450 = vadd.f32 %v3414, %v3436
        %v3451 = vadd.f32 %v3415, %v3436
        %v3452 = vadd.f32 %v3416, %v3436
        %v3453 = vadd.f32 %v3417, %v3436
        %v3454 = vadd.f32 %v3418, %v3436
        %v3455 = vadd.f32 %v3419, %v3436
        %v3456 = vadd.f32 %v3420, %v3436
        %v3457 = vadd.f32 %v3421, %v3436
        %v3458 = vadd.f32 %v3422, %v3436
        %v3459 = vadd.f32 %v3423, %v3436
        %v3460 = vadd.f32 %v3424, %v3436
        %v3461 = vadd.f32 %v3425, %v3436
        %v3462 = vadd.f32 %v3426, %v3436
        %v3463 = vadd.f32 %v3427, %v3436
        %v3464 = vadd.f32 %v3428, %v3436
        %v3465 = vadd.f32 %v3429, %v3436
        %v3466 = vadd.f32 %v3430, %v3436
        %v3467 = vadd.f32 %v3431, %v3436
        %v3468 = vadd.f32 %v3432, %v3436
        %v3469 = vmax.f32 %v3437, 0.0
        %v3470 = vmax.f32 %v3438, 0.0
        %v3471 = vmax.f32 %v3439, 0.0
        %v3472 = vmax.f32 %v3440, 0.0
        %v3473 = vmax.f32 %v3441, 0.0
        %v3474 = vmax.f32 %v3442, 0.0
        %v3475 = vmax.f32 %v3443, 0.0
        %v3476 = vmax.f32 %v3444, 0.0
        %v3477 = vmax.f32 %v3445, 0.0
        %v3478 = vmax.f32 %v3446, 0.0
        %v3479 = vmax.f32 %v3447, 0.0
        %v3480 = vmax.f32 %v3448, 0.0
        %v3481 = vmax.f32 %v3449, 0.0
        %v3482 = vmax.f32 %v3450, 0.0
        %v3483 = vmax.f32 %v3451, 0.0
        %v3484 = vmax.f32 %v3452, 0.0
        %v3485 = vmax.f32 %v3453, 0.0
        %v3486 = vmax.f32 %v3454, 0.0
        %v3487 = vmax.f32 %v3455, 0.0
        %v3488 = vmax.f32 %v3456, 0.0
        %v3489 = vmax.f32 %v3457, 0.0
        %v3490 = vmax.f32 %v3458, 0.0
        %v3491 = vmax.f32 %v3459, 0.0
        %v3492 = vmax.f32 %v3460, 0.0
        %v3493 = vmax.f32 %v3461, 0.0
        %v3494 = vmax.f32 %v3462, 0.0
        %v3495 = vmax.f32 %v3463, 0.0
        %v3496 = vmax.f32 %v3464, 0.0
        %v3497 = vmax.f32 %v3465, 0.0
        %v3498 = vmax.f32 %v3466, 0.0
        %v3499 = vmax.f32 %v3467, 0.0
        %v3500 = vmax.f32 %v3468, 0.0
        %v3501 = vld [vmem:[%s2] sm:$0xff]
        %v3502 = vld [vmem:[%s2 + $0x8] sm:$0xff]
        %v3503 = vld [vmem:[%s2 + $0x10] sm:$0xff]
        %v3504 = vld [vmem:[%s2 + $0x18] sm:$0xff]
        %v3505 = vld [vmem:[%s2 + $0x20] sm:$0xff]
        %v3506 = vld [vmem:[%s2 + $0x28] sm:$0xff]
        %v3507 = vld [vmem:[%s2 + $0x30] sm:$0xff]
        %v3508 = vld [vmem:[%s2 + $0x38] sm:$0xff]
        %v3509 = vld [vmem:[%s2 + $0x40] sm:$0xff]
        %v3510 = vld [vmem:[%s2 + $0x48] sm:$0xff]
        %v3511 = vld [vmem:[%s2 + $0x50] sm:$0xff]
        %v3512 = vld [vmem:[%s2 + $0x58] sm:$0xff]
        %v3513 = vld [vmem:[%s2 + $0x60] sm:$0xff]
        %v3514 = vld [vmem:[%s2 + $0x68] sm:$0xff]
        %v3515 = vld [vmem:[%s2 + $0x70] sm:$0xff]
        %v3516 = vld [vmem:[%s2 + $0x78] sm:$0xff]
        %v3533 = vunpack.c.l.b16 %v3501
        %v3534 = vunpack.c.h.b16 %v3501
        %v3535 = vunpack.c.l.b16 %v3502
        %v3536 = vunpack.c.h.b16 %v3502
        %v3537 = vunpack.c.l.b16 %v3503
        %v3538 = vunpack.c.h.b16 %v3503
        %v3539 = vunpack.c.l.b16 %v3504
        %v3540 = vunpack.c.h.b16 %v3504
        %v3541 = vunpack.c.l.b16 %v3505
        %v3542 = vunpack.c.h.b16 %v3505
        %v3543 = vunpack.c.l.b16 %v3506
        %v3544 = vunpack.c.h.b16 %v3506
        %v3545 = vunpack.c.l.b16 %v3507
        %v3546 = vunpack.c.h.b16 %v3507
        %v3547 = vunpack.c.l.b16 %v3508
        %v3548 = vunpack.c.h.b16 %v3508
        %v3549 = vunpack.c.l.b16 %v3509
        %v3550 = vunpack.c.h.b16 %v3509
        %v3551 = vunpack.c.l.b16 %v3510
        %v3552 = vunpack.c.h.b16 %v3510
        %v3553 = vunpack.c.l.b16 %v3511
        %v3554 = vunpack.c.h.b16 %v3511
        %v3555 = vunpack.c.l.b16 %v3512
        %v3556 = vunpack.c.h.b16 %v3512
        %v3557 = vunpack.c.l.b16 %v3513
        %v3558 = vunpack.c.h.b16 %v3513
        %v3559 = vunpack.c.l.b16 %v3514
        %v3560 = vunpack.c.h.b16 %v3514
        %v3561 = vunpack.c.l.b16 %v3515
        %v3562 = vunpack.c.h.b16 %v3515
        %v3563 = vunpack.c.l.b16 %v3516
        %v3564 = vunpack.c.h.b16 %v3516
        %v3565 = vpack.c.b16 %v3535, %v3533
        %v3566 = vpack.c.b16 %v3536, %v3534
        %v3567 = vpack.c.b16 %v3539, %v3537
        %v3568 = vpack.c.b16 %v3540, %v3538
        %v3569 = vpack.c.b16 %v3543, %v3541
        %v3570 = vpack.c.b16 %v3544, %v3542
        %v3571 = vpack.c.b16 %v3547, %v3545
        %v3572 = vpack.c.b16 %v3548, %v3546
        %v3573 = vpack.c.b16 %v3551, %v3549
        %v3574 = vpack.c.b16 %v3552, %v3550
        %v3575 = vpack.c.b16 %v3555, %v3553
        %v3576 = vpack.c.b16 %v3556, %v3554
        %v3577 = vpack.c.b16 %v3559, %v3557
        %v3578 = vpack.c.b16 %v3560, %v3558
        %v3579 = vpack.c.b16 %v3563, %v3561
        %v3580 = vpack.c.b16 %v3564, %v3562
        %3597 = vmatprep.subr.bf16.mxu0 %v3566
        %3598 = vmatpush1.bf16.msra.mxu0 %v3565
        %3599 = vmatprep.subr.bf16.mxu0 %v3568
        %3600 = vmatpush1.bf16.msra.mxu0 %v3567
        %3601 = vmatprep.subr.bf16.mxu0 %v3570
        %3602 = vmatpush1.bf16.msra.mxu0 %v3569
        %3603 = vmatprep.subr.bf16.mxu0 %v3572
        %3604 = vmatpush1.bf16.msra.mxu0 %v3571
        %3605 = vmatprep.subr.bf16.mxu0 %v3574
        %3606 = vmatpush1.bf16.msra.mxu0 %v3573
        %3607 = vmatprep.subr.bf16.mxu0 %v3576
        %3608 = vmatpush1.bf16.msra.mxu0 %v3575
        %3609 = vmatprep.subr.bf16.mxu0 %v3578
        %3610 = vmatpush1.bf16.msra.mxu0 %v3577
        %3611 = vmatprep.subr.bf16.mxu0 %v3580
        %3612 = vmatpush1.bf16.msra.mxu0 %v3579
        %3613 = vmatprep.subr.bf16.mxu0 0
        %3614 = vmatpush1.bf16.msra.mxu0 0
        %3615 = vmatprep.subr.bf16.mxu0 0
        %3616 = vmatpush1.bf16.msra.mxu0 0
        %3617 = vmatprep.subr.bf16.mxu0 0
        %3618 = vmatpush1.bf16.msra.mxu0 0
        %3619 = vmatprep.subr.bf16.mxu0 0
        %3620 = vmatpush1.bf16.msra.mxu0 0
        %3621 = vmatprep.subr.bf16.mxu0 0
        %3622 = vmatpush1.bf16.msra.mxu0 0
        %3623 = vmatprep.subr.bf16.mxu0 0
        %3624 = vmatpush1.bf16.msra.mxu0 0
        %3625 = vmatprep.subr.bf16.mxu0 0
        %3626 = vmatpush1.bf16.msra.mxu0 0
        %3627 = vmatprep.subr.bf16.mxu0 0
        %3628 = vmatpush1.bf16.msra.mxu0 0
        %3629 = vmatprep.mubr.bf16.mxu0 0
        %3630 = vmatmul.mubr.bf16.gmra.mrb[0].mxu0 %v759
        %v3631 = vpop.f32.mrb[0].mxu0
        %v3632 = vadd.f32 0.0, %v3631
        %v3633 = vpop.f32.mrb[0].mxu0
        %v3634 = vadd.f32 0.0, %v3633
        %v3635 = vpop.f32.mrb[0].mxu0
        %v3636 = vadd.f32 0.0, %v3635
        %v3637 = vpop.f32.mrb[0].mxu0
        %v3638 = vadd.f32 0.0, %v3637
        %3639 = vmatprep.mubr.bf16.mxu0 0
        %3640 = vmatmul.mubr.bf16.gmra.mrb[0].mxu0 %v760
        %v3641 = vpop.f32.mrb[0].mxu0
        %v3642 = vadd.f32 0.0, %v3641
        %v3643 = vpop.f32.mrb[0].mxu0
        %v3644 = vadd.f32 0.0, %v3643
        %v3645 = vpop.f32.mrb[0].mxu0
        %v3646 = vadd.f32 0.0, %v3645
        %v3647 = vpop.f32.mrb[0].mxu0
        %v3648 = vadd.f32 0.0, %v3647
        %3649 = vmatprep.mubr.bf16.mxu0 0
        %3650 = vmatmul.mubr.bf16.gmra.mrb[0].mxu0 %v761
        %v3651 = vpop.f32.mrb[0].mxu0
        %v3652 = vadd.f32 0.0, %v3651
        %v3653 = vpop.f32.mrb[0].mxu0
        %v3654 = vadd.f32 0.0, %v3653
        %v3655 = vpop.f32.mrb[0].mxu0
        %v3656 = vadd.f32 0.0, %v3655
        %v3657 = vpop.f32.mrb[0].mxu0
        %v3658 = vadd.f32 0.0, %v3657
        %3659 = vmatprep.mubr.bf16.mxu0 0
        %3660 = vmatmul.mubr.bf16.gmra.mrb[0].mxu0 %v762
        %v3661 = vpop.f32.mrb[0].mxu0
        %v3662 = vadd.f32 0.0, %v3661
        %v3663 = vpop.f32.mrb[0].mxu0
        %v3664 = vadd.f32 0.0, %v3663
        %v3665 = vpop.f32.mrb[0].mxu0
        %v3666 = vadd.f32 0.0, %v3665
        %v3667 = vpop.f32.mrb[0].mxu0
        %v3668 = vadd.f32 0.0, %v3667
        %3669 = vmatprep.mubr.bf16.mxu0 0
        %3670 = vmatmul.mubr.bf16.gmra.mrb[0].mxu0 %v763
        %v3671 = vpop.f32.mrb[0].mxu0
        %v3672 = vadd.f32 0.0, %v3671
        %v3673 = vpop.f32.mrb[0].mxu0
        %v3674 = vadd.f32 0.0, %v3673
        %v3675 = vpop.f32.mrb[0].mxu0
        %v3676 = vadd.f32 0.0, %v3675
        %v3677 = vpop.f32.mrb[0].mxu0
        %v3678 = vadd.f32 0.0, %v3677
        %3679 = vmatprep.mubr.bf16.mxu0 0
        %3680 = vmatmul.mubr.bf16.gmra.mrb[0].mxu0 %v764
        %v3681 = vpop.f32.mrb[0].mxu0
        %v3682 = vadd.f32 0.0, %v3681
        %v3683 = vpop.f32.mrb[0].mxu0
        %v3684 = vadd.f32 0.0, %v3683
        %v3685 = vpop.f32.mrb[0].mxu0
        %v3686 = vadd.f32 0.0, %v3685
        %v3687 = vpop.f32.mrb[0].mxu0
        %v3688 = vadd.f32 0.0, %v3687
        %3689 = vmatprep.mubr.bf16.mxu0 0
        %3690 = vmatmul.mubr.bf16.gmra.mrb[0].mxu0 %v765
        %v3691 = vpop.f32.mrb[0].mxu0
        %v3692 = vadd.f32 0.0, %v3691
        %v3693 = vpop.f32.mrb[0].mxu0
        %v3694 = vadd.f32 0.0, %v3693
        %v3695 = vpop.f32.mrb[0].mxu0
        %v3696 = vadd.f32 0.0, %v3695
        %v3697 = vpop.f32.mrb[0].mxu0
        %v3698 = vadd.f32 0.0, %v3697
        %3699 = vmatprep.mubr.bf16.mxu0 0
        %3700 = vmatmul.mubr.bf16.gmra.mrb[0].mxu0 %v766
        %v3701 = vpop.f32.mrb[0].mxu0
        %v3702 = vadd.f32 0.0, %v3701
        %v3703 = vpop.f32.mrb[0].mxu0
        %v3704 = vadd.f32 0.0, %v3703
        %v3705 = vpop.f32.mrb[0].mxu0
        %v3706 = vadd.f32 0.0, %v3705
        %v3707 = vpop.f32.mrb[0].mxu0
        %v3708 = vadd.f32 0.0, %v3707
        %3709 = vmatprep.mubr.bf16.mxu0 0
        %3710 = vmatmul.mubr.bf16.gmra.mrb[0].mxu0 %v767
        %v3711 = vpop.f32.mrb[0].mxu0
        %v3712 = vadd.f32 0.0, %v3711
        %v3713 = vpop.f32.mrb[0].mxu0
        %v3714 = vadd.f32 0.0, %v3713
        %v3715 = vpop.f32.mrb[0].mxu0
        %v3716 = vadd.f32 0.0, %v3715
        %v3717 = vpop.f32.mrb[0].mxu0
        %v3718 = vadd.f32 0.0, %v3717
        %3719 = vmatprep.mubr.bf16.mxu0 0
        %3720 = vmatmul.mubr.bf16.gmra.mrb[0].mxu0 %v768
        %v3721 = vpop.f32.mrb[0].mxu0
        %v3722 = vadd.f32 0.0, %v3721
        %v3723 = vpop.f32.mrb[0].mxu0
        %v3724 = vadd.f32 0.0, %v3723
        %v3725 = vpop.f32.mrb[0].mxu0
        %v3726 = vadd.f32 0.0, %v3725
        %v3727 = vpop.f32.mrb[0].mxu0
        %v3728 = vadd.f32 0.0, %v3727
        %3729 = vmatprep.mubr.bf16.mxu0 0
        %3730 = vmatmul.mubr.bf16.gmra.mrb[0].mxu0 %v769
        %v3731 = vpop.f32.mrb[0].mxu0
        %v3732 = vadd.f32 0.0, %v3731
        %v3733 = vpop.f32.mrb[0].mxu0
        %v3734 = vadd.f32 0.0, %v3733
        %v3735 = vpop.f32.mrb[0].mxu0
        %v3736 = vadd.f32 0.0, %v3735
        %v3737 = vpop.f32.mrb[0].mxu0
        %v3738 = vadd.f32 0.0, %v3737
        %3739 = vmatprep.mubr.bf16.mxu0 0
        %3740 = vmatmul.mubr.bf16.gmra.mrb[0].mxu0 %v770
        %v3741 = vpop.f32.mrb[0].mxu0
        %v3742 = vadd.f32 0.0, %v3741
        %v3743 = vpop.f32.mrb[0].mxu0
        %v3744 = vadd.f32 0.0, %v3743
        %v3745 = vpop.f32.mrb[0].mxu0
        %v3746 = vadd.f32 0.0, %v3745
        %v3747 = vpop.f32.mrb[0].mxu0
        %v3748 = vadd.f32 0.0, %v3747
        %3749 = vmatprep.mubr.bf16.mxu0 0
        %3750 = vmatmul.mubr.bf16.gmra.mrb[0].mxu0 %v771
        %v3751 = vpop.f32.mrb[0].mxu0
        %v3752 = vadd.f32 0.0, %v3751
        %v3753 = vpop.f32.mrb[0].mxu0
        %v3754 = vadd.f32 0.0, %v3753
        %v3755 = vpop.f32.mrb[0].mxu0
        %v3756 = vadd.f32 0.0, %v3755
        %v3757 = vpop.f32.mrb[0].mxu0
        %v3758 = vadd.f32 0.0, %v3757
        %3759 = vmatprep.mubr.bf16.mxu0 0
        %3760 = vmatmul.mubr.bf16.gmra.mrb[0].mxu0 %v772
        %v3761 = vpop.f32.mrb[0].mxu0
        %v3762 = vadd.f32 0.0, %v3761
        %v3763 = vpop.f32.mrb[0].mxu0
        %v3764 = vadd.f32 0.0, %v3763
        %v3765 = vpop.f32.mrb[0].mxu0
        %v3766 = vadd.f32 0.0, %v3765
        %v3767 = vpop.f32.mrb[0].mxu0
        %v3768 = vadd.f32 0.0, %v3767
        %3769 = vmatprep.mubr.bf16.mxu0 0
        %3770 = vmatmul.mubr.bf16.gmra.mrb[0].mxu0 %v773
        %v3771 = vpop.f32.mrb[0].mxu0
        %v3772 = vadd.f32 0.0, %v3771
        %v3773 = vpop.f32.mrb[0].mxu0
        %v3774 = vadd.f32 0.0, %v3773
        %v3775 = vpop.f32.mrb[0].mxu0
        %v3776 = vadd.f32 0.0, %v3775
        %v3777 = vpop.f32.mrb[0].mxu0
        %v3778 = vadd.f32 0.0, %v3777
        %3779 = vmatprep.mubr.bf16.mxu0 0
        %3780 = vmatmul.mubr.bf16.gmra.mrb[0].mxu0 %v2064
        %v3781 = vpop.f32.mrb[0].mxu0
        %v3782 = vadd.f32 0.0, %v3781
        %v3783 = vpop.f32.mrb[0].mxu0
        %v3784 = vadd.f32 0.0, %v3783
        %v3785 = vpop.f32.mrb[0].mxu0
        %v3786 = vadd.f32 0.0, %v3785
        %v3787 = vpop.f32.mrb[0].mxu0
        %v3788 = vadd.f32 0.0, %v3787
        %3789 = vdwg.mxu0
        %v3790 = vlaneseq
        %v3791 = vshrl.u32 %v3790, 7
        %v3792 = vsub.s32 2, %v3791
        %v3793 = vrot.slane %v251, %v3792
        %v3794 = vmul.f32 %v3632, %v3793
        %v3795 = vmul.f32 %v3636, %v3793
        %v3796 = vmul.f32 %v3642, %v3793
        %v3797 = vmul.f32 %v3646, %v3793
        %v3798 = vmul.f32 %v3652, %v3793
        %v3799 = vmul.f32 %v3656, %v3793
        %v3800 = vmul.f32 %v3662, %v3793
        %v3801 = vmul.f32 %v3666, %v3793
        %v3802 = vmul.f32 %v3672, %v3793
        %v3803 = vmul.f32 %v3676, %v3793
        %v3804 = vmul.f32 %v3682, %v3793
        %v3805 = vmul.f32 %v3686, %v3793
        %v3806 = vmul.f32 %v3692, %v3793
        %v3807 = vmul.f32 %v3696, %v3793
        %v3808 = vmul.f32 %v3702, %v3793
        %v3809 = vmul.f32 %v3706, %v3793
        %v3810 = vmul.f32 %v3712, %v3793
        %v3811 = vmul.f32 %v3716, %v3793
        %v3812 = vmul.f32 %v3722, %v3793
        %v3813 = vmul.f32 %v3726, %v3793
        %v3814 = vmul.f32 %v3732, %v3793
        %v3815 = vmul.f32 %v3736, %v3793
        %v3816 = vmul.f32 %v3742, %v3793
        %v3817 = vmul.f32 %v3746, %v3793
        %v3818 = vmul.f32 %v3752, %v3793
        %v3819 = vmul.f32 %v3756, %v3793
        %v3820 = vmul.f32 %v3762, %v3793
        %v3821 = vmul.f32 %v3766, %v3793
        %v3822 = vmul.f32 %v3772, %v3793
        %v3823 = vmul.f32 %v3776, %v3793
        %v3824 = vmul.f32 %v3782, %v3793
        %v3825 = vmul.f32 %v3786, %v3793
        %v3826 = vlaneseq
        %v3827 = vshrl.u32 %v3826, 7
        %v3828 = vsub.s32 3, %v3827
        %v3829 = vrot.slane %v251, %v3828
        %v3830 = vadd.f32 %v3794, %v3829
        %v3831 = vadd.f32 %v3795, %v3829
        %v3832 = vadd.f32 %v3796, %v3829
        %v3833 = vadd.f32 %v3797, %v3829
        %v3834 = vadd.f32 %v3798, %v3829
        %v3835 = vadd.f32 %v3799, %v3829
        %v3836 = vadd.f32 %v3800, %v3829
        %v3837 = vadd.f32 %v3801, %v3829
        %v3838 = vadd.f32 %v3802, %v3829
        %v3839 = vadd.f32 %v3803, %v3829
        %v3840 = vadd.f32 %v3804, %v3829
        %v3841 = vadd.f32 %v3805, %v3829
        %v3842 = vadd.f32 %v3806, %v3829
        %v3843 = vadd.f32 %v3807, %v3829
        %v3844 = vadd.f32 %v3808, %v3829
        %v3845 = vadd.f32 %v3809, %v3829
        %v3846 = vadd.f32 %v3810, %v3829
        %v3847 = vadd.f32 %v3811, %v3829
        %v3848 = vadd.f32 %v3812, %v3829
        %v3849 = vadd.f32 %v3813, %v3829
        %v3850 = vadd.f32 %v3814, %v3829
        %v3851 = vadd.f32 %v3815, %v3829
        %v3852 = vadd.f32 %v3816, %v3829
        %v3853 = vadd.f32 %v3817, %v3829
        %v3854 = vadd.f32 %v3818, %v3829
        %v3855 = vadd.f32 %v3819, %v3829
        %v3856 = vadd.f32 %v3820, %v3829
        %v3857 = vadd.f32 %v3821, %v3829
        %v3858 = vadd.f32 %v3822, %v3829
        %v3859 = vadd.f32 %v3823, %v3829
        %v3860 = vadd.f32 %v3824, %v3829
        %v3861 = vadd.f32 %v3825, %v3829
        %v3862 = vpack.c.bf16 %v3831, %v3830
        %v3863 = vpack.c.bf16 %v3833, %v3832
        %v3864 = vpack.c.bf16 %v3835, %v3834
        %v3865 = vpack.c.bf16 %v3837, %v3836
        %v3866 = vpack.c.bf16 %v3839, %v3838
        %v3867 = vpack.c.bf16 %v3841, %v3840
        %v3868 = vpack.c.bf16 %v3843, %v3842
        %v3869 = vpack.c.bf16 %v3845, %v3844
        %v3870 = vpack.c.bf16 %v3847, %v3846
        %v3871 = vpack.c.bf16 %v3849, %v3848
        %v3872 = vpack.c.bf16 %v3851, %v3850
        %v3873 = vpack.c.bf16 %v3853, %v3852
        %v3874 = vpack.c.bf16 %v3855, %v3854
        %v3875 = vpack.c.bf16 %v3857, %v3856
        %v3876 = vpack.c.bf16 %v3859, %v3858
        %v3877 = vpack.c.bf16 %v3861, %v3860
        %v3878 = vpack.c.bf16 %v3470, %v3469
        %v3879 = vpack.c.bf16 %v3472, %v3471
        %v3880 = vpack.c.bf16 %v3474, %v3473
        %v3881 = vpack.c.bf16 %v3476, %v3475
        %v3882 = vpack.c.bf16 %v3478, %v3477
        %v3883 = vpack.c.bf16 %v3480, %v3479
        %v3884 = vpack.c.bf16 %v3482, %v3481
        %v3885 = vpack.c.bf16 %v3484, %v3483
        %v3886 = vpack.c.bf16 %v3486, %v3485
        %v3887 = vpack.c.bf16 %v3488, %v3487
        %v3888 = vpack.c.bf16 %v3490, %v3489
        %v3889 = vpack.c.bf16 %v3492, %v3491
        %v3890 = vpack.c.bf16 %v3494, %v3493
        %v3891 = vpack.c.bf16 %v3496, %v3495
        %v3892 = vpack.c.bf16 %v3498, %v3497
        %v3893 = vpack.c.bf16 %v3500, %v3499
        %v3894 = vld [vmem:[%s3] sm:$0xf]
        %v3895 = vld [vmem:[%s3 + $0x4] sm:$0xf]
        %v3896 = vld [vmem:[%s3 + $0x8] sm:$0xf]
        %v3897 = vld [vmem:[%s3 + $0xc] sm:$0xf]
        %v3898 = vld [vmem:[%s3 + $0x10] sm:$0xf]
        %v3899 = vld [vmem:[%s3 + $0x14] sm:$0xf]
        %v3900 = vld [vmem:[%s3 + $0x18] sm:$0xf]
        %v3901 = vld [vmem:[%s3 + $0x1c] sm:$0xf]
        %v3902 = vld [vmem:[%s3 + $0x20] sm:$0xf]
        %v3903 = vld [vmem:[%s3 + $0x24] sm:$0xf]
        %v3904 = vld [vmem:[%s3 + $0x28] sm:$0xf]
        %v3905 = vld [vmem:[%s3 + $0x2c] sm:$0xf]
        %v3906 = vld [vmem:[%s3 + $0x30] sm:$0xf]
        %v3907 = vld [vmem:[%s3 + $0x34] sm:$0xf]
        %v3908 = vld [vmem:[%s3 + $0x38] sm:$0xf]
        %v3909 = vld [vmem:[%s3 + $0x3c] sm:$0xf]
        %v3926 = vunpack.c.l.b16 %v3894
        %v3927 = vunpack.c.l.b16 %v3895
        %v3928 = vunpack.c.l.b16 %v3896
        %v3929 = vunpack.c.l.b16 %v3897
        %v3930 = vunpack.c.l.b16 %v3898
        %v3931 = vunpack.c.l.b16 %v3899
        %v3932 = vunpack.c.l.b16 %v3900
        %v3933 = vunpack.c.l.b16 %v3901
        %v3934 = vunpack.c.l.b16 %v3902
        %v3935 = vunpack.c.l.b16 %v3903
        %v3936 = vunpack.c.l.b16 %v3904
        %v3937 = vunpack.c.l.b16 %v3905
        %v3938 = vunpack.c.l.b16 %v3906
        %v3939 = vunpack.c.l.b16 %v3907
        %v3940 = vunpack.c.l.b16 %v3908
        %v3941 = vunpack.c.l.b16 %v3909
        %v3942 = vpack.c.b16 %v3927, %v3926
        %v3943 = vpack.c.b16 %v3929, %v3928
        %v3944 = vpack.c.b16 %v3931, %v3930
        %v3945 = vpack.c.b16 %v3933, %v3932
        %v3946 = vpack.c.b16 %v3935, %v3934
        %v3947 = vpack.c.b16 %v3937, %v3936
        %v3948 = vpack.c.b16 %v3939, %v3938
        %v3949 = vpack.c.b16 %v3941, %v3940
        %3958 = vmatprep.subr.bf16.mxu0 0
        %3959 = vmatpush1.bf16.msra.mxu0 %v3942
        %3960 = vmatprep.subr.bf16.mxu0 0
        %3961 = vmatpush1.bf16.msra.mxu0 %v3943
        %3962 = vmatprep.subr.bf16.mxu0 0
        %3963 = vmatpush1.bf16.msra.mxu0 %v3944
        %3964 = vmatprep.subr.bf16.mxu0 0
        %3965 = vmatpush1.bf16.msra.mxu0 %v3945
        %3966 = vmatprep.subr.bf16.mxu0 0
        %3967 = vmatpush1.bf16.msra.mxu0 %v3946
        %3968 = vmatprep.subr.bf16.mxu0 0
        %3969 = vmatpush1.bf16.msra.mxu0 %v3947
        %3970 = vmatprep.subr.bf16.mxu0 0
        %3971 = vmatpush1.bf16.msra.mxu0 %v3948
        %3972 = vmatprep.subr.bf16.mxu0 0
        %3973 = vmatpush1.bf16.msra.mxu0 %v3949
        %3974 = vmatprep.subr.bf16.mxu0 0
        %3975 = vmatpush1.bf16.msra.mxu0 0
        %3976 = vmatprep.subr.bf16.mxu0 0
        %3977 = vmatpush1.bf16.msra.mxu0 0
        %3978 = vmatprep.subr.bf16.mxu0 0
        %3979 = vmatpush1.bf16.msra.mxu0 0
        %3980 = vmatprep.subr.bf16.mxu0 0
        %3981 = vmatpush1.bf16.msra.mxu0 0
        %3982 = vmatprep.subr.bf16.mxu0 0
        %3983 = vmatpush1.bf16.msra.mxu0 0
        %3984 = vmatprep.subr.bf16.mxu0 0
        %3985 = vmatpush1.bf16.msra.mxu0 0
        %3986 = vmatprep.subr.bf16.mxu0 0
        %3987 = vmatpush1.bf16.msra.mxu0 0
        %3988 = vmatprep.subr.bf16.mxu0 0
        %3989 = vmatpush1.bf16.msra.mxu0 0
        %3990 = vmatprep.mubr.bf16.mxu0 0
        %3991 = vmatmul.mubr.bf16.gmra.mrb[0].mxu0 %v3878
        %v3992 = vpop.f32.mrb[0].mxu0
        %v3993 = vadd.f32 %v3634, %v3992
        %v3994 = vpop.f32.mrb[0].mxu0
        %v3995 = vpop.f32.mrb[0].mxu0
        %v3996 = vadd.f32 %v3638, %v3995
        %v3997 = vpop.f32.mrb[0].mxu0
        %3998 = vmatprep.mubr.bf16.mxu0 0
        %3999 = vmatmul.mubr.bf16.gmra.mrb[0].mxu0 %v3879
        %v4000 = vpop.f32.mrb[0].mxu0
        %v4001 = vadd.f32 %v3644, %v4000
        %v4002 = vpop.f32.mrb[0].mxu0
        %v4003 = vpop.f32.mrb[0].mxu0
        %v4004 = vadd.f32 %v3648, %v4003
        %v4005 = vpop.f32.mrb[0].mxu0
        %4006 = vmatprep.mubr.bf16.mxu0 0
        %4007 = vmatmul.mubr.bf16.gmra.mrb[0].mxu0 %v3880
        %v4008 = vpop.f32.mrb[0].mxu0
        %v4009 = vadd.f32 %v3654, %v4008
        %v4010 = vpop.f32.mrb[0].mxu0
        %v4011 = vpop.f32.mrb[0].mxu0
        %v4012 = vadd.f32 %v3658, %v4011
        %v4013 = vpop.f32.mrb[0].mxu0
        %4014 = vmatprep.mubr.bf16.mxu0 0
        %4015 = vmatmul.mubr.bf16.gmra.mrb[0].mxu0 %v3881
        %v4016 = vpop.f32.mrb[0].mxu0
        %v4017 = vadd.f32 %v3664, %v4016
        %v4018 = vpop.f32.mrb[0].mxu0
        %v4019 = vpop.f32.mrb[0].mxu0
        %v4020 = vadd.f32 %v3668, %v4019
        %v4021 = vpop.f32.mrb[0].mxu0
        %4022 = vmatprep.mubr.bf16.mxu0 0
        %4023 = vmatmul.mubr.bf16.gmra.mrb[0].mxu0 %v3882
        %v4024 = vpop.f32.mrb[0].mxu0
        %v4025 = vadd.f32 %v3674, %v4024
        %v4026 = vpop.f32.mrb[0].mxu0
        %v4027 = vpop.f32.mrb[0].mxu0
        %v4028 = vadd.f32 %v3678, %v4027
        %v4029 = vpop.f32.mrb[0].mxu0
        %4030 = vmatprep.mubr.bf16.mxu0 0
        %4031 = vmatmul.mubr.bf16.gmra.mrb[0].mxu0 %v3883
        %v4032 = vpop.f32.mrb[0].mxu0
        %v4033 = vadd.f32 %v3684, %v4032
        %v4034 = vpop.f32.mrb[0].mxu0
        %v4035 = vpop.f32.mrb[0].mxu0
        %v4036 = vadd.f32 %v3688, %v4035
        %v4037 = vpop.f32.mrb[0].mxu0
        %4038 = vmatprep.mubr.bf16.mxu0 0
        %4039 = vmatmul.mubr.bf16.gmra.mrb[0].mxu0 %v3884
        %v4040 = vpop.f32.mrb[0].mxu0
        %v4041 = vadd.f32 %v3694, %v4040
        %v4042 = vpop.f32.mrb[0].mxu0
        %v4043 = vpop.f32.mrb[0].mxu0
        %v4044 = vadd.f32 %v3698, %v4043
        %v4045 = vpop.f32.mrb[0].mxu0
        %4046 = vmatprep.mubr.bf16.mxu0 0
        %4047 = vmatmul.mubr.bf16.gmra.mrb[0].mxu0 %v3885
        %v4048 = vpop.f32.mrb[0].mxu0
        %v4049 = vadd.f32 %v3704, %v4048
        %v4050 = vpop.f32.mrb[0].mxu0
        %v4051 = vpop.f32.mrb[0].mxu0
        %v4052 = vadd.f32 %v3708, %v4051
        %v4053 = vpop.f32.mrb[0].mxu0
        %4054 = vmatprep.mubr.bf16.mxu0 0
        %4055 = vmatmul.mubr.bf16.gmra.mrb[0].mxu0 %v3886
        %v4056 = vpop.f32.mrb[0].mxu0
        %v4057 = vadd.f32 %v3714, %v4056
        %v4058 = vpop.f32.mrb[0].mxu0
        %v4059 = vpop.f32.mrb[0].mxu0
        %v4060 = vadd.f32 %v3718, %v4059
        %v4061 = vpop.f32.mrb[0].mxu0
        %4062 = vmatprep.mubr.bf16.mxu0 0
        %4063 = vmatmul.mubr.bf16.gmra.mrb[0].mxu0 %v3887
        %v4064 = vpop.f32.mrb[0].mxu0
        %v4065 = vadd.f32 %v3724, %v4064
        %v4066 = vpop.f32.mrb[0].mxu0
        %v4067 = vpop.f32.mrb[0].mxu0
        %v4068 = vadd.f32 %v3728, %v4067
        %v4069 = vpop.f32.mrb[0].mxu0
        %4070 = vmatprep.mubr.bf16.mxu0 0
        %4071 = vmatmul.mubr.bf16.gmra.mrb[0].mxu0 %v3888
        %v4072 = vpop.f32.mrb[0].mxu0
        %v4073 = vadd.f32 %v3734, %v4072
        %v4074 = vpop.f32.mrb[0].mxu0
        %v4075 = vpop.f32.mrb[0].mxu0
        %v4076 = vadd.f32 %v3738, %v4075
        %v4077 = vpop.f32.mrb[0].mxu0
        %4078 = vmatprep.mubr.bf16.mxu0 0
        %4079 = vmatmul.mubr.bf16.gmra.mrb[0].mxu0 %v3889
        %v4080 = vpop.f32.mrb[0].mxu0
        %v4081 = vadd.f32 %v3744, %v4080
        %v4082 = vpop.f32.mrb[0].mxu0
        %v4083 = vpop.f32.mrb[0].mxu0
        %v4084 = vadd.f32 %v3748, %v4083
        %v4085 = vpop.f32.mrb[0].mxu0
        %4086 = vmatprep.mubr.bf16.mxu0 0
        %4087 = vmatmul.mubr.bf16.gmra.mrb[0].mxu0 %v3890
        %v4088 = vpop.f32.mrb[0].mxu0
        %v4089 = vadd.f32 %v3754, %v4088
        %v4090 = vpop.f32.mrb[0].mxu0
        %v4091 = vpop.f32.mrb[0].mxu0
        %v4092 = vadd.f32 %v3758, %v4091
        %v4093 = vpop.f32.mrb[0].mxu0
        %4094 = vmatprep.mubr.bf16.mxu0 0
        %4095 = vmatmul.mubr.bf16.gmra.mrb[0].mxu0 %v3891
        %v4096 = vpop.f32.mrb[0].mxu0
        %v4097 = vadd.f32 %v3764, %v4096
        %v4098 = vpop.f32.mrb[0].mxu0
        %v4099 = vpop.f32.mrb[0].mxu0
        %v4100 = vadd.f32 %v3768, %v4099
        %v4101 = vpop.f32.mrb[0].mxu0
        %4102 = vmatprep.mubr.bf16.mxu0 0
        %4103 = vmatmul.mubr.bf16.gmra.mrb[0].mxu0 %v3892
        %v4104 = vpop.f32.mrb[0].mxu0
        %v4105 = vadd.f32 %v3774, %v4104
        %v4106 = vpop.f32.mrb[0].mxu0
        %v4107 = vpop.f32.mrb[0].mxu0
        %v4108 = vadd.f32 %v3778, %v4107
        %v4109 = vpop.f32.mrb[0].mxu0
        %4110 = vmatprep.mubr.bf16.mxu0 0
        %4111 = vmatmul.mubr.bf16.gmra.mrb[0].mxu0 %v3893
        %v4112 = vpop.f32.mrb[0].mxu0
        %v4113 = vadd.f32 %v3784, %v4112
        %v4114 = vpop.f32.mrb[0].mxu0
        %v4115 = vpop.f32.mrb[0].mxu0
        %v4116 = vadd.f32 %v3788, %v4115
        %v4117 = vpop.f32.mrb[0].mxu0
        %4118 = vdwg.mxu0
        %v4119 = vlaneseq
        %v4120 = vshrl.u32 %v4119, 7
        %v4121 = vsub.s32 4, %v4120
        %v4122 = vrot.slane %v251, %v4121
        %v4123 = vmul.f32 %v3993, %v4122
        %v4124 = vmul.f32 %v3996, %v4122
        %v4125 = vmul.f32 %v4001, %v4122
        %v4126 = vmul.f32 %v4004, %v4122
        %v4127 = vmul.f32 %v4009, %v4122
        %v4128 = vmul.f32 %v4012, %v4122
        %v4129 = vmul.f32 %v4017, %v4122
        %v4130 = vmul.f32 %v4020, %v4122
        %v4131 = vmul.f32 %v4025, %v4122
        %v4132 = vmul.f32 %v4028, %v4122
        %v4133 = vmul.f32 %v4033, %v4122
        %v4134 = vmul.f32 %v4036, %v4122
        %v4135 = vmul.f32 %v4041, %v4122
        %v4136 = vmul.f32 %v4044, %v4122
        %v4137 = vmul.f32 %v4049, %v4122
        %v4138 = vmul.f32 %v4052, %v4122
        %v4139 = vmul.f32 %v4057, %v4122
        %v4140 = vmul.f32 %v4060, %v4122
        %v4141 = vmul.f32 %v4065, %v4122
        %v4142 = vmul.f32 %v4068, %v4122
        %v4143 = vmul.f32 %v4073, %v4122
        %v4144 = vmul.f32 %v4076, %v4122
        %v4145 = vmul.f32 %v4081, %v4122
        %v4146 = vmul.f32 %v4084, %v4122
        %v4147 = vmul.f32 %v4089, %v4122
        %v4148 = vmul.f32 %v4092, %v4122
        %v4149 = vmul.f32 %v4097, %v4122
        %v4150 = vmul.f32 %v4100, %v4122
        %v4151 = vmul.f32 %v4105, %v4122
        %v4152 = vmul.f32 %v4108, %v4122
        %v4153 = vmul.f32 %v4113, %v4122
        %v4154 = vmul.f32 %v4116, %v4122
        %v4155 = vlaneseq
        %v4156 = vshrl.u32 %v4155, 7
        %v4157 = vsub.s32 5, %v4156
        %v4158 = vrot.slane %v251, %v4157
        %v4159 = vadd.f32 %v4123, %v4158
        %v4160 = vadd.f32 %v4124, %v4158
        %v4161 = vadd.f32 %v4125, %v4158
        %v4162 = vadd.f32 %v4126, %v4158
        %v4163 = vadd.f32 %v4127, %v4158
        %v4164 = vadd.f32 %v4128, %v4158
        %v4165 = vadd.f32 %v4129, %v4158
        %v4166 = vadd.f32 %v4130, %v4158
        %v4167 = vadd.f32 %v4131, %v4158
        %v4168 = vadd.f32 %v4132, %v4158
        %v4169 = vadd.f32 %v4133, %v4158
        %v4170 = vadd.f32 %v4134, %v4158
        %v4171 = vadd.f32 %v4135, %v4158
        %v4172 = vadd.f32 %v4136, %v4158
        %v4173 = vadd.f32 %v4137, %v4158
        %v4174 = vadd.f32 %v4138, %v4158
        %v4175 = vadd.f32 %v4139, %v4158
        %v4176 = vadd.f32 %v4140, %v4158
        %v4177 = vadd.f32 %v4141, %v4158
        %v4178 = vadd.f32 %v4142, %v4158
        %v4179 = vadd.f32 %v4143, %v4158
        %v4180 = vadd.f32 %v4144, %v4158
        %v4181 = vadd.f32 %v4145, %v4158
        %v4182 = vadd.f32 %v4146, %v4158
        %v4183 = vadd.f32 %v4147, %v4158
        %v4184 = vadd.f32 %v4148, %v4158
        %v4185 = vadd.f32 %v4149, %v4158
        %v4186 = vadd.f32 %v4150, %v4158
        %v4187 = vadd.f32 %v4151, %v4158
        %v4188 = vadd.f32 %v4152, %v4158
        %v4189 = vadd.f32 %v4153, %v4158
        %v4190 = vadd.f32 %v4154, %v4158
        %v4191 = vmax.f32 %v4159, 0.0
        %v4192 = vmax.f32 %v4160, 0.0
        %v4193 = vmax.f32 %v4161, 0.0
        %v4194 = vmax.f32 %v4162, 0.0
        %v4195 = vmax.f32 %v4163, 0.0
        %v4196 = vmax.f32 %v4164, 0.0
        %v4197 = vmax.f32 %v4165, 0.0
        %v4198 = vmax.f32 %v4166, 0.0
        %v4199 = vmax.f32 %v4167, 0.0
        %v4200 = vmax.f32 %v4168, 0.0
        %v4201 = vmax.f32 %v4169, 0.0
        %v4202 = vmax.f32 %v4170, 0.0
        %v4203 = vmax.f32 %v4171, 0.0
        %v4204 = vmax.f32 %v4172, 0.0
        %v4205 = vmax.f32 %v4173, 0.0
        %v4206 = vmax.f32 %v4174, 0.0
        %v4207 = vmax.f32 %v4175, 0.0
        %v4208 = vmax.f32 %v4176, 0.0
        %v4209 = vmax.f32 %v4177, 0.0
        %v4210 = vmax.f32 %v4178, 0.0
        %v4211 = vmax.f32 %v4179, 0.0
        %v4212 = vmax.f32 %v4180, 0.0
        %v4213 = vmax.f32 %v4181, 0.0
        %v4214 = vmax.f32 %v4182, 0.0
        %v4215 = vmax.f32 %v4183, 0.0
        %v4216 = vmax.f32 %v4184, 0.0
        %v4217 = vmax.f32 %v4185, 0.0
        %v4218 = vmax.f32 %v4186, 0.0
        %v4219 = vmax.f32 %v4187, 0.0
        %v4220 = vmax.f32 %v4188, 0.0
        %v4221 = vmax.f32 %v4189, 0.0
        %v4222 = vmax.f32 %v4190, 0.0
        %v4223 = vpack.c.bf16 %v4192, %v4191
        %v4224 = vpack.c.bf16 %v4194, %v4193
        %v4225 = vpack.c.bf16 %v4196, %v4195
        %v4226 = vpack.c.bf16 %v4198, %v4197
        %v4227 = vpack.c.bf16 %v4200, %v4199
        %v4228 = vpack.c.bf16 %v4202, %v4201
        %v4229 = vpack.c.bf16 %v4204, %v4203
        %v4230 = vpack.c.bf16 %v4206, %v4205
        %v4231 = vpack.c.bf16 %v4208, %v4207
        %v4232 = vpack.c.bf16 %v4210, %v4209
        %v4233 = vpack.c.bf16 %v4212, %v4211
        %v4234 = vpack.c.bf16 %v4214, %v4213
        %v4235 = vpack.c.bf16 %v4216, %v4215
        %v4236 = vpack.c.bf16 %v4218, %v4217
        %v4237 = vpack.c.bf16 %v4220, %v4219
        %v4238 = vpack.c.bf16 %v4222, %v4221
        %v4239 = vld [vmem:[%s4] sm:$0xf]
        %v4240 = vld [vmem:[%s4 + $0x4] sm:$0xf]
        %v4241 = vld [vmem:[%s4 + $0x8] sm:$0xf]
        %v4242 = vld [vmem:[%s4 + $0xc] sm:$0xf]
        %v4243 = vld [vmem:[%s4 + $0x10] sm:$0xf]
        %v4244 = vld [vmem:[%s4 + $0x14] sm:$0xf]
        %v4245 = vld [vmem:[%s4 + $0x18] sm:$0xf]
        %v4246 = vld [vmem:[%s4 + $0x1c] sm:$0xf]
        %v4247 = vld [vmem:[%s4 + $0x20] sm:$0xf]
        %v4248 = vld [vmem:[%s4 + $0x24] sm:$0xf]
        %v4249 = vld [vmem:[%s4 + $0x28] sm:$0xf]
        %v4250 = vld [vmem:[%s4 + $0x2c] sm:$0xf]
        %v4251 = vld [vmem:[%s4 + $0x30] sm:$0xf]
        %v4252 = vld [vmem:[%s4 + $0x34] sm:$0xf]
        %v4253 = vld [vmem:[%s4 + $0x38] sm:$0xf]
        %v4254 = vld [vmem:[%s4 + $0x3c] sm:$0xf]
        %v4255 = vlaneseq
        %v4256 = vshrl.u32 %v4255, 7
        %v4257 = vsub.s32 6, %v4256
        %v4258 = vrot.slane %v251, %v4257
        %v4275 = vunpack.c.l.b16 %v4239
        %v4276 = vunpack.c.l.b16 %v4240
        %v4277 = vunpack.c.l.b16 %v4241
        %v4278 = vunpack.c.l.b16 %v4242
        %v4279 = vunpack.c.l.b16 %v4243
        %v4280 = vunpack.c.l.b16 %v4244
        %v4281 = vunpack.c.l.b16 %v4245
        %v4282 = vunpack.c.l.b16 %v4246
        %v4283 = vunpack.c.l.b16 %v4247
        %v4284 = vunpack.c.l.b16 %v4248
        %v4285 = vunpack.c.l.b16 %v4249
        %v4286 = vunpack.c.l.b16 %v4250
        %v4287 = vunpack.c.l.b16 %v4251
        %v4288 = vunpack.c.l.b16 %v4252
        %v4289 = vunpack.c.l.b16 %v4253
        %v4290 = vunpack.c.l.b16 %v4254
        %v4291 = vpack.c.b16 %v4276, %v4275
        %v4292 = vpack.c.b16 %v4278, %v4277
        %v4293 = vpack.c.b16 %v4280, %v4279
        %v4294 = vpack.c.b16 %v4282, %v4281
        %v4295 = vpack.c.b16 %v4284, %v4283
        %v4296 = vpack.c.b16 %v4286, %v4285
        %v4297 = vpack.c.b16 %v4288, %v4287
        %v4298 = vpack.c.b16 %v4290, %v4289
        %4307 = vmatprep.subr.bf16.mxu0 0
        %4308 = vmatpush1.bf16.msra.mxu0 %v4291
        %4309 = vmatprep.subr.bf16.mxu0 0
        %4310 = vmatpush1.bf16.msra.mxu0 %v4292
        %4311 = vmatprep.subr.bf16.mxu0 0
        %4312 = vmatpush1.bf16.msra.mxu0 %v4293
        %4313 = vmatprep.subr.bf16.mxu0 0
        %4314 = vmatpush1.bf16.msra.mxu0 %v4294
        %4315 = vmatprep.subr.bf16.mxu0 0
        %4316 = vmatpush1.bf16.msra.mxu0 %v4295
        %4317 = vmatprep.subr.bf16.mxu0 0
        %4318 = vmatpush1.bf16.msra.mxu0 %v4296
        %4319 = vmatprep.subr.bf16.mxu0 0
        %4320 = vmatpush1.bf16.msra.mxu0 %v4297
        %4321 = vmatprep.subr.bf16.mxu0 0
        %4322 = vmatpush1.bf16.msra.mxu0 %v4298
        %4323 = vmatprep.subr.bf16.mxu0 0
        %4324 = vmatpush1.bf16.msra.mxu0 0
        %4325 = vmatprep.subr.bf16.mxu0 0
        %4326 = vmatpush1.bf16.msra.mxu0 0
        %4327 = vmatprep.subr.bf16.mxu0 0
        %4328 = vmatpush1.bf16.msra.mxu0 0
        %4329 = vmatprep.subr.bf16.mxu0 0
        %4330 = vmatpush1.bf16.msra.mxu0 0
        %4331 = vmatprep.subr.bf16.mxu0 0
        %4332 = vmatpush1.bf16.msra.mxu0 0
        %4333 = vmatprep.subr.bf16.mxu0 0
        %4334 = vmatpush1.bf16.msra.mxu0 0
        %4335 = vmatprep.subr.bf16.mxu0 0
        %4336 = vmatpush1.bf16.msra.mxu0 0
        %4337 = vmatprep.subr.bf16.mxu0 0
        %4338 = vmatpush1.bf16.msra.mxu0 0
        %4339 = vmatprep.mubr.bf16.mxu0 0
        %4340 = vmatmul.mubr.bf16.gmra.mrb[0].mxu0 %v4223
        %v4341 = vpop.f32.mrb[0].mxu0
        %v4342 = vadd.f32 %v4258, %v4341
        %v4343 = vpop.f32.mrb[0].mxu0
        %v4344 = vpop.f32.mrb[0].mxu0
        %v4345 = vadd.f32 %v4258, %v4344
        %v4346 = vpop.f32.mrb[0].mxu0
        %4347 = vmatprep.mubr.bf16.mxu0 0
        %4348 = vmatmul.mubr.bf16.gmra.mrb[0].mxu0 %v4224
        %v4349 = vpop.f32.mrb[0].mxu0
        %v4350 = vadd.f32 %v4258, %v4349
        %v4351 = vpop.f32.mrb[0].mxu0
        %v4352 = vpop.f32.mrb[0].mxu0
        %v4353 = vadd.f32 %v4258, %v4352
        %v4354 = vpop.f32.mrb[0].mxu0
        %4355 = vmatprep.mubr.bf16.mxu0 0
        %4356 = vmatmul.mubr.bf16.gmra.mrb[0].mxu0 %v4225
        %v4357 = vpop.f32.mrb[0].mxu0
        %v4358 = vadd.f32 %v4258, %v4357
        %v4359 = vpop.f32.mrb[0].mxu0
        %v4360 = vpop.f32.mrb[0].mxu0
        %v4361 = vadd.f32 %v4258, %v4360
        %v4362 = vpop.f32.mrb[0].mxu0
        %4363 = vmatprep.mubr.bf16.mxu0 0
        %4364 = vmatmul.mubr.bf16.gmra.mrb[0].mxu0 %v4226
        %v4365 = vpop.f32.mrb[0].mxu0
        %v4366 = vadd.f32 %v4258, %v4365
        %v4367 = vpop.f32.mrb[0].mxu0
        %v4368 = vpop.f32.mrb[0].mxu0
        %v4369 = vadd.f32 %v4258, %v4368
        %v4370 = vpop.f32.mrb[0].mxu0
        %4371 = vmatprep.mubr.bf16.mxu0 0
        %4372 = vmatmul.mubr.bf16.gmra.mrb[0].mxu0 %v4227
        %v4373 = vpop.f32.mrb[0].mxu0
        %v4374 = vadd.f32 %v4258, %v4373
        %v4375 = vpop.f32.mrb[0].mxu0
        %v4376 = vpop.f32.mrb[0].mxu0
        %v4377 = vadd.f32 %v4258, %v4376
        %v4378 = vpop.f32.mrb[0].mxu0
        %4379 = vmatprep.mubr.bf16.mxu0 0
        %4380 = vmatmul.mubr.bf16.gmra.mrb[0].mxu0 %v4228
        %v4381 = vpop.f32.mrb[0].mxu0
        %v4382 = vadd.f32 %v4258, %v4381
        %v4383 = vpop.f32.mrb[0].mxu0
        %v4384 = vpop.f32.mrb[0].mxu0
        %v4385 = vadd.f32 %v4258, %v4384
        %v4386 = vpop.f32.mrb[0].mxu0
        %4387 = vmatprep.mubr.bf16.mxu0 0
        %4388 = vmatmul.mubr.bf16.gmra.mrb[0].mxu0 %v4229
        %v4389 = vpop.f32.mrb[0].mxu0
        %v4390 = vadd.f32 %v4258, %v4389
        %v4391 = vpop.f32.mrb[0].mxu0
        %v4392 = vpop.f32.mrb[0].mxu0
        %v4393 = vadd.f32 %v4258, %v4392
        %v4394 = vpop.f32.mrb[0].mxu0
        %4395 = vmatprep.mubr.bf16.mxu0 0
        %4396 = vmatmul.mubr.bf16.gmra.mrb[0].mxu0 %v4230
        %v4397 = vpop.f32.mrb[0].mxu0
        %v4398 = vadd.f32 %v4258, %v4397
        %v4399 = vpop.f32.mrb[0].mxu0
        %v4400 = vpop.f32.mrb[0].mxu0
        %v4401 = vadd.f32 %v4258, %v4400
        %v4402 = vpop.f32.mrb[0].mxu0
        %4403 = vmatprep.mubr.bf16.mxu0 0
        %4404 = vmatmul.mubr.bf16.gmra.mrb[0].mxu0 %v4231
        %v4405 = vpop.f32.mrb[0].mxu0
        %v4406 = vadd.f32 %v4258, %v4405
        %v4407 = vpop.f32.mrb[0].mxu0
        %v4408 = vpop.f32.mrb[0].mxu0
        %v4409 = vadd.f32 %v4258, %v4408
        %v4410 = vpop.f32.mrb[0].mxu0
        %4411 = vmatprep.mubr.bf16.mxu0 0
        %4412 = vmatmul.mubr.bf16.gmra.mrb[0].mxu0 %v4232
        %v4413 = vpop.f32.mrb[0].mxu0
        %v4414 = vadd.f32 %v4258, %v4413
        %v4415 = vpop.f32.mrb[0].mxu0
        %v4416 = vpop.f32.mrb[0].mxu0
        %v4417 = vadd.f32 %v4258, %v4416
        %v4418 = vpop.f32.mrb[0].mxu0
        %4419 = vmatprep.mubr.bf16.mxu0 0
        %4420 = vmatmul.mubr.bf16.gmra.mrb[0].mxu0 %v4233
        %v4421 = vpop.f32.mrb[0].mxu0
        %v4422 = vadd.f32 %v4258, %v4421
        %v4423 = vpop.f32.mrb[0].mxu0
        %v4424 = vpop.f32.mrb[0].mxu0
        %v4425 = vadd.f32 %v4258, %v4424
        %v4426 = vpop.f32.mrb[0].mxu0
        %4427 = vmatprep.mubr.bf16.mxu0 0
        %4428 = vmatmul.mubr.bf16.gmra.mrb[0].mxu0 %v4234
        %v4429 = vpop.f32.mrb[0].mxu0
        %v4430 = vadd.f32 %v4258, %v4429
        %v4431 = vpop.f32.mrb[0].mxu0
        %v4432 = vpop.f32.mrb[0].mxu0
        %v4433 = vadd.f32 %v4258, %v4432
        %v4434 = vpop.f32.mrb[0].mxu0
        %4435 = vmatprep.mubr.bf16.mxu0 0
        %4436 = vmatmul.mubr.bf16.gmra.mrb[0].mxu0 %v4235
        %v4437 = vpop.f32.mrb[0].mxu0
        %v4438 = vadd.f32 %v4258, %v4437
        %v4439 = vpop.f32.mrb[0].mxu0
        %v4440 = vpop.f32.mrb[0].mxu0
        %v4441 = vadd.f32 %v4258, %v4440
        %v4442 = vpop.f32.mrb[0].mxu0
        %4443 = vmatprep.mubr.bf16.mxu0 0
        %4444 = vmatmul.mubr.bf16.gmra.mrb[0].mxu0 %v4236
        %v4445 = vpop.f32.mrb[0].mxu0
        %v4446 = vadd.f32 %v4258, %v4445
        %v4447 = vpop.f32.mrb[0].mxu0
        %v4448 = vpop.f32.mrb[0].mxu0
        %v4449 = vadd.f32 %v4258, %v4448
        %v4450 = vpop.f32.mrb[0].mxu0
        %4451 = vmatprep.mubr.bf16.mxu0 0
        %4452 = vmatmul.mubr.bf16.gmra.mrb[0].mxu0 %v4237
        %v4453 = vpop.f32.mrb[0].mxu0
        %v4454 = vadd.f32 %v4258, %v4453
        %v4455 = vpop.f32.mrb[0].mxu0
        %v4456 = vpop.f32.mrb[0].mxu0
        %v4457 = vadd.f32 %v4258, %v4456
        %v4458 = vpop.f32.mrb[0].mxu0
        %4459 = vmatprep.mubr.bf16.mxu0 0
        %4460 = vmatmul.mubr.bf16.gmra.mrb[0].mxu0 %v4238
        %v4461 = vpop.f32.mrb[0].mxu0
        %v4462 = vadd.f32 %v4258, %v4461
        %v4463 = vpop.f32.mrb[0].mxu0
        %v4464 = vpop.f32.mrb[0].mxu0
        %v4465 = vadd.f32 %v4258, %v4464
        %v4466 = vpop.f32.mrb[0].mxu0
        %4467 = vdwg.mxu0
        %v4468 = vmax.f32 %v4342, %v4358
        %v4469 = vmax.f32 %v4345, %v4361
        %v4470 = vmax.f32 %v4350, %v4366
        %v4471 = vmax.f32 %v4353, %v4369
        %v4472 = vmax.f32 %v4468, %v4374
        %v4473 = vmax.f32 %v4469, %v4377
        %v4474 = vmax.f32 %v4470, %v4382
        %v4475 = vmax.f32 %v4471, %v4385
        %v4476 = vmax.f32 %v4472, %v4390
        %v4477 = vmax.f32 %v4473, %v4393
        %v4478 = vmax.f32 %v4474, %v4398
        %v4479 = vmax.f32 %v4475, %v4401
        %v4480 = vmax.f32 %v4476, %v4406
        %v4481 = vmax.f32 %v4477, %v4409
        %v4482 = vmax.f32 %v4478, %v4414
        %v4483 = vmax.f32 %v4479, %v4417
        %v4484 = vmax.f32 %v4480, %v4422
        %v4485 = vmax.f32 %v4481, %v4425
        %v4486 = vmax.f32 %v4482, %v4430
        %v4487 = vmax.f32 %v4483, %v4433
        %v4488 = vmax.f32 %v4484, %v4438
        %v4489 = vmax.f32 %v4485, %v4441
        %v4490 = vmax.f32 %v4486, %v4446
        %v4491 = vmax.f32 %v4487, %v4449
        %v4492 = vmax.f32 %v4488, %v4454
        %v4493 = vmax.f32 %v4489, %v4457
        %v4494 = vmax.f32 %v4490, %v4462
        %v4495 = vmax.f32 %v4491, %v4465
        %v4496 = vmax.f32 %v4492, %v4493
        %v4497 = vmax.f32 %v4494, %v4495
        %v4498 = vmax.f32 %v4496, %v4497
        %v4499 = vrot.slane %v4498, 4
        %v4500 = vmax.f32 %v4498, %v4499
        %v4501 = vrot.slane %v4500, 2
        %v4502 = vmax.f32 %v4500, %v4501
        %v4503 = vrot.slane %v4502, 1
        %v4504 = vmax.f32 %v4502, %v4503
        %v4505 = vsub.f32 %v4342, %v4504
        %v4506 = vsub.f32 %v4345, %v4504
        %v4507 = vsub.f32 %v4350, %v4504
        %v4508 = vsub.f32 %v4353, %v4504
        %v4509 = vsub.f32 %v4358, %v4504
        %v4510 = vsub.f32 %v4361, %v4504
        %v4511 = vsub.f32 %v4366, %v4504
        %v4512 = vsub.f32 %v4369, %v4504
        %v4513 = vsub.f32 %v4374, %v4504
        %v4514 = vsub.f32 %v4377, %v4504
        %v4515 = vsub.f32 %v4382, %v4504
        %v4516 = vsub.f32 %v4385, %v4504
        %v4517 = vsub.f32 %v4390, %v4504
        %v4518 = vsub.f32 %v4393, %v4504
        %v4519 = vsub.f32 %v4398, %v4504
        %v4520 = vsub.f32 %v4401, %v4504
        %v4521 = vsub.f32 %v4406, %v4504
        %v4522 = vsub.f32 %v4409, %v4504
        %v4523 = vsub.f32 %v4414, %v4504
        %v4524 = vsub.f32 %v4417, %v4504
        %v4525 = vsub.f32 %v4422, %v4504
        %v4526 = vsub.f32 %v4425, %v4504
        %v4527 = vsub.f32 %v4430, %v4504
        %v4528 = vsub.f32 %v4433, %v4504
        %v4529 = vsub.f32 %v4438, %v4504
        %v4530 = vsub.f32 %v4441, %v4504
        %v4531 = vsub.f32 %v4446, %v4504
        %v4532 = vsub.f32 %v4449, %v4504
        %v4533 = vsub.f32 %v4454, %v4504
        %v4534 = vsub.f32 %v4457, %v4504
        %v4535 = vsub.f32 %v4462, %v4504
        %v4536 = vsub.f32 %v4465, %v4504
        %v4537 = vmul.f32 %v4505, 1.442695
        %v4538 = vpow.pop %v4537
        %v4539 = vmul.f32 %v4506, 1.442695
        %v4540 = vpow.pop %v4539
        %v4541 = vmul.f32 %v4507, 1.442695
        %v4542 = vpow.pop %v4541
        %v4543 = vmul.f32 %v4508, 1.442695
        %v4544 = vpow.pop %v4543
        %v4545 = vmul.f32 %v4509, 1.442695
        %v4546 = vpow.pop %v4545
        %v4547 = vmul.f32 %v4510, 1.442695
        %v4548 = vpow.pop %v4547
        %v4549 = vmul.f32 %v4511, 1.442695
        %v4550 = vpow.pop %v4549
        %v4551 = vmul.f32 %v4512, 1.442695
        %v4552 = vpow.pop %v4551
        %v4553 = vmul.f32 %v4513, 1.442695
        %v4554 = vpow.pop %v4553
        %v4555 = vmul.f32 %v4514, 1.442695
        %v4556 = vpow.pop %v4555
        %v4557 = vmul.f32 %v4515, 1.442695
        %v4558 = vpow.pop %v4557
        %v4559 = vmul.f32 %v4516, 1.442695
        %v4560 = vpow.pop %v4559
        %v4561 = vmul.f32 %v4517, 1.442695
        %v4562 = vpow.pop %v4561
        %v4563 = vmul.f32 %v4518, 1.442695
        %v4564 = vpow.pop %v4563
        %v4565 = vmul.f32 %v4519, 1.442695
        %v4566 = vpow.pop %v4565
        %v4567 = vmul.f32 %v4520, 1.442695
        %v4568 = vpow.pop %v4567
        %v4569 = vmul.f32 %v4521, 1.442695
        %v4570 = vpow.pop %v4569
        %v4571 = vmul.f32 %v4522, 1.442695
        %v4572 = vpow.pop %v4571
        %v4573 = vmul.f32 %v4523, 1.442695
        %v4574 = vpow.pop %v4573
        %v4575 = vmul.f32 %v4524, 1.442695
        %v4576 = vpow.pop %v4575
        %v4577 = vmul.f32 %v4525, 1.442695
        %v4578 = vpow.pop %v4577
        %v4579 = vmul.f32 %v4526, 1.442695
        %v4580 = vpow.pop %v4579
        %v4581 = vmul.f32 %v4527, 1.442695
        %v4582 = vpow.pop %v4581
        %v4583 = vmul.f32 %v4528, 1.442695
        %v4584 = vpow.pop %v4583
        %v4585 = vmul.f32 %v4529, 1.442695
        %v4586 = vpow.pop %v4585
        %v4587 = vmul.f32 %v4530, 1.442695
        %v4588 = vpow.pop %v4587
        %v4589 = vmul.f32 %v4531, 1.442695
        %v4590 = vpow.pop %v4589
        %v4591 = vmul.f32 %v4532, 1.442695
        %v4592 = vpow.pop %v4591
        %v4593 = vmul.f32 %v4533, 1.442695
        %v4594 = vpow.pop %v4593
        %v4595 = vmul.f32 %v4534, 1.442695
        %v4596 = vpow.pop %v4595
        %v4597 = vmul.f32 %v4535, 1.442695
        %v4598 = vpow.pop %v4597
        %v4599 = vmul.f32 %v4536, 1.442695
        %v4600 = vpow.pop %v4599
        %v4601 = vadd.f32 %v4538, %v4540
        %v4602 = vadd.f32 %v4601, %v4542
        %v4603 = vadd.f32 %v4602, %v4544
        %v4604 = vadd.f32 %v4603, %v4546
        %v4605 = vadd.f32 %v4604, %v4548
        %v4606 = vadd.f32 %v4605, %v4550
        %v4607 = vadd.f32 %v4606, %v4552
        %v4608 = vadd.f32 %v4607, %v4554
        %v4609 = vadd.f32 %v4608, %v4556
        %v4610 = vadd.f32 %v4609, %v4558
        %v4611 = vadd.f32 %v4610, %v4560
        %v4612 = vadd.f32 %v4611, %v4562
        %v4613 = vadd.f32 %v4612, %v4564
        %v4614 = vadd.f32 %v4613, %v4566
        %v4615 = vadd.f32 %v4614, %v4568
        %v4616 = vadd.f32 %v4615, %v4570
        %v4617 = vadd.f32 %v4616, %v4572
        %v4618 = vadd.f32 %v4617, %v4574
        %v4619 = vadd.f32 %v4618, %v4576
        %v4620 = vadd.f32 %v4619, %v4578
        %v4621 = vadd.f32 %v4620, %v4580
        %v4622 = vadd.f32 %v4621, %v4582
        %v4623 = vadd.f32 %v4622, %v4584
        %v4624 = vadd.f32 %v4623, %v4586
        %v4625 = vadd.f32 %v4624, %v4588
        %v4626 = vadd.f32 %v4625, %v4590
        %v4627 = vadd.f32 %v4626, %v4592
        %v4628 = vadd.f32 %v4627, %v4594
        %v4629 = vadd.f32 %v4628, %v4596
        %v4630 = vadd.f32 %v4629, %v4598
        %v4631 = vadd.f32 %v4630, %v4600
        %v4632 = vrot.slane %v4631, 4
        %v4633 = vadd.f32 %v4631, %v4632
        %v4634 = vrot.slane %v4633, 2
        %v4635 = vadd.f32 %v4633, %v4634
        %v4636 = vrot.slane %v4635, 1
        %v4637 = vadd.f32 %v4635, %v4636
        %v4638 = vrcp.pop %v4637
        %v4639 = vmul.f32 %v4538, %v4638
        %v4640 = vmul.f32 %v4540, %v4638
        %v4641 = vmul.f32 %v4542, %v4638
        %v4642 = vmul.f32 %v4544, %v4638
        %v4643 = vmul.f32 %v4546, %v4638
        %v4644 = vmul.f32 %v4548, %v4638
        %v4645 = vmul.f32 %v4550, %v4638
        %v4646 = vmul.f32 %v4552, %v4638
        %v4647 = vmul.f32 %v4554, %v4638
        %v4648 = vmul.f32 %v4556, %v4638
        %v4649 = vmul.f32 %v4558, %v4638
        %v4650 = vmul.f32 %v4560, %v4638
        %v4651 = vmul.f32 %v4562, %v4638
        %v4652 = vmul.f32 %v4564, %v4638
        %v4653 = vmul.f32 %v4566, %v4638
        %v4654 = vmul.f32 %v4568, %v4638
        %v4655 = vmul.f32 %v4570, %v4638
        %v4656 = vmul.f32 %v4572, %v4638
        %v4657 = vmul.f32 %v4574, %v4638
        %v4658 = vmul.f32 %v4576, %v4638
        %v4659 = vmul.f32 %v4578, %v4638
        %v4660 = vmul.f32 %v4580, %v4638
        %v4661 = vmul.f32 %v4582, %v4638
        %v4662 = vmul.f32 %v4584, %v4638
        %v4663 = vmul.f32 %v4586, %v4638
        %v4664 = vmul.f32 %v4588, %v4638
        %v4665 = vmul.f32 %v4590, %v4638
        %v4666 = vmul.f32 %v4592, %v4638
        %v4667 = vmul.f32 %v4594, %v4638
        %v4668 = vmul.f32 %v4596, %v4638
        %v4669 = vmul.f32 %v4598, %v4638
        %v4670 = vmul.f32 %v4600, %v4638
        %v4671 = vunpack.c.l.bf16 %v3862
        %v4672 = vunpack.c.h.bf16 %v3862
        %v4673 = vunpack.c.l.bf16 %v3863
        %v4674 = vunpack.c.h.bf16 %v3863
        %v4675 = vunpack.c.l.bf16 %v3864
        %v4676 = vunpack.c.h.bf16 %v3864
        %v4677 = vunpack.c.l.bf16 %v3865
        %v4678 = vunpack.c.h.bf16 %v3865
        %v4679 = vunpack.c.l.bf16 %v3866
        %v4680 = vunpack.c.h.bf16 %v3866
        %v4681 = vunpack.c.l.bf16 %v3867
        %v4682 = vunpack.c.h.bf16 %v3867
        %v4683 = vunpack.c.l.bf16 %v3868
        %v4684 = vunpack.c.h.bf16 %v3868
        %v4685 = vunpack.c.l.bf16 %v3869
        %v4686 = vunpack.c.h.bf16 %v3869
        %v4687 = vunpack.c.l.bf16 %v3870
        %v4688 = vunpack.c.h.bf16 %v3870
        %v4689 = vunpack.c.l.bf16 %v3871
        %v4690 = vunpack.c.h.bf16 %v3871
        %v4691 = vunpack.c.l.bf16 %v3872
        %v4692 = vunpack.c.h.bf16 %v3872
        %v4693 = vunpack.c.l.bf16 %v3873
        %v4694 = vunpack.c.h.bf16 %v3873
        %v4695 = vunpack.c.l.bf16 %v3874
        %v4696 = vunpack.c.h.bf16 %v3874
        %v4697 = vunpack.c.l.bf16 %v3875
        %v4698 = vunpack.c.h.bf16 %v3875
        %v4699 = vunpack.c.l.bf16 %v3876
        %v4700 = vunpack.c.h.bf16 %v3876
        %v4701 = vunpack.c.l.bf16 %v3877
        %v4702 = vunpack.c.h.bf16 %v3877
        %v4703 = vmul.f32 %v4639, %v4671
        %v4704 = vmul.f32 %v4640, %v4672
        %v4705 = vmul.f32 %v4641, %v4673
        %v4706 = vmul.f32 %v4642, %v4674
        %v4707 = vmul.f32 %v4643, %v4675
        %v4708 = vmul.f32 %v4644, %v4676
        %v4709 = vmul.f32 %v4645, %v4677
        %v4710 = vmul.f32 %v4646, %v4678
        %v4711 = vmul.f32 %v4647, %v4679
        %v4712 = vmul.f32 %v4648, %v4680
        %v4713 = vmul.f32 %v4649, %v4681
        %v4714 = vmul.f32 %v4650, %v4682
        %v4715 = vmul.f32 %v4651, %v4683
        %v4716 = vmul.f32 %v4652, %v4684
        %v4717 = vmul.f32 %v4653, %v4685
        %v4718 = vmul.f32 %v4654, %v4686
        %v4719 = vmul.f32 %v4655, %v4687
        %v4720 = vmul.f32 %v4656, %v4688
        %v4721 = vmul.f32 %v4657, %v4689
        %v4722 = vmul.f32 %v4658, %v4690
        %v4723 = vmul.f32 %v4659, %v4691
        %v4724 = vmul.f32 %v4660, %v4692
        %v4725 = vmul.f32 %v4661, %v4693
        %v4726 = vmul.f32 %v4662, %v4694
        %v4727 = vmul.f32 %v4663, %v4695
        %v4728 = vmul.f32 %v4664, %v4696
        %v4729 = vmul.f32 %v4665, %v4697
        %v4730 = vmul.f32 %v4666, %v4698
        %v4731 = vmul.f32 %v4667, %v4699
        %v4732 = vmul.f32 %v4668, %v4700
        %v4733 = vmul.f32 %v4669, %v4701
        %v4734 = vmul.f32 %v4670, %v4702
        %v4735 = vadd.f32 %v3469, %v4703
        %v4736 = vadd.f32 %v3470, %v4704
        %v4737 = vadd.f32 %v3471, %v4705
        %v4738 = vadd.f32 %v3472, %v4706
        %v4739 = vadd.f32 %v3473, %v4707
        %v4740 = vadd.f32 %v3474, %v4708
        %v4741 = vadd.f32 %v3475, %v4709
        %v4742 = vadd.f32 %v3476, %v4710
        %v4743 = vadd.f32 %v3477, %v4711
        %v4744 = vadd.f32 %v3478, %v4712
        %v4745 = vadd.f32 %v3479, %v4713
        %v4746 = vadd.f32 %v3480, %v4714
        %v4747 = vadd.f32 %v3481, %v4715
        %v4748 = vadd.f32 %v3482, %v4716
        %v4749 = vadd.f32 %v3483, %v4717
        %v4750 = vadd.f32 %v3484, %v4718
        %v4751 = vadd.f32 %v3485, %v4719
        %v4752 = vadd.f32 %v3486, %v4720
        %v4753 = vadd.f32 %v3487, %v4721
        %v4754 = vadd.f32 %v3488, %v4722
        %v4755 = vadd.f32 %v3489, %v4723
        %v4756 = vadd.f32 %v3490, %v4724
        %v4757 = vadd.f32 %v3491, %v4725
        %v4758 = vadd.f32 %v3492, %v4726
        %v4759 = vadd.f32 %v3493, %v4727
        %v4760 = vadd.f32 %v3494, %v4728
        %v4761 = vadd.f32 %v3495, %v4729
        %v4762 = vadd.f32 %v3496, %v4730
        %v4763 = vadd.f32 %v3497, %v4731
        %v4764 = vadd.f32 %v3498, %v4732
        %v4765 = vadd.f32 %v3499, %v4733
        %v4766 = vadd.f32 %v3500, %v4734
        %4767 = vst [vmem:[%s244] sm:$0xff] %v4735
        %4768 = vst [vmem:[%s244 + $0x8] sm:$0xff] %v4736
        %4769 = vst [vmem:[%s244 + $0x10] sm:$0xff] %v4737
        %4770 = vst [vmem:[%s244 + $0x18] sm:$0xff] %v4738
        %4771 = vst [vmem:[%s244 + $0x20] sm:$0xff] %v4739
        %4772 = vst [vmem:[%s244 + $0x28] sm:$0xff] %v4740
        %4773 = vst [vmem:[%s244 + $0x30] sm:$0xff] %v4741
        %4774 = vst [vmem:[%s244 + $0x38] sm:$0xff] %v4742
        %4775 = vst [vmem:[%s244 + $0x40] sm:$0xff] %v4743
        %4776 = vst [vmem:[%s244 + $0x48] sm:$0xff] %v4744
        %4777 = vst [vmem:[%s244 + $0x50] sm:$0xff] %v4745
        %4778 = vst [vmem:[%s244 + $0x58] sm:$0xff] %v4746
        %4779 = vst [vmem:[%s244 + $0x60] sm:$0xff] %v4747
        %4780 = vst [vmem:[%s244 + $0x68] sm:$0xff] %v4748
        %4781 = vst [vmem:[%s244 + $0x70] sm:$0xff] %v4749
        %4782 = vst [vmem:[%s244 + $0x78] sm:$0xff] %v4750
        %4783 = vst [vmem:[%s244 + $0x80] sm:$0xff] %v4751
        %4784 = vst [vmem:[%s244 + $0x88] sm:$0xff] %v4752
        %4785 = vst [vmem:[%s244 + $0x90] sm:$0xff] %v4753
        %4786 = vst [vmem:[%s244 + $0x98] sm:$0xff] %v4754
        %4787 = vst [vmem:[%s244 + $0xa0] sm:$0xff] %v4755
        %4788 = vst [vmem:[%s244 + $0xa8] sm:$0xff] %v4756
        %4789 = vst [vmem:[%s244 + $0xb0] sm:$0xff] %v4757
        %4790 = vst [vmem:[%s244 + $0xb8] sm:$0xff] %v4758
        %4791 = vst [vmem:[%s244 + $0xc0] sm:$0xff] %v4759
        %4792 = vst [vmem:[%s244 + $0xc8] sm:$0xff] %v4760
        %4793 = vst [vmem:[%s244 + $0xd0] sm:$0xff] %v4761
        %4794 = vst [vmem:[%s244 + $0xd8] sm:$0xff] %v4762
        %4795 = vst [vmem:[%s244 + $0xe0] sm:$0xff] %v4763
        %4796 = vst [vmem:[%s244 + $0xe8] sm:$0xff] %v4764
        %4797 = vst [vmem:[%s244 + $0xf0] sm:$0xff] %v4765
        %4798 = vst [vmem:[%s244 + $0xf8] sm:$0xff] %v4766
        %s4799 = sand.u32 %s159, 1
        %s4800 = scalar_lea.sflag [#allocation3], %s4799
        %s4801 = sand.u32 %s159, 1
        %s4802 = smul.addr %s4801, 256
        %s4803 = scalar_lea.vmem [#allocation2], %s4802
        // Predicated region
        $region45: #{tpu_custom_call.1} parent=43 // pred_check
          %p4804 = pneg %p169
        $region46: #{tpu_custom_call.1} parent=43 // pred_check_branch
          %4806 = sbr.rel (%p4804) target = $region48
        $region47: #{tpu_custom_call.1} parent=43 // pred_region
          %s4808 = ssub.s32 4096, 4096
          %4809 = vsyncadd %s4800, %s4808
          %s4810 = smul.addr %s20, 32
          %s4811 = smul.addr %s4810, 128
          %s4812 = scalar_lea.hbm %s6, %s4811
          %s4813 = sshll.u32 %s4803, 4
          %s4814 = int_to_ptr.vmem [resolvable:$true] %s4813
          %4819 = dma.vmem_to_hbm [thread:$0]  %s4814, 4096, %s4812, %s4800, 128, 128, 8
        $region48: #{tpu_custom_call.1} parent=43 // pred_fallthru
          _
      $region44: #{tpu_custom_call.1} parent=5 // pred_fallthru
        _
      %p4820 = scmp.le.s32.totalorder 2, %s15
      // Predicated region
      $region49: #{tpu_custom_call.1} parent=5 // pred_check
        %p4821 = pneg %p4820
      $region50: #{tpu_custom_call.1} parent=5 // pred_check_branch
        %4823 = sbr.rel (%p4821) target = $region52
      $region51: #{tpu_custom_call.1} parent=5 // pred_region
        %s4824 = ssub.s32 %s15, 2
        // Predicated region
        $region53: #{tpu_custom_call.1} parent=51 // pred_check
          %p4825 = pneg %p175
        $region54: #{tpu_custom_call.1} parent=51 // pred_check_branch
          %4827 = sbr.rel (%p4825) target = $region56
        $region55: #{tpu_custom_call.1} parent=51 // pred_region
          %s4828 = sand.u32 %s160, 1
          %s4829 = scalar_lea.sflag [#allocation3], %s4828
          %s4830 = sand.u32 %s160, 1
          %s4831 = smul.addr %s4830, 256
          %s4832 = scalar_lea.vmem [#allocation2], %s4831
          %4833 = dma.done %s4829, 4096
        $region56: #{tpu_custom_call.1} parent=51 // pred_fallthru
          _
      $region52: #{tpu_custom_call.1} parent=5 // pred_fallthru
        _
    $region6: #{tpu_custom_call.1} parent=1 // loop_footer
      %s19 = sadd.s32 1, %s15
    $region7: #{tpu_custom_call.1} parent=1 // loop_footer_branch
      %14 = sbr.rel target = $region3
    $region8: #{tpu_custom_call.1} parent=1 // loop_exit
      _
    %4834 = vsyncpa [#allocation3], 1
    %s4835 = scalar_lea.sflag [#allocation3], 1
    %4836 = vsyncpa %s4835, 1

</llo_original>
